<compile_context>
chip_gen: v6e
topology: v6e:2x2x1
jax: 0.10.0
libtpu: 0.0.40
codegen_flags: <defaults>
</compile_context>

<pallas_src>
import functools

import jax
import jax.numpy as jnp
from jax.experimental import pallas as pl
from jax.experimental.pallas import tpu as pltpu

# ----------------------- small synthetic DINOv2 config -----------------------
FEAT_DIM = 32     # stands in for 384 of dinov2_vits14
PATCH = 4         # stands in for patch 14
N_HEADS = 2
HEAD_DIM = FEAT_DIM // N_HEADS
DEPTH = 2
MLP_HIDDEN = FEAT_DIM * 4
N_REG = 4         # DINOv2 register tokens
LN_EPS = 1e-6
LS_INIT = 0.1     # LayerScale gamma init (synthetic)


# ----------------------- exact-GELU capability probe -------------------------
def _probe_exact_gelu() -> bool:
    """Check whether erf-based (exact) GELU lowers inside a Pallas TPU kernel."""
    def k(x_ref, o_ref):
        o_ref[...] = jax.nn.gelu(x_ref[...], approximate=False)
    try:
        x = jnp.linspace(-3.0, 3.0, 8 * 128, dtype=jnp.float32).reshape(8, 128)
        y = pl.pallas_call(
            k, out_shape=jax.ShapeDtypeStruct((8, 128), jnp.float32))(x)
        jax.block_until_ready(y)
        return bool(jnp.all(jnp.isfinite(y)))
    except Exception:
        return False


_EXACT_GELU = _probe_exact_gelu()


def _gelu(x):
    if _EXACT_GELU:
        return jax.nn.gelu(x, approximate=False)   # exact erf GELU (nn.GELU default)
    # TODO(synk): Mosaic erf lowering unavailable on this jax build; tanh-approx GELU used.
    return jax.nn.gelu(x, approximate=True)


# --------------------------- fused ViT Pallas kernel --------------------------
def _vit_kernel(a_ref, pe_w_ref, xinit_ref,
                n1w_ref, n1b_ref, qkvw_ref, qkvb_ref, projw_ref, projb_ref,
                ls1_ref, n2w_ref, n2b_ref, fc1w_ref, fc1b_ref, fc2w_ref,
                fc2b_ref, ls2_ref, nfw_ref, nfb_ref, o_ref,
                *, seq_real, seq_pad):
    """Whole ViT body (patch-embed matmul .. final norm) on VMEM-resident data.

    a_ref     : (seq_pad, C*p*p)   im2col patches (zero rows for cls/reg/pad)
    pe_w_ref  : (C*p*p, D)         patch-embed weight
    xinit_ref : (seq_pad, D)       cls+pos0 / registers / pos+pe_bias / zero-pad
    stacked block params have leading dim DEPTH; LN/bias/LayerScale are (DEPTH,1,N).
    """

    def ln(v, w, b):
        mu = jnp.mean(v, axis=-1, keepdims=True)
        var = jnp.mean((v - mu) ** 2, axis=-1, keepdims=True)
        return (v - mu) * jax.lax.rsqrt(var + LN_EPS) * w + b

    # patch embed: bias + pos-embed are pre-folded into xinit, so a single MXU
    # matmul assembles the full (padded) token sequence.
    x = xinit_ref[...] + jnp.dot(a_ref[...], pe_w_ref[...],
                                 preferred_element_type=jnp.float32)

    # mask for padded key columns (padded query rows are sliced away outside).
    key_mask = jax.lax.broadcasted_iota(jnp.int32, (seq_pad, seq_pad), 1) < seq_real
    scale = HEAD_DIM ** -0.5

    for d in range(DEPTH):                      # static unroll, DEPTH=2
        # ---- attention branch ----
        h = ln(x, n1w_ref[d], n1b_ref[d])
        qkv = jnp.dot(h, qkvw_ref[d],
                      preferred_element_type=jnp.float32) + qkvb_ref[d]
        proj_w = projw_ref[d]                   # (D, D)
        attn = jnp.zeros((seq_pad, FEAT_DIM), jnp.float32)
        for hh in range(N_HEADS):               # static unroll, heads stay in VMEM
            lo = hh * HEAD_DIM
            q = qkv[:, lo:lo + HEAD_DIM]
            k = qkv[:, FEAT_DIM + lo:FEAT_DIM + lo + HEAD_DIM]
            v = qkv[:, 2 * FEAT_DIM + lo:2 * FEAT_DIM + lo + HEAD_DIM]
            s = jax.lax.dot_general(q, k, (((1,), (1,)), ((), ())),
                                    preferred_element_type=jnp.float32) * scale
            s = jnp.where(key_mask, s, -1e30)
            s = s - jnp.max(s, axis=-1, keepdims=True)
            p = jnp.exp(s)
            p = p / jnp.sum(p, axis=-1, keepdims=True)
            ctx = jnp.dot(p, v, preferred_element_type=jnp.float32)   # (Sp, Dh)
            # fold the head concat into the output projection: per-head partial matmul
            attn = attn + jnp.dot(ctx, proj_w[lo:lo + HEAD_DIM, :],
                                  preferred_element_type=jnp.float32)
        attn = attn + projb_ref[d]
        x = x + ls1_ref[d] * attn               # LayerScale + residual, in-kernel

        # ---- MLP branch ----
        h = ln(x, n2w_ref[d], n2b_ref[d])
        h = jnp.dot(h, fc1w_ref[d],
                    preferred_element_type=jnp.float32) + fc1b_ref[d]
        h = _gelu(h)                            # EUP work, free next to MXU
        h = jnp.dot(h, fc2w_ref[d],
                    preferred_element_type=jnp.float32) + fc2b_ref[d]
        x = x + ls2_ref[d] * h

    o_ref[...] = ln(x, nfw_ref[...], nfb_ref[...]).astype(o_ref.dtype)


# ------------------------------ parameter init -------------------------------
def init_params(key, n_patches):
    keys = iter(jax.random.split(key, 64))
    n01 = lambda shape: 0.02 * jax.random.normal(next(keys), shape, jnp.float32)
    params = {
        "pe_w": n01((FEAT_DIM, 3, PATCH, PATCH)),   # conv weight (D, C, p, p)
        "pe_b": jnp.zeros((FEAT_DIM,), jnp.float32),
        "cls": n01((1, FEAT_DIM)),
        "reg": n01((N_REG, FEAT_DIM)),
        # TODO(synk): real DINOv2 bicubic-interpolates a fixed-grid pos-embed to the
        # strided patch grid; the synthetic model initialises it at target resolution.
        "pos": n01((1 + n_patches, FEAT_DIM)),
        "norm_w": jnp.ones((FEAT_DIM,), jnp.float32),
        "norm_b": jnp.zeros((FEAT_DIM,), jnp.float32),
        "blocks": [],
    }
    for _ in range(DEPTH):
        params["blocks"].append({
            "norm1_w": jnp.ones((FEAT_DIM,), jnp.float32),
            "norm1_b": jnp.zeros((FEAT_DIM,), jnp.float32),
            "qkv_w": n01((FEAT_DIM, 3 * FEAT_DIM)),
            "qkv_b": jnp.zeros((3 * FEAT_DIM,), jnp.float32),
            "proj_w": n01((FEAT_DIM, FEAT_DIM)),
            "proj_b": jnp.zeros((FEAT_DIM,), jnp.float32),
            "ls1": LS_INIT * jnp.ones((FEAT_DIM,), jnp.float32),
            "norm2_w": jnp.ones((FEAT_DIM,), jnp.float32),
            "norm2_b": jnp.zeros((FEAT_DIM,), jnp.float32),
            "fc1_w": n01((FEAT_DIM, MLP_HIDDEN)),
            "fc1_b": jnp.zeros((MLP_HIDDEN,), jnp.float32),
            "fc2_w": n01((MLP_HIDDEN, FEAT_DIM)),
            "fc2_b": jnp.zeros((FEAT_DIM,), jnp.float32),
            "ls2": LS_INIT * jnp.ones((FEAT_DIM,), jnp.float32),
        })
    return params


def pack_params(params, n_patches, seq_pad):
    """Stack per-block params along DEPTH and pre-fold token-assembly constants."""
    D = FEAT_DIM
    S = 1 + N_REG + n_patches
    blocks = params["blocks"]
    stk = lambda name: jnp.stack([b[name] for b in blocks])                    # (DEPTH,K,N)
    stk_row = lambda name: jnp.stack([b[name].reshape(1, -1) for b in blocks])  # (DEPTH,1,N)

    # x_init rows: [cls+pos0 ; registers ; pos_patch + pe_bias ; zero pad]
    prefix = jnp.concatenate([params["cls"] + params["pos"][:1], params["reg"]], axis=0)
    patch_init = params["pos"][1:1 + n_patches] + params["pe_b"][None, :]
    x_init = jnp.concatenate(
        [prefix, patch_init, jnp.zeros((seq_pad - S, D), jnp.float32)], axis=0)

    return {
        "x_init": x_init,
        "pe_w": params["pe_w"].reshape(FEAT_DIM, -1).T,        # (C*p*p, D)
        "n1w": stk_row("norm1_w"), "n1b": stk_row("norm1_b"),
        "qkv_w": stk("qkv_w"), "qkv_b": stk_row("qkv_b"),
        "proj_w": stk("proj_w"), "proj_b": stk_row("proj_b"),
        "ls1": stk_row("ls1"),
        "n2w": stk_row("norm2_w"), "n2b": stk_row("norm2_b"),
        "fc1_w": stk("fc1_w"), "fc1_b": stk_row("fc1_b"),
        "fc2_w": stk("fc2_w"), "fc2_b": stk_row("fc2_b"),
        "ls2": stk_row("ls2"),
        "norm_w": params["norm_w"].reshape(1, -1),
        "norm_b": params["norm_b"].reshape(1, -1),
    }


# ------------------------------- glue helpers ---------------------------------
def im2col(img, Ph, Pw, stride):
    """img (C,H,W) -> (Ph*Pw, C*p*p), row ph*Pw+pw = flattened patch (c-major, i, j)."""
    C = img.shape[0]
    p, s = PATCH, stride
    patches = jnp.stack(
        [img[:, i:i + (Ph - 1) * s + 1:s, j:j + (Pw - 1) * s + 1:s]
         for i in range(p) for j in range(p)],
        axis=1)                                        # (C, p*p, Ph, Pw)
    return patches.reshape(C * p * p, Ph * Pw).T       # (Ph*Pw, C*p*p)


def upsample_nearest_exact(feat_hw, H, W):
    """feat_hw (Ph,Pw,C) -> (C,H,W); zero-FLOP gather == F.interpolate('nearest-exact')."""
    Ph, Pw, _ = feat_hw.shape
    idx_h = jnp.minimum(
        jnp.floor((jnp.arange(H) + 0.5) * (Ph / H)).astype(jnp.int32), Ph - 1)
    idx_w = jnp.minimum(
        jnp.floor((jnp.arange(W) + 0.5) * (Pw / W)).astype(jnp.int32), Pw - 1)
    up = jnp.take(jnp.take(feat_hw, idx_h, axis=0), idx_w, axis=1)   # (H, W, C)
    return up.transpose(2, 0, 1)


# ------------------------------ fused forward ---------------------------------
def _forward_impl(packed, x, *, stride, seq_pad):
    """x: (C, H, W) -> (1, FEAT_DIM, H, W). One pallas_call for the whole ViT."""
    C, H, W = x.shape
    Ph = 1 + (H - PATCH) // stride
    Pw = 1 + (W - PATCH) // stride
    n_patches = Ph * Pw
    S = 1 + N_REG + n_patches

    # im2col glue; patch rows land at the same offset as the patch tokens so the
    # kernel assembles the whole padded sequence with one aligned matmul + add.
    A = im2col(x, Ph, Pw, stride)                                  # (Np, C*p*p)
    A_pad = jnp.zeros((seq_pad, A.shape[1]), jnp.float32)
    A_pad = A_pad.at[1 + N_REG:1 + N_REG + n_patches].set(A)

    kernel = functools.partial(_vit_kernel, seq_real=S, seq_pad=seq_pad)
    xn = pl.pallas_call(
        kernel,
        out_shape=jax.ShapeDtypeStruct((seq_pad, FEAT_DIM), jnp.float32),
        compiler_params=pltpu.CompilerParams(vmem_limit_bytes=32 * 1024 * 1024),
    )(A_pad, packed["pe_w"], packed["x_init"],
      packed["n1w"], packed["n1b"], packed["qkv_w"], packed["qkv_b"],
      packed["proj_w"], packed["proj_b"], packed["ls1"],
      packed["n2w"], packed["n2b"], packed["fc1_w"], packed["fc1_b"],
      packed["fc2_w"], packed["fc2_b"], packed["ls2"],
      packed["norm_w"], packed["norm_b"])

    feats = xn[1 + N_REG:1 + N_REG + n_patches]                    # x_norm_patchtokens
    up = upsample_nearest_exact(feats.reshape(Ph, Pw, FEAT_DIM), H, W)
    n_imgs = 1                                                     # single identity transform
    return up[None] / n_imgs


# ------------------------------ HighResDV2 port -------------------------------
class HighResDV2Pallas:
    """JAX/Pallas port of HighResDV2 forward (attn_choice='none', identity transform)."""

    def __init__(self, stride, img_hw, key):
        self.original_patch_size = PATCH
        self.stride = (stride, stride)
        self.feat_dim = FEAT_DIM
        self.n_register_tokens = N_REG
        H, W = img_hw
        self.Ph, self.Pw = self.get_n_patches(H, W)
        n_patches = self.Ph * self.Pw
        self.seq_len = 1 + N_REG + n_patches
        self.seq_pad = ((self.seq_len + 7) // 8) * 8        # sublane-aligned sequence
        self.params = init_params(key, n_patches)
        self.packed = pack_params(self.params, n_patches, self.seq_pad)
        self._fwd = jax.jit(functools.partial(
            _forward_impl, stride=stride, seq_pad=self.seq_pad))

    def get_n_patches(self, img_h, img_w):
        s = self.stride[0]
        return (1 + (img_h - self.original_patch_size) // s,
                1 + (img_w - self.original_patch_size) // s)

    def forward(self, x, attn_choice="none"):
        # TODO(synk): attn_choice != 'none' (concatenating per-head cls attention maps)
        # is not modelled by the synthetic backbone.
        return self._fwd(self.packed, x)


# --------------------------- pure-JAX reference path --------------------------
def _reference_forward(params, x, stride):
    """Unfused, unpadded reference (XLA only) for numerical validation."""
    P = jax.lax.Precision.HIGHEST
    C, H, W = x.shape
    Ph = 1 + (H - PATCH) // stride
    Pw = 1 + (W - PATCH) // stride
    Np = Ph * Pw

    A = im2col(x, Ph, Pw, stride)
    Wpe = params["pe_w"].reshape(FEAT_DIM, -1).T
    tok = jnp.dot(A, Wpe, precision=P) + params["pe_b"]
    cls = params["cls"] + params["pos"][:1]
    tok = tok + params["pos"][1:1 + Np]
    xs = jnp.concatenate([cls, params["reg"], tok], axis=0)
    S = xs.shape[0]

    def ln(v, w, b):
        mu = jnp.mean(v, -1, keepdims=True)
        var = jnp.mean((v - mu) ** 2, -1, keepdims=True)
        return (v - mu) * jax.lax.rsqrt(var + LN_EPS) * w + b

    for blk in params["blocks"]:
        h = ln(xs, blk["norm1_w"], blk["norm1_b"])
        qkv = jnp.dot(h, blk["qkv_w"], precision=P) + blk["qkv_b"]
        qkv = qkv.reshape(S, 3, N_HEADS, HEAD_DIM).transpose(1, 2, 0, 3)
        q, k, v = qkv[0], qkv[1], qkv[2]
        s = jnp.einsum("hqd,hkd->hqk", q, k, precision=P) * (HEAD_DIM ** -0.5)
        p = jax.nn.softmax(s, axis=-1)
        ctx = jnp.einsum("hqk,hkd->hqd", p, v, precision=P)
        ctx = ctx.transpose(1, 0, 2).reshape(S, FEAT_DIM)
        a = jnp.dot(ctx, blk["proj_w"], precision=P) + blk["proj_b"]
        xs = xs + blk["ls1"] * a
        h = ln(xs, blk["norm2_w"], blk["norm2_b"])
        h = jnp.dot(h, blk["fc1_w"], precision=P) + blk["fc1_b"]
        h = _gelu(h)
        h = jnp.dot(h, blk["fc2_w"], precision=P) + blk["fc2_b"]
        xs = xs + blk["ls2"] * h

    xn = ln(xs, params["norm_w"], params["norm_b"])
    feats = xn[1 + N_REG:]
    up = upsample_nearest_exact(feats.reshape(Ph, Pw, FEAT_DIM), H, W)
    return up[None]


# ----------------------------------- main -------------------------------------
if __name__ == "__main__":
    key = jax.random.PRNGKey(0)
    k_img, k_par = jax.random.split(key)

    H = W = 16
    x = jax.random.normal(k_img, (3, H, W), jnp.float32)   # unbatched CHW image

    model = HighResDV2Pallas(stride=2, img_hw=(H, W), key=k_par)
    out = jax.block_until_ready(model.forward(x))

    assert out.shape == (1, FEAT_DIM, H, W), out.shape
    assert bool(jnp.all(jnp.isfinite(out)))

    ref = _reference_forward(model.params, x, stride=2)
    err = float(jnp.max(jnp.abs(out - ref)))
    assert jnp.allclose(out, ref, rtol=1e-2, atol=1e-2), f"max abs err {err}"

    print("KERNEL_OK")
</pallas_src>

<mosaic_0001>
module attributes {stable_mosaic.version = 11 : i64} {
  func.func @_vit_kernel(%arg0: memref<56x48xf32, #tpu.memory_space<vmem>>, %arg1: memref<48x32xf32, #tpu.memory_space<vmem>>, %arg2: memref<56x32xf32, #tpu.memory_space<vmem>>, %arg3: memref<2x1x32xf32, #tpu.memory_space<vmem>>, %arg4: memref<2x1x32xf32, #tpu.memory_space<vmem>>, %arg5: memref<2x32x96xf32, #tpu.memory_space<vmem>>, %arg6: memref<2x1x96xf32, #tpu.memory_space<vmem>>, %arg7: memref<2x32x32xf32, #tpu.memory_space<vmem>>, %arg8: memref<2x1x32xf32, #tpu.memory_space<vmem>>, %arg9: memref<2x1x32xf32, #tpu.memory_space<vmem>>, %arg10: memref<2x1x32xf32, #tpu.memory_space<vmem>>, %arg11: memref<2x1x32xf32, #tpu.memory_space<vmem>>, %arg12: memref<2x32x128xf32, #tpu.memory_space<vmem>>, %arg13: memref<2x1x128xf32, #tpu.memory_space<vmem>>, %arg14: memref<2x128x32xf32, #tpu.memory_space<vmem>>, %arg15: memref<2x1x32xf32, #tpu.memory_space<vmem>>, %arg16: memref<2x1x32xf32, #tpu.memory_space<vmem>>, %arg17: memref<1x32xf32, #tpu.memory_space<vmem>>, %arg18: memref<1x32xf32, #tpu.memory_space<vmem>>, %arg19: memref<56x32xf32, #tpu.memory_space<vmem>>) attributes {dimension_semantics = [], scalar_prefetch = 0 : i64, scratch_operands = 0 : i64, tpu.core_type = #tpu.core_type<tc>} {
    %c0 = arith.constant 0 : index
    %c0_0 = arith.constant 0 : index
    %0 = vector.load %arg2[%c0, %c0_0] : memref<56x32xf32, #tpu.memory_space<vmem>>, vector<56x32xf32>
    %c0_1 = arith.constant 0 : index
    %c0_2 = arith.constant 0 : index
    %1 = vector.load %arg0[%c0_1, %c0_2] : memref<56x48xf32, #tpu.memory_space<vmem>>, vector<56x48xf32>
    %c0_3 = arith.constant 0 : index
    %c0_4 = arith.constant 0 : index
    %2 = vector.load %arg1[%c0_3, %c0_4] : memref<48x32xf32, #tpu.memory_space<vmem>>, vector<48x32xf32>
    %cst = arith.constant dense<0.000000e+00> : vector<56x32xf32>
    %3 = tpu.matmul %1, %2, %cst {dimension_numbers = #tpu.dot_dimension_numbers<[1], [0], [0], [1], [0, 0, 1, 1], [], []>} : vector<56x48xf32>, vector<48x32xf32>, vector<56x32xf32> -> vector<56x32xf32>
    %4 = arith.addf %0, %3 : vector<56x32xf32>
    %5 = tpu.iota {dimensions = array<i32: 1>} : vector<56x56xi32>
    %c54_i32 = arith.constant 54 : i32
    %6 = vector.broadcast %c54_i32 : i32 to vector<56x56xi32>
    %7 = arith.cmpi slt, %5, %6 : vector<56x56xi32>
    %c0_5 = arith.constant 0 : index
    %c0_6 = arith.constant 0 : index
    %c0_7 = arith.constant 0 : index
    %8 = vector.load %arg3[%c0_5, %c0_6, %c0_7] : memref<2x1x32xf32, #tpu.memory_space<vmem>>, vector<1x1x32xf32>
    %9 = vector.shape_cast %8 : vector<1x1x32xf32> to vector<1x32xf32>
    %c0_8 = arith.constant 0 : index
    %c0_9 = arith.constant 0 : index
    %c0_10 = arith.constant 0 : index
    %10 = vector.load %arg4[%c0_8, %c0_9, %c0_10] : memref<2x1x32xf32, #tpu.memory_space<vmem>>, vector<1x1x32xf32>
    %11 = vector.shape_cast %10 : vector<1x1x32xf32> to vector<1x32xf32>
    %cst_11 = arith.constant dense<0.000000e+00> : vector<56xf32>
    %12 = vector.multi_reduction <add>, %4, %cst_11 [1] : vector<56x32xf32> to vector<56xf32>
    %13 = vector.shape_cast %12 : vector<56xf32> to vector<56x1xf32>
    %cst_12 = arith.constant 3.200000e+01 : f32
    %14 = vector.broadcast %cst_12 : f32 to vector<56x1xf32>
    %15 = arith.divf %13, %14 : vector<56x1xf32>
    %16 = vector.broadcast %15 : vector<56x1xf32> to vector<56x32xf32>
    %17 = arith.subf %4, %16 : vector<56x32xf32>
    %18 = arith.mulf %17, %17 : vector<56x32xf32>
    %cst_13 = arith.constant dense<0.000000e+00> : vector<56xf32>
    %19 = vector.multi_reduction <add>, %18, %cst_13 [1] : vector<56x32xf32> to vector<56xf32>
    %20 = vector.shape_cast %19 : vector<56xf32> to vector<56x1xf32>
    %cst_14 = arith.constant 3.200000e+01 : f32
    %21 = vector.broadcast %cst_14 : f32 to vector<56x1xf32>
    %22 = arith.divf %20, %21 : vector<56x1xf32>
    %23 = vector.broadcast %15 : vector<56x1xf32> to vector<56x32xf32>
    %24 = arith.subf %4, %23 : vector<56x32xf32>
    %cst_15 = arith.constant 9.99999997E-7 : f32
    %25 = vector.broadcast %cst_15 : f32 to vector<56x1xf32>
    %26 = arith.addf %22, %25 : vector<56x1xf32>
    %27 = math.rsqrt %26 : vector<56x1xf32>
    %28 = vector.broadcast %27 : vector<56x1xf32> to vector<56x32xf32>
    %29 = arith.mulf %24, %28 : vector<56x32xf32>
    %30 = vector.broadcast %9 : vector<1x32xf32> to vector<56x32xf32>
    %31 = arith.mulf %29, %30 : vector<56x32xf32>
    %32 = vector.broadcast %11 : vector<1x32xf32> to vector<56x32xf32>
    %33 = arith.addf %31, %32 : vector<56x32xf32>
    %c0_16 = arith.constant 0 : index
    %c0_17 = arith.constant 0 : index
    %c0_18 = arith.constant 0 : index
    %34 = vector.load %arg5[%c0_16, %c0_17, %c0_18] : memref<2x32x96xf32, #tpu.memory_space<vmem>>, vector<1x32x96xf32>
    %35 = vector.shape_cast %34 : vector<1x32x96xf32> to vector<32x96xf32>
    %cst_19 = arith.constant dense<0.000000e+00> : vector<56x96xf32>
    %36 = tpu.matmul %33, %35, %cst_19 {dimension_numbers = #tpu.dot_dimension_numbers<[1], [0], [0], [1], [0, 0, 1, 1], [], []>} : vector<56x32xf32>, vector<32x96xf32>, vector<56x96xf32> -> vector<56x96xf32>
    %c0_20 = arith.constant 0 : index
    %c0_21 = arith.constant 0 : index
    %c0_22 = arith.constant 0 : index
    %37 = vector.load %arg6[%c0_20, %c0_21, %c0_22] : memref<2x1x96xf32, #tpu.memory_space<vmem>>, vector<1x1x96xf32>
    %38 = vector.shape_cast %37 : vector<1x1x96xf32> to vector<1x96xf32>
    %39 = vector.broadcast %38 : vector<1x96xf32> to vector<56x96xf32>
    %40 = arith.addf %36, %39 : vector<56x96xf32>
    %c0_23 = arith.constant 0 : index
    %c0_24 = arith.constant 0 : index
    %c0_25 = arith.constant 0 : index
    %41 = vector.load %arg7[%c0_23, %c0_24, %c0_25] : memref<2x32x32xf32, #tpu.memory_space<vmem>>, vector<1x32x32xf32>
    %42 = vector.shape_cast %41 : vector<1x32x32xf32> to vector<32x32xf32>
    %cst_26 = arith.constant 0.000000e+00 : f32
    %43 = vector.broadcast %cst_26 : f32 to vector<56x32xf32>
    %44 = vector.extract_strided_slice %40 {offsets = [0, 0], sizes = [56, 16], strides = [1, 1]} : vector<56x96xf32> to vector<56x16xf32>
    %45 = vector.extract_strided_slice %40 {offsets = [0, 32], sizes = [56, 16], strides = [1, 1]} : vector<56x96xf32> to vector<56x16xf32>
    %46 = vector.extract_strided_slice %40 {offsets = [0, 64], sizes = [56, 16], strides = [1, 1]} : vector<56x96xf32> to vector<56x16xf32>
    %cst_27 = arith.constant dense<0.000000e+00> : vector<56x56xf32>
    %47 = tpu.matmul %44, %45, %cst_27 {dimension_numbers = #tpu.dot_dimension_numbers<[1], [1], [0], [0], [0, 0, 1, 0], [], []>} : vector<56x16xf32>, vector<56x16xf32>, vector<56x56xf32> -> vector<56x56xf32>
    %cst_28 = arith.constant 2.500000e-01 : f32
    %48 = vector.broadcast %cst_28 : f32 to vector<56x56xf32>
    %49 = arith.mulf %47, %48 : vector<56x56xf32>
    %cst_29 = arith.constant -1.000000e+30 : f32
    %50 = vector.broadcast %cst_29 : f32 to vector<56x56xf32>
    %51 = arith.select %7, %49, %50 : vector<56x56xi1>, vector<56x56xf32>
    %cst_30 = arith.constant dense<0xFF800000> : vector<56xf32>
    %52 = vector.multi_reduction <maximumf>, %51, %cst_30 [1] : vector<56x56xf32> to vector<56xf32>
    %53 = vector.shape_cast %52 : vector<56xf32> to vector<56x1xf32>
    %54 = vector.broadcast %53 : vector<56x1xf32> to vector<56x56xf32>
    %55 = arith.subf %51, %54 : vector<56x56xf32>
    %56 = math.exp %55 : vector<56x56xf32>
    %cst_31 = arith.constant dense<0.000000e+00> : vector<56xf32>
    %57 = vector.multi_reduction <add>, %56, %cst_31 [1] : vector<56x56xf32> to vector<56xf32>
    %58 = vector.shape_cast %57 : vector<56xf32> to vector<56x1xf32>
    %59 = vector.broadcast %58 : vector<56x1xf32> to vector<56x56xf32>
    %60 = arith.divf %56, %59 : vector<56x56xf32>
    %cst_32 = arith.constant dense<0.000000e+00> : vector<56x16xf32>
    %61 = tpu.matmul %60, %46, %cst_32 {dimension_numbers = #tpu.dot_dimension_numbers<[1], [0], [0], [1], [0, 0, 1, 1], [], []>} : vector<56x56xf32>, vector<56x16xf32>, vector<56x16xf32> -> vector<56x16xf32>
    %62 = vector.extract_strided_slice %42 {offsets = [0, 0], sizes = [16, 32], strides = [1, 1]} : vector<32x32xf32> to vector<16x32xf32>
    %cst_33 = arith.constant dense<0.000000e+00> : vector<56x32xf32>
    %63 = tpu.matmul %61, %62, %cst_33 {dimension_numbers = #tpu.dot_dimension_numbers<[1], [0], [0], [1], [0, 0, 1, 1], [], []>} : vector<56x16xf32>, vector<16x32xf32>, vector<56x32xf32> -> vector<56x32xf32>
    %64 = arith.addf %43, %63 : vector<56x32xf32>
    %65 = vector.extract_strided_slice %40 {offsets = [0, 16], sizes = [56, 16], strides = [1, 1]} : vector<56x96xf32> to vector<56x16xf32>
    %66 = vector.extract_strided_slice %40 {offsets = [0, 48], sizes = [56, 16], strides = [1, 1]} : vector<56x96xf32> to vector<56x16xf32>
    %67 = vector.extract_strided_slice %40 {offsets = [0, 80], sizes = [56, 16], strides = [1, 1]} : vector<56x96xf32> to vector<56x16xf32>
    %cst_34 = arith.constant dense<0.000000e+00> : vector<56x56xf32>
    %68 = tpu.matmul %65, %66, %cst_34 {dimension_numbers = #tpu.dot_dimension_numbers<[1], [1], [0], [0], [0, 0, 1, 0], [], []>} : vector<56x16xf32>, vector<56x16xf32>, vector<56x56xf32> -> vector<56x56xf32>
    %cst_35 = arith.constant 2.500000e-01 : f32
    %69 = vector.broadcast %cst_35 : f32 to vector<56x56xf32>
    %70 = arith.mulf %68, %69 : vector<56x56xf32>
    %cst_36 = arith.constant -1.000000e+30 : f32
    %71 = vector.broadcast %cst_36 : f32 to vector<56x56xf32>
    %72 = arith.select %7, %70, %71 : vector<56x56xi1>, vector<56x56xf32>
    %cst_37 = arith.constant dense<0xFF800000> : vector<56xf32>
    %73 = vector.multi_reduction <maximumf>, %72, %cst_37 [1] : vector<56x56xf32> to vector<56xf32>
    %74 = vector.shape_cast %73 : vector<56xf32> to vector<56x1xf32>
    %75 = vector.broadcast %74 : vector<56x1xf32> to vector<56x56xf32>
    %76 = arith.subf %72, %75 : vector<56x56xf32>
    %77 = math.exp %76 : vector<56x56xf32>
    %cst_38 = arith.constant dense<0.000000e+00> : vector<56xf32>
    %78 = vector.multi_reduction <add>, %77, %cst_38 [1] : vector<56x56xf32> to vector<56xf32>
    %79 = vector.shape_cast %78 : vector<56xf32> to vector<56x1xf32>
    %80 = vector.broadcast %79 : vector<56x1xf32> to vector<56x56xf32>
    %81 = arith.divf %77, %80 : vector<56x56xf32>
    %cst_39 = arith.constant dense<0.000000e+00> : vector<56x16xf32>
    %82 = tpu.matmul %81, %67, %cst_39 {dimension_numbers = #tpu.dot_dimension_numbers<[1], [0], [0], [1], [0, 0, 1, 1], [], []>} : vector<56x56xf32>, vector<56x16xf32>, vector<56x16xf32> -> vector<56x16xf32>
    %83 = vector.extract_strided_slice %42 {offsets = [16, 0], sizes = [16, 32], strides = [1, 1]} : vector<32x32xf32> to vector<16x32xf32>
    %cst_40 = arith.constant dense<0.000000e+00> : vector<56x32xf32>
    %84 = tpu.matmul %82, %83, %cst_40 {dimension_numbers = #tpu.dot_dimension_numbers<[1], [0], [0], [1], [0, 0, 1, 1], [], []>} : vector<56x16xf32>, vector<16x32xf32>, vector<56x32xf32> -> vector<56x32xf32>
    %85 = arith.addf %64, %84 : vector<56x32xf32>
    %c0_41 = arith.constant 0 : index
    %c0_42 = arith.constant 0 : index
    %c0_43 = arith.constant 0 : index
    %86 = vector.load %arg8[%c0_41, %c0_42, %c0_43] : memref<2x1x32xf32, #tpu.memory_space<vmem>>, vector<1x1x32xf32>
    %87 = vector.shape_cast %86 : vector<1x1x32xf32> to vector<1x32xf32>
    %88 = vector.broadcast %87 : vector<1x32xf32> to vector<56x32xf32>
    %89 = arith.addf %85, %88 : vector<56x32xf32>
    %c0_44 = arith.constant 0 : index
    %c0_45 = arith.constant 0 : index
    %c0_46 = arith.constant 0 : index
    %90 = vector.load %arg9[%c0_44, %c0_45, %c0_46] : memref<2x1x32xf32, #tpu.memory_space<vmem>>, vector<1x1x32xf32>
    %91 = vector.shape_cast %90 : vector<1x1x32xf32> to vector<1x32xf32>
    %92 = vector.broadcast %91 : vector<1x32xf32> to vector<56x32xf32>
    %93 = arith.mulf %92, %89 : vector<56x32xf32>
    %94 = arith.addf %4, %93 : vector<56x32xf32>
    %c0_47 = arith.constant 0 : index
    %c0_48 = arith.constant 0 : index
    %c0_49 = arith.constant 0 : index
    %95 = vector.load %arg10[%c0_47, %c0_48, %c0_49] : memref<2x1x32xf32, #tpu.memory_space<vmem>>, vector<1x1x32xf32>
    %96 = vector.shape_cast %95 : vector<1x1x32xf32> to vector<1x32xf32>
    %c0_50 = arith.constant 0 : index
    %c0_51 = arith.constant 0 : index
    %c0_52 = arith.constant 0 : index
    %97 = vector.load %arg11[%c0_50, %c0_51, %c0_52] : memref<2x1x32xf32, #tpu.memory_space<vmem>>, vector<1x1x32xf32>
    %98 = vector.shape_cast %97 : vector<1x1x32xf32> to vector<1x32xf32>
    %cst_53 = arith.constant dense<0.000000e+00> : vector<56xf32>
    %99 = vector.multi_reduction <add>, %94, %cst_53 [1] : vector<56x32xf32> to vector<56xf32>
    %100 = vector.shape_cast %99 : vector<56xf32> to vector<56x1xf32>
    %cst_54 = arith.constant 3.200000e+01 : f32
    %101 = vector.broadcast %cst_54 : f32 to vector<56x1xf32>
    %102 = arith.divf %100, %101 : vector<56x1xf32>
    %103 = vector.broadcast %102 : vector<56x1xf32> to vector<56x32xf32>
    %104 = arith.subf %94, %103 : vector<56x32xf32>
    %105 = arith.mulf %104, %104 : vector<56x32xf32>
    %cst_55 = arith.constant dense<0.000000e+00> : vector<56xf32>
    %106 = vector.multi_reduction <add>, %105, %cst_55 [1] : vector<56x32xf32> to vector<56xf32>
    %107 = vector.shape_cast %106 : vector<56xf32> to vector<56x1xf32>
    %cst_56 = arith.constant 3.200000e+01 : f32
    %108 = vector.broadcast %cst_56 : f32 to vector<56x1xf32>
    %109 = arith.divf %107, %108 : vector<56x1xf32>
    %110 = vector.broadcast %102 : vector<56x1xf32> to vector<56x32xf32>
    %111 = arith.subf %94, %110 : vector<56x32xf32>
    %cst_57 = arith.constant 9.99999997E-7 : f32
    %112 = vector.broadcast %cst_57 : f32 to vector<56x1xf32>
    %113 = arith.addf %109, %112 : vector<56x1xf32>
    %114 = math.rsqrt %113 : vector<56x1xf32>
    %115 = vector.broadcast %114 : vector<56x1xf32> to vector<56x32xf32>
    %116 = arith.mulf %111, %115 : vector<56x32xf32>
    %117 = vector.broadcast %96 : vector<1x32xf32> to vector<56x32xf32>
    %118 = arith.mulf %116, %117 : vector<56x32xf32>
    %119 = vector.broadcast %98 : vector<1x32xf32> to vector<56x32xf32>
    %120 = arith.addf %118, %119 : vector<56x32xf32>
    %c0_58 = arith.constant 0 : index
    %c0_59 = arith.constant 0 : index
    %c0_60 = arith.constant 0 : index
    %121 = vector.load %arg12[%c0_58, %c0_59, %c0_60] : memref<2x32x128xf32, #tpu.memory_space<vmem>>, vector<1x32x128xf32>
    %122 = vector.shape_cast %121 : vector<1x32x128xf32> to vector<32x128xf32>
    %cst_61 = arith.constant dense<0.000000e+00> : vector<56x128xf32>
    %123 = tpu.matmul %120, %122, %cst_61 {dimension_numbers = #tpu.dot_dimension_numbers<[1], [0], [0], [1], [0, 0, 1, 1], [], []>} : vector<56x32xf32>, vector<32x128xf32>, vector<56x128xf32> -> vector<56x128xf32>
    %c0_62 = arith.constant 0 : index
    %c0_63 = arith.constant 0 : index
    %c0_64 = arith.constant 0 : index
    %124 = vector.load %arg13[%c0_62, %c0_63, %c0_64] : memref<2x1x128xf32, #tpu.memory_space<vmem>>, vector<1x1x128xf32>
    %125 = vector.shape_cast %124 : vector<1x1x128xf32> to vector<1x128xf32>
    %126 = vector.broadcast %125 : vector<1x128xf32> to vector<56x128xf32>
    %127 = arith.addf %123, %126 : vector<56x128xf32>
    %128 = arith.mulf %127, %127 : vector<56x128xf32>
    %129 = arith.mulf %127, %128 : vector<56x128xf32>
    %cst_65 = arith.constant 4.471500e-02 : f32
    %130 = vector.broadcast %cst_65 : f32 to vector<56x128xf32>
    %131 = arith.mulf %130, %129 : vector<56x128xf32>
    %132 = arith.addf %127, %131 : vector<56x128xf32>
    %cst_66 = arith.constant 0.797884583 : f32
    %133 = vector.broadcast %cst_66 : f32 to vector<56x128xf32>
    %134 = arith.mulf %133, %132 : vector<56x128xf32>
    %135 = math.tanh %134 : vector<56x128xf32>
    %cst_67 = arith.constant 1.000000e+00 : f32
    %136 = vector.broadcast %cst_67 : f32 to vector<56x128xf32>
    %137 = arith.addf %136, %135 : vector<56x128xf32>
    %cst_68 = arith.constant 5.000000e-01 : f32
    %138 = vector.broadcast %cst_68 : f32 to vector<56x128xf32>
    %139 = arith.mulf %138, %137 : vector<56x128xf32>
    %140 = arith.mulf %127, %139 : vector<56x128xf32>
    %c0_69 = arith.constant 0 : index
    %c0_70 = arith.constant 0 : index
    %c0_71 = arith.constant 0 : index
    %141 = vector.load %arg14[%c0_69, %c0_70, %c0_71] : memref<2x128x32xf32, #tpu.memory_space<vmem>>, vector<1x128x32xf32>
    %142 = vector.shape_cast %141 : vector<1x128x32xf32> to vector<128x32xf32>
    %cst_72 = arith.constant dense<0.000000e+00> : vector<56x32xf32>
    %143 = tpu.matmul %140, %142, %cst_72 {dimension_numbers = #tpu.dot_dimension_numbers<[1], [0], [0], [1], [0, 0, 1, 1], [], []>} : vector<56x128xf32>, vector<128x32xf32>, vector<56x32xf32> -> vector<56x32xf32>
    %c0_73 = arith.constant 0 : index
    %c0_74 = arith.constant 0 : index
    %c0_75 = arith.constant 0 : index
    %144 = vector.load %arg15[%c0_73, %c0_74, %c0_75] : memref<2x1x32xf32, #tpu.memory_space<vmem>>, vector<1x1x32xf32>
    %145 = vector.shape_cast %144 : vector<1x1x32xf32> to vector<1x32xf32>
    %146 = vector.broadcast %145 : vector<1x32xf32> to vector<56x32xf32>
    %147 = arith.addf %143, %146 : vector<56x32xf32>
    %c0_76 = arith.constant 0 : index
    %c0_77 = arith.constant 0 : index
    %c0_78 = arith.constant 0 : index
    %148 = vector.load %arg16[%c0_76, %c0_77, %c0_78] : memref<2x1x32xf32, #tpu.memory_space<vmem>>, vector<1x1x32xf32>
    %149 = vector.shape_cast %148 : vector<1x1x32xf32> to vector<1x32xf32>
    %150 = vector.broadcast %149 : vector<1x32xf32> to vector<56x32xf32>
    %151 = arith.mulf %150, %147 : vector<56x32xf32>
    %152 = arith.addf %94, %151 : vector<56x32xf32>
    %c1 = arith.constant 1 : index
    %c0_79 = arith.constant 0 : index
    %c0_80 = arith.constant 0 : index
    %153 = vector.load %arg3[%c1, %c0_79, %c0_80] : memref<2x1x32xf32, #tpu.memory_space<vmem>>, vector<1x1x32xf32>
    %154 = vector.shape_cast %153 : vector<1x1x32xf32> to vector<1x32xf32>
    %c1_81 = arith.constant 1 : index
    %c0_82 = arith.constant 0 : index
    %c0_83 = arith.constant 0 : index
    %155 = vector.load %arg4[%c1_81, %c0_82, %c0_83] : memref<2x1x32xf32, #tpu.memory_space<vmem>>, vector<1x1x32xf32>
    %156 = vector.shape_cast %155 : vector<1x1x32xf32> to vector<1x32xf32>
    %cst_84 = arith.constant dense<0.000000e+00> : vector<56xf32>
    %157 = vector.multi_reduction <add>, %152, %cst_84 [1] : vector<56x32xf32> to vector<56xf32>
    %158 = vector.shape_cast %157 : vector<56xf32> to vector<56x1xf32>
    %cst_85 = arith.constant 3.200000e+01 : f32
    %159 = vector.broadcast %cst_85 : f32 to vector<56x1xf32>
    %160 = arith.divf %158, %159 : vector<56x1xf32>
    %161 = vector.broadcast %160 : vector<56x1xf32> to vector<56x32xf32>
    %162 = arith.subf %152, %161 : vector<56x32xf32>
    %163 = arith.mulf %162, %162 : vector<56x32xf32>
    %cst_86 = arith.constant dense<0.000000e+00> : vector<56xf32>
    %164 = vector.multi_reduction <add>, %163, %cst_86 [1] : vector<56x32xf32> to vector<56xf32>
    %165 = vector.shape_cast %164 : vector<56xf32> to vector<56x1xf32>
    %cst_87 = arith.constant 3.200000e+01 : f32
    %166 = vector.broadcast %cst_87 : f32 to vector<56x1xf32>
    %167 = arith.divf %165, %166 : vector<56x1xf32>
    %168 = vector.broadcast %160 : vector<56x1xf32> to vector<56x32xf32>
    %169 = arith.subf %152, %168 : vector<56x32xf32>
    %cst_88 = arith.constant 9.99999997E-7 : f32
    %170 = vector.broadcast %cst_88 : f32 to vector<56x1xf32>
    %171 = arith.addf %167, %170 : vector<56x1xf32>
    %172 = math.rsqrt %171 : vector<56x1xf32>
    %173 = vector.broadcast %172 : vector<56x1xf32> to vector<56x32xf32>
    %174 = arith.mulf %169, %173 : vector<56x32xf32>
    %175 = vector.broadcast %154 : vector<1x32xf32> to vector<56x32xf32>
    %176 = arith.mulf %174, %175 : vector<56x32xf32>
    %177 = vector.broadcast %156 : vector<1x32xf32> to vector<56x32xf32>
    %178 = arith.addf %176, %177 : vector<56x32xf32>
    %c1_89 = arith.constant 1 : index
    %c0_90 = arith.constant 0 : index
    %c0_91 = arith.constant 0 : index
    %179 = vector.load %arg5[%c1_89, %c0_90, %c0_91] : memref<2x32x96xf32, #tpu.memory_space<vmem>>, vector<1x32x96xf32>
    %180 = vector.shape_cast %179 : vector<1x32x96xf32> to vector<32x96xf32>
    %cst_92 = arith.constant dense<0.000000e+00> : vector<56x96xf32>
    %181 = tpu.matmul %178, %180, %cst_92 {dimension_numbers = #tpu.dot_dimension_numbers<[1], [0], [0], [1], [0, 0, 1, 1], [], []>} : vector<56x32xf32>, vector<32x96xf32>, vector<56x96xf32> -> vector<56x96xf32>
    %c1_93 = arith.constant 1 : index
    %c0_94 = arith.constant 0 : index
    %c0_95 = arith.constant 0 : index
    %182 = vector.load %arg6[%c1_93, %c0_94, %c0_95] : memref<2x1x96xf32, #tpu.memory_space<vmem>>, vector<1x1x96xf32>
    %183 = vector.shape_cast %182 : vector<1x1x96xf32> to vector<1x96xf32>
    %184 = vector.broadcast %183 : vector<1x96xf32> to vector<56x96xf32>
    %185 = arith.addf %181, %184 : vector<56x96xf32>
    %c1_96 = arith.constant 1 : index
    %c0_97 = arith.constant 0 : index
    %c0_98 = arith.constant 0 : index
    %186 = vector.load %arg7[%c1_96, %c0_97, %c0_98] : memref<2x32x32xf32, #tpu.memory_space<vmem>>, vector<1x32x32xf32>
    %187 = vector.shape_cast %186 : vector<1x32x32xf32> to vector<32x32xf32>
    %cst_99 = arith.constant 0.000000e+00 : f32
    %188 = vector.broadcast %cst_99 : f32 to vector<56x32xf32>
    %189 = vector.extract_strided_slice %185 {offsets = [0, 0], sizes = [56, 16], strides = [1, 1]} : vector<56x96xf32> to vector<56x16xf32>
    %190 = vector.extract_strided_slice %185 {offsets = [0, 32], sizes = [56, 16], strides = [1, 1]} : vector<56x96xf32> to vector<56x16xf32>
    %191 = vector.extract_strided_slice %185 {offsets = [0, 64], sizes = [56, 16], strides = [1, 1]} : vector<56x96xf32> to vector<56x16xf32>
    %cst_100 = arith.constant dense<0.000000e+00> : vector<56x56xf32>
    %192 = tpu.matmul %189, %190, %cst_100 {dimension_numbers = #tpu.dot_dimension_numbers<[1], [1], [0], [0], [0, 0, 1, 0], [], []>} : vector<56x16xf32>, vector<56x16xf32>, vector<56x56xf32> -> vector<56x56xf32>
    %cst_101 = arith.constant 2.500000e-01 : f32
    %193 = vector.broadcast %cst_101 : f32 to vector<56x56xf32>
    %194 = arith.mulf %192, %193 : vector<56x56xf32>
    %cst_102 = arith.constant -1.000000e+30 : f32
    %195 = vector.broadcast %cst_102 : f32 to vector<56x56xf32>
    %196 = arith.select %7, %194, %195 : vector<56x56xi1>, vector<56x56xf32>
    %cst_103 = arith.constant dense<0xFF800000> : vector<56xf32>
    %197 = vector.multi_reduction <maximumf>, %196, %cst_103 [1] : vector<56x56xf32> to vector<56xf32>
    %198 = vector.shape_cast %197 : vector<56xf32> to vector<56x1xf32>
    %199 = vector.broadcast %198 : vector<56x1xf32> to vector<56x56xf32>
    %200 = arith.subf %196, %199 : vector<56x56xf32>
    %201 = math.exp %200 : vector<56x56xf32>
    %cst_104 = arith.constant dense<0.000000e+00> : vector<56xf32>
    %202 = vector.multi_reduction <add>, %201, %cst_104 [1] : vector<56x56xf32> to vector<56xf32>
    %203 = vector.shape_cast %202 : vector<56xf32> to vector<56x1xf32>
    %204 = vector.broadcast %203 : vector<56x1xf32> to vector<56x56xf32>
    %205 = arith.divf %201, %204 : vector<56x56xf32>
    %cst_105 = arith.constant dense<0.000000e+00> : vector<56x16xf32>
    %206 = tpu.matmul %205, %191, %cst_105 {dimension_numbers = #tpu.dot_dimension_numbers<[1], [0], [0], [1], [0, 0, 1, 1], [], []>} : vector<56x56xf32>, vector<56x16xf32>, vector<56x16xf32> -> vector<56x16xf32>
    %207 = vector.extract_strided_slice %187 {offsets = [0, 0], sizes = [16, 32], strides = [1, 1]} : vector<32x32xf32> to vector<16x32xf32>
    %cst_106 = arith.constant dense<0.000000e+00> : vector<56x32xf32>
    %208 = tpu.matmul %206, %207, %cst_106 {dimension_numbers = #tpu.dot_dimension_numbers<[1], [0], [0], [1], [0, 0, 1, 1], [], []>} : vector<56x16xf32>, vector<16x32xf32>, vector<56x32xf32> -> vector<56x32xf32>
    %209 = arith.addf %188, %208 : vector<56x32xf32>
    %210 = vector.extract_strided_slice %185 {offsets = [0, 16], sizes = [56, 16], strides = [1, 1]} : vector<56x96xf32> to vector<56x16xf32>
    %211 = vector.extract_strided_slice %185 {offsets = [0, 48], sizes = [56, 16], strides = [1, 1]} : vector<56x96xf32> to vector<56x16xf32>
    %212 = vector.extract_strided_slice %185 {offsets = [0, 80], sizes = [56, 16], strides = [1, 1]} : vector<56x96xf32> to vector<56x16xf32>
    %cst_107 = arith.constant dense<0.000000e+00> : vector<56x56xf32>
    %213 = tpu.matmul %210, %211, %cst_107 {dimension_numbers = #tpu.dot_dimension_numbers<[1], [1], [0], [0], [0, 0, 1, 0], [], []>} : vector<56x16xf32>, vector<56x16xf32>, vector<56x56xf32> -> vector<56x56xf32>
    %cst_108 = arith.constant 2.500000e-01 : f32
    %214 = vector.broadcast %cst_108 : f32 to vector<56x56xf32>
    %215 = arith.mulf %213, %214 : vector<56x56xf32>
    %cst_109 = arith.constant -1.000000e+30 : f32
    %216 = vector.broadcast %cst_109 : f32 to vector<56x56xf32>
    %217 = arith.select %7, %215, %216 : vector<56x56xi1>, vector<56x56xf32>
    %cst_110 = arith.constant dense<0xFF800000> : vector<56xf32>
    %218 = vector.multi_reduction <maximumf>, %217, %cst_110 [1] : vector<56x56xf32> to vector<56xf32>
    %219 = vector.shape_cast %218 : vector<56xf32> to vector<56x1xf32>
    %220 = vector.broadcast %219 : vector<56x1xf32> to vector<56x56xf32>
    %221 = arith.subf %217, %220 : vector<56x56xf32>
    %222 = math.exp %221 : vector<56x56xf32>
    %cst_111 = arith.constant dense<0.000000e+00> : vector<56xf32>
    %223 = vector.multi_reduction <add>, %222, %cst_111 [1] : vector<56x56xf32> to vector<56xf32>
    %224 = vector.shape_cast %223 : vector<56xf32> to vector<56x1xf32>
    %225 = vector.broadcast %224 : vector<56x1xf32> to vector<56x56xf32>
    %226 = arith.divf %222, %225 : vector<56x56xf32>
    %cst_112 = arith.constant dense<0.000000e+00> : vector<56x16xf32>
    %227 = tpu.matmul %226, %212, %cst_112 {dimension_numbers = #tpu.dot_dimension_numbers<[1], [0], [0], [1], [0, 0, 1, 1], [], []>} : vector<56x56xf32>, vector<56x16xf32>, vector<56x16xf32> -> vector<56x16xf32>
    %228 = vector.extract_strided_slice %187 {offsets = [16, 0], sizes = [16, 32], strides = [1, 1]} : vector<32x32xf32> to vector<16x32xf32>
    %cst_113 = arith.constant dense<0.000000e+00> : vector<56x32xf32>
    %229 = tpu.matmul %227, %228, %cst_113 {dimension_numbers = #tpu.dot_dimension_numbers<[1], [0], [0], [1], [0, 0, 1, 1], [], []>} : vector<56x16xf32>, vector<16x32xf32>, vector<56x32xf32> -> vector<56x32xf32>
    %230 = arith.addf %209, %229 : vector<56x32xf32>
    %c1_114 = arith.constant 1 : index
    %c0_115 = arith.constant 0 : index
    %c0_116 = arith.constant 0 : index
    %231 = vector.load %arg8[%c1_114, %c0_115, %c0_116] : memref<2x1x32xf32, #tpu.memory_space<vmem>>, vector<1x1x32xf32>
    %232 = vector.shape_cast %231 : vector<1x1x32xf32> to vector<1x32xf32>
    %233 = vector.broadcast %232 : vector<1x32xf32> to vector<56x32xf32>
    %234 = arith.addf %230, %233 : vector<56x32xf32>
    %c1_117 = arith.constant 1 : index
    %c0_118 = arith.constant 0 : index
    %c0_119 = arith.constant 0 : index
    %235 = vector.load %arg9[%c1_117, %c0_118, %c0_119] : memref<2x1x32xf32, #tpu.memory_space<vmem>>, vector<1x1x32xf32>
    %236 = vector.shape_cast %235 : vector<1x1x32xf32> to vector<1x32xf32>
    %237 = vector.broadcast %236 : vector<1x32xf32> to vector<56x32xf32>
    %238 = arith.mulf %237, %234 : vector<56x32xf32>
    %239 = arith.addf %152, %238 : vector<56x32xf32>
    %c1_120 = arith.constant 1 : index
    %c0_121 = arith.constant 0 : index
    %c0_122 = arith.constant 0 : index
    %240 = vector.load %arg10[%c1_120, %c0_121, %c0_122] : memref<2x1x32xf32, #tpu.memory_space<vmem>>, vector<1x1x32xf32>
    %241 = vector.shape_cast %240 : vector<1x1x32xf32> to vector<1x32xf32>
    %c1_123 = arith.constant 1 : index
    %c0_124 = arith.constant 0 : index
    %c0_125 = arith.constant 0 : index
    %242 = vector.load %arg11[%c1_123, %c0_124, %c0_125] : memref<2x1x32xf32, #tpu.memory_space<vmem>>, vector<1x1x32xf32>
    %243 = vector.shape_cast %242 : vector<1x1x32xf32> to vector<1x32xf32>
    %cst_126 = arith.constant dense<0.000000e+00> : vector<56xf32>
    %244 = vector.multi_reduction <add>, %239, %cst_126 [1] : vector<56x32xf32> to vector<56xf32>
    %245 = vector.shape_cast %244 : vector<56xf32> to vector<56x1xf32>
    %cst_127 = arith.constant 3.200000e+01 : f32
    %246 = vector.broadcast %cst_127 : f32 to vector<56x1xf32>
    %247 = arith.divf %245, %246 : vector<56x1xf32>
    %248 = vector.broadcast %247 : vector<56x1xf32> to vector<56x32xf32>
    %249 = arith.subf %239, %248 : vector<56x32xf32>
    %250 = arith.mulf %249, %249 : vector<56x32xf32>
    %cst_128 = arith.constant dense<0.000000e+00> : vector<56xf32>
    %251 = vector.multi_reduction <add>, %250, %cst_128 [1] : vector<56x32xf32> to vector<56xf32>
    %252 = vector.shape_cast %251 : vector<56xf32> to vector<56x1xf32>
    %cst_129 = arith.constant 3.200000e+01 : f32
    %253 = vector.broadcast %cst_129 : f32 to vector<56x1xf32>
    %254 = arith.divf %252, %253 : vector<56x1xf32>
    %255 = vector.broadcast %247 : vector<56x1xf32> to vector<56x32xf32>
    %256 = arith.subf %239, %255 : vector<56x32xf32>
    %cst_130 = arith.constant 9.99999997E-7 : f32
    %257 = vector.broadcast %cst_130 : f32 to vector<56x1xf32>
    %258 = arith.addf %254, %257 : vector<56x1xf32>
    %259 = math.rsqrt %258 : vector<56x1xf32>
    %260 = vector.broadcast %259 : vector<56x1xf32> to vector<56x32xf32>
    %261 = arith.mulf %256, %260 : vector<56x32xf32>
    %262 = vector.broadcast %241 : vector<1x32xf32> to vector<56x32xf32>
    %263 = arith.mulf %261, %262 : vector<56x32xf32>
    %264 = vector.broadcast %243 : vector<1x32xf32> to vector<56x32xf32>
    %265 = arith.addf %263, %264 : vector<56x32xf32>
    %c1_131 = arith.constant 1 : index
    %c0_132 = arith.constant 0 : index
    %c0_133 = arith.constant 0 : index
    %266 = vector.load %arg12[%c1_131, %c0_132, %c0_133] : memref<2x32x128xf32, #tpu.memory_space<vmem>>, vector<1x32x128xf32>
    %267 = vector.shape_cast %266 : vector<1x32x128xf32> to vector<32x128xf32>
    %cst_134 = arith.constant dense<0.000000e+00> : vector<56x128xf32>
    %268 = tpu.matmul %265, %267, %cst_134 {dimension_numbers = #tpu.dot_dimension_numbers<[1], [0], [0], [1], [0, 0, 1, 1], [], []>} : vector<56x32xf32>, vector<32x128xf32>, vector<56x128xf32> -> vector<56x128xf32>
    %c1_135 = arith.constant 1 : index
    %c0_136 = arith.constant 0 : index
    %c0_137 = arith.constant 0 : index
    %269 = vector.load %arg13[%c1_135, %c0_136, %c0_137] : memref<2x1x128xf32, #tpu.memory_space<vmem>>, vector<1x1x128xf32>
    %270 = vector.shape_cast %269 : vector<1x1x128xf32> to vector<1x128xf32>
    %271 = vector.broadcast %270 : vector<1x128xf32> to vector<56x128xf32>
    %272 = arith.addf %268, %271 : vector<56x128xf32>
    %273 = arith.mulf %272, %272 : vector<56x128xf32>
    %274 = arith.mulf %272, %273 : vector<56x128xf32>
    %cst_138 = arith.constant 4.471500e-02 : f32
    %275 = vector.broadcast %cst_138 : f32 to vector<56x128xf32>
    %276 = arith.mulf %275, %274 : vector<56x128xf32>
    %277 = arith.addf %272, %276 : vector<56x128xf32>
    %cst_139 = arith.constant 0.797884583 : f32
    %278 = vector.broadcast %cst_139 : f32 to vector<56x128xf32>
    %279 = arith.mulf %278, %277 : vector<56x128xf32>
    %280 = math.tanh %279 : vector<56x128xf32>
    %cst_140 = arith.constant 1.000000e+00 : f32
    %281 = vector.broadcast %cst_140 : f32 to vector<56x128xf32>
    %282 = arith.addf %281, %280 : vector<56x128xf32>
    %cst_141 = arith.constant 5.000000e-01 : f32
    %283 = vector.broadcast %cst_141 : f32 to vector<56x128xf32>
    %284 = arith.mulf %283, %282 : vector<56x128xf32>
    %285 = arith.mulf %272, %284 : vector<56x128xf32>
    %c1_142 = arith.constant 1 : index
    %c0_143 = arith.constant 0 : index
    %c0_144 = arith.constant 0 : index
    %286 = vector.load %arg14[%c1_142, %c0_143, %c0_144] : memref<2x128x32xf32, #tpu.memory_space<vmem>>, vector<1x128x32xf32>
    %287 = vector.shape_cast %286 : vector<1x128x32xf32> to vector<128x32xf32>
    %cst_145 = arith.constant dense<0.000000e+00> : vector<56x32xf32>
    %288 = tpu.matmul %285, %287, %cst_145 {dimension_numbers = #tpu.dot_dimension_numbers<[1], [0], [0], [1], [0, 0, 1, 1], [], []>} : vector<56x128xf32>, vector<128x32xf32>, vector<56x32xf32> -> vector<56x32xf32>
    %c1_146 = arith.constant 1 : index
    %c0_147 = arith.constant 0 : index
    %c0_148 = arith.constant 0 : index
    %289 = vector.load %arg15[%c1_146, %c0_147, %c0_148] : memref<2x1x32xf32, #tpu.memory_space<vmem>>, vector<1x1x32xf32>
    %290 = vector.shape_cast %289 : vector<1x1x32xf32> to vector<1x32xf32>
    %291 = vector.broadcast %290 : vector<1x32xf32> to vector<56x32xf32>
    %292 = arith.addf %288, %291 : vector<56x32xf32>
    %c1_149 = arith.constant 1 : index
    %c0_150 = arith.constant 0 : index
    %c0_151 = arith.constant 0 : index
    %293 = vector.load %arg16[%c1_149, %c0_150, %c0_151] : memref<2x1x32xf32, #tpu.memory_space<vmem>>, vector<1x1x32xf32>
    %294 = vector.shape_cast %293 : vector<1x1x32xf32> to vector<1x32xf32>
    %295 = vector.broadcast %294 : vector<1x32xf32> to vector<56x32xf32>
    %296 = arith.mulf %295, %292 : vector<56x32xf32>
    %297 = arith.addf %239, %296 : vector<56x32xf32>
    %c0_152 = arith.constant 0 : index
    %c0_153 = arith.constant 0 : index
    %298 = vector.load %arg17[%c0_152, %c0_153] : memref<1x32xf32, #tpu.memory_space<vmem>>, vector<1x32xf32>
    %c0_154 = arith.constant 0 : index
    %c0_155 = arith.constant 0 : index
    %299 = vector.load %arg18[%c0_154, %c0_155] : memref<1x32xf32, #tpu.memory_space<vmem>>, vector<1x32xf32>
    %cst_156 = arith.constant dense<0.000000e+00> : vector<56xf32>
    %300 = vector.multi_reduction <add>, %297, %cst_156 [1] : vector<56x32xf32> to vector<56xf32>
    %301 = vector.shape_cast %300 : vector<56xf32> to vector<56x1xf32>
    %cst_157 = arith.constant 3.200000e+01 : f32
    %302 = vector.broadcast %cst_157 : f32 to vector<56x1xf32>
    %303 = arith.divf %301, %302 : vector<56x1xf32>
    %304 = vector.broadcast %303 : vector<56x1xf32> to vector<56x32xf32>
    %305 = arith.subf %297, %304 : vector<56x32xf32>
    %306 = arith.mulf %305, %305 : vector<56x32xf32>
    %cst_158 = arith.constant dense<0.000000e+00> : vector<56xf32>
    %307 = vector.multi_reduction <add>, %306, %cst_158 [1] : vector<56x32xf32> to vector<56xf32>
    %308 = vector.shape_cast %307 : vector<56xf32> to vector<56x1xf32>
    %cst_159 = arith.constant 3.200000e+01 : f32
    %309 = vector.broadcast %cst_159 : f32 to vector<56x1xf32>
    %310 = arith.divf %308, %309 : vector<56x1xf32>
    %311 = vector.broadcast %303 : vector<56x1xf32> to vector<56x32xf32>
    %312 = arith.subf %297, %311 : vector<56x32xf32>
    %cst_160 = arith.constant 9.99999997E-7 : f32
    %313 = vector.broadcast %cst_160 : f32 to vector<56x1xf32>
    %314 = arith.addf %310, %313 : vector<56x1xf32>
    %315 = math.rsqrt %314 : vector<56x1xf32>
    %316 = vector.broadcast %315 : vector<56x1xf32> to vector<56x32xf32>
    %317 = arith.mulf %312, %316 : vector<56x32xf32>
    %318 = vector.broadcast %298 : vector<1x32xf32> to vector<56x32xf32>
    %319 = arith.mulf %317, %318 : vector<56x32xf32>
    %320 = vector.broadcast %299 : vector<1x32xf32> to vector<56x32xf32>
    %321 = arith.addf %319, %320 : vector<56x32xf32>
    %c0_161 = arith.constant 0 : index
    %c0_162 = arith.constant 0 : index
    %322 = vector.load %arg19[%c0_161, %c0_162] : memref<56x32xf32, #tpu.memory_space<vmem>>, vector<56x32xf32>
    tpu.vector_store %arg19[%c0_161, %c0_162], %321 {strides = array<i32>} : memref<56x32xf32, #tpu.memory_space<vmem>>, vector<56x32xf32>,
    return
  }
}

</mosaic_0001>

<llo_original>
// kernel: _forward_impl.1
$region0: #{_forward_impl.1}
  #allocation0 [shape = 'u32[]', space=smem, size = 0x4, offset = 0x4, fixed_abs, tag = 'smem constant byte address 0x4 - core index']
  #allocation1 [shape = 'u32[144,128]{1,0:T(1,128)}', space=vmem, size = 0x12000, scoped, tag = 'internal scratch']
  %s0 = inlined_call_operand.vmem [shape: f32[56,48], index: 0, kind: input, shape index: {}]
  %s1 = inlined_call_operand.vmem [shape: f32[48,32], index: 1, kind: input, shape index: {}]
  %s2 = inlined_call_operand.vmem [shape: f32[56,32], index: 2, kind: input, shape index: {}]
  %s3 = inlined_call_operand.vmem [shape: f32[2,1,32], index: 3, kind: input, shape index: {}]
  %s4 = inlined_call_operand.vmem [shape: f32[2,1,32], index: 4, kind: input, shape index: {}]
  %s5 = inlined_call_operand.vmem [shape: f32[2,32,96], index: 5, kind: input, shape index: {}]
  %s6 = inlined_call_operand.vmem [shape: f32[2,1,96], index: 6, kind: input, shape index: {}]
  %s7 = inlined_call_operand.vmem [shape: f32[2,32,32], index: 7, kind: input, shape index: {}]
  %s8 = inlined_call_operand.vmem [shape: f32[2,1,32], index: 8, kind: input, shape index: {}]
  %s9 = inlined_call_operand.vmem [shape: f32[2,1,32], index: 9, kind: input, shape index: {}]
  %s10 = inlined_call_operand.vmem [shape: f32[2,1,32], index: 10, kind: input, shape index: {}]
  %s11 = inlined_call_operand.vmem [shape: f32[2,1,32], index: 11, kind: input, shape index: {}]
  %s12 = inlined_call_operand.vmem [shape: f32[2,32,128], index: 12, kind: input, shape index: {}]
  %s13 = inlined_call_operand.vmem [shape: f32[2,1,128], index: 13, kind: input, shape index: {}]
  %s14 = inlined_call_operand.vmem [shape: f32[2,128,32], index: 14, kind: input, shape index: {}]
  %s15 = inlined_call_operand.vmem [shape: f32[2,1,32], index: 15, kind: input, shape index: {}]
  %s16 = inlined_call_operand.vmem [shape: f32[2,1,32], index: 16, kind: input, shape index: {}]
  %s17 = inlined_call_operand.vmem [shape: f32[1,32], index: 17, kind: input, shape index: {}]
  %s18 = inlined_call_operand.vmem [shape: f32[1,32], index: 18, kind: input, shape index: {}]
  %s19 = inlined_call_operand.vmem [shape: f32[56,32], index: 19, kind: output, shape index: {}]
  %s20 = sld [smem:[#allocation0]]
  $region86: #{_forward_impl.1} parent=0
    _
  %s22 = ssub.s32 1, %s20
  %s23 = scalar_select 0, %s22, %s20
  // Predicated region
  $region2: #{_forward_impl.1} parent=0 // pred_check
    _
  $region3: #{_forward_impl.1} parent=0 // pred_check_branch
    %25 = sbr.rel (0) target = $region5
  $region4: #{_forward_impl.1} parent=0 // pred_region
    _
  $region5: #{_forward_impl.1} parent=0 // pred_fallthru
    _
  // Predicated region
  $region6: #{_forward_impl.1} parent=0 // pred_check
    _
  $region7: #{_forward_impl.1} parent=0 // pred_check_branch
    %27 = sbr.rel (0) target = $region9
  $region8: #{_forward_impl.1} parent=0 // pred_region
    _
  $region9: #{_forward_impl.1} parent=0 // pred_fallthru
    _
  // Predicated region
  $region10: #{_forward_impl.1} parent=0 // pred_check
    _
  $region11: #{_forward_impl.1} parent=0 // pred_check_branch
    %29 = sbr.rel (0) target = $region13
  $region12: #{_forward_impl.1} parent=0 // pred_region
    _
  $region13: #{_forward_impl.1} parent=0 // pred_fallthru
    _
  // Predicated region
  $region14: #{_forward_impl.1} parent=0 // pred_check
    _
  $region15: #{_forward_impl.1} parent=0 // pred_check_branch
    %31 = sbr.rel (0) target = $region17
  $region16: #{_forward_impl.1} parent=0 // pred_region
    _
  $region17: #{_forward_impl.1} parent=0 // pred_fallthru
    _
  // Predicated region
  $region18: #{_forward_impl.1} parent=0 // pred_check
    _
  $region19: #{_forward_impl.1} parent=0 // pred_check_branch
    %33 = sbr.rel (0) target = $region21
  $region20: #{_forward_impl.1} parent=0 // pred_region
    _
  $region21: #{_forward_impl.1} parent=0 // pred_fallthru
    _
  // Predicated region
  $region22: #{_forward_impl.1} parent=0 // pred_check
    _
  $region23: #{_forward_impl.1} parent=0 // pred_check_branch
    %35 = sbr.rel (0) target = $region25
  $region24: #{_forward_impl.1} parent=0 // pred_region
    _
  $region25: #{_forward_impl.1} parent=0 // pred_fallthru
    _
  // Predicated region
  $region26: #{_forward_impl.1} parent=0 // pred_check
    _
  $region27: #{_forward_impl.1} parent=0 // pred_check_branch
    %37 = sbr.rel (0) target = $region29
  $region28: #{_forward_impl.1} parent=0 // pred_region
    _
  $region29: #{_forward_impl.1} parent=0 // pred_fallthru
    _
  // Predicated region
  $region30: #{_forward_impl.1} parent=0 // pred_check
    _
  $region31: #{_forward_impl.1} parent=0 // pred_check_branch
    %39 = sbr.rel (0) target = $region33
  $region32: #{_forward_impl.1} parent=0 // pred_region
    _
  $region33: #{_forward_impl.1} parent=0 // pred_fallthru
    _
  // Predicated region
  $region34: #{_forward_impl.1} parent=0 // pred_check
    _
  $region35: #{_forward_impl.1} parent=0 // pred_check_branch
    %41 = sbr.rel (0) target = $region37
  $region36: #{_forward_impl.1} parent=0 // pred_region
    _
  $region37: #{_forward_impl.1} parent=0 // pred_fallthru
    _
  // Predicated region
  $region38: #{_forward_impl.1} parent=0 // pred_check
    _
  $region39: #{_forward_impl.1} parent=0 // pred_check_branch
    %43 = sbr.rel (0) target = $region41
  $region40: #{_forward_impl.1} parent=0 // pred_region
    _
  $region41: #{_forward_impl.1} parent=0 // pred_fallthru
    _
  // Predicated region
  $region42: #{_forward_impl.1} parent=0 // pred_check
    _
  $region43: #{_forward_impl.1} parent=0 // pred_check_branch
    %45 = sbr.rel (0) target = $region45
  $region44: #{_forward_impl.1} parent=0 // pred_region
    _
  $region45: #{_forward_impl.1} parent=0 // pred_fallthru
    _
  // Predicated region
  $region46: #{_forward_impl.1} parent=0 // pred_check
    _
  $region47: #{_forward_impl.1} parent=0 // pred_check_branch
    %47 = sbr.rel (0) target = $region49
  $region48: #{_forward_impl.1} parent=0 // pred_region
    _
  $region49: #{_forward_impl.1} parent=0 // pred_fallthru
    _
  // Predicated region
  $region50: #{_forward_impl.1} parent=0 // pred_check
    _
  $region51: #{_forward_impl.1} parent=0 // pred_check_branch
    %49 = sbr.rel (0) target = $region53
  $region52: #{_forward_impl.1} parent=0 // pred_region
    _
  $region53: #{_forward_impl.1} parent=0 // pred_fallthru
    _
  // Predicated region
  $region54: #{_forward_impl.1} parent=0 // pred_check
    _
  $region55: #{_forward_impl.1} parent=0 // pred_check_branch
    %51 = sbr.rel (0) target = $region57
  $region56: #{_forward_impl.1} parent=0 // pred_region
    _
  $region57: #{_forward_impl.1} parent=0 // pred_fallthru
    _
  // Predicated region
  $region58: #{_forward_impl.1} parent=0 // pred_check
    _
  $region59: #{_forward_impl.1} parent=0 // pred_check_branch
    %53 = sbr.rel (0) target = $region61
  $region60: #{_forward_impl.1} parent=0 // pred_region
    _
  $region61: #{_forward_impl.1} parent=0 // pred_fallthru
    _
  // Predicated region
  $region62: #{_forward_impl.1} parent=0 // pred_check
    _
  $region63: #{_forward_impl.1} parent=0 // pred_check_branch
    %55 = sbr.rel (0) target = $region65
  $region64: #{_forward_impl.1} parent=0 // pred_region
    _
  $region65: #{_forward_impl.1} parent=0 // pred_fallthru
    _
  // Predicated region
  $region66: #{_forward_impl.1} parent=0 // pred_check
    _
  $region67: #{_forward_impl.1} parent=0 // pred_check_branch
    %57 = sbr.rel (0) target = $region69
  $region68: #{_forward_impl.1} parent=0 // pred_region
    _
  $region69: #{_forward_impl.1} parent=0 // pred_fallthru
    _
  // Predicated region
  $region70: #{_forward_impl.1} parent=0 // pred_check
    _
  $region71: #{_forward_impl.1} parent=0 // pred_check_branch
    %59 = sbr.rel (0) target = $region73
  $region72: #{_forward_impl.1} parent=0 // pred_region
    _
  $region73: #{_forward_impl.1} parent=0 // pred_fallthru
    _
  // Predicated region
  $region74: #{_forward_impl.1} parent=0 // pred_check
    _
  $region75: #{_forward_impl.1} parent=0 // pred_check_branch
    %61 = sbr.rel (0) target = $region77
  $region76: #{_forward_impl.1} parent=0 // pred_region
    _
  $region77: #{_forward_impl.1} parent=0 // pred_fallthru
    _
  %v62 = vld [vmem:[%s2] sm:$0xff]
  %v63 = vld [vmem:[%s2 + $0x8] sm:$0xff]
  %v64 = vld [vmem:[%s2 + $0x10] sm:$0xff]
  %v65 = vld [vmem:[%s2 + $0x18] sm:$0xff]
  %v66 = vld [vmem:[%s2 + $0x20] sm:$0xff]
  %v67 = vld [vmem:[%s2 + $0x28] sm:$0xff]
  %v68 = vld [vmem:[%s2 + $0x30] sm:$0xff]
  %v69 = vld [vmem:[%s0] sm:$0xff]
  %v70 = vld [vmem:[%s0 + $0x8] sm:$0xff]
  %v71 = vld [vmem:[%s0 + $0x10] sm:$0xff]
  %v72 = vld [vmem:[%s0 + $0x18] sm:$0xff]
  %v73 = vld [vmem:[%s0 + $0x20] sm:$0xff]
  %v74 = vld [vmem:[%s0 + $0x28] sm:$0xff]
  %v75 = vld [vmem:[%s0 + $0x30] sm:$0xff]
  %v76 = vld [vmem:[%s1] sm:$0xff]
  %v77 = vld [vmem:[%s1 + $0x8] sm:$0xff]
  %v78 = vld [vmem:[%s1 + $0x10] sm:$0xff]
  %v79 = vld [vmem:[%s1 + $0x18] sm:$0xff]
  %v80 = vld [vmem:[%s1 + $0x20] sm:$0xff]
  %v81 = vld [vmem:[%s1 + $0x28] sm:$0xff]
  %vm82 = vcmask 392192
  %v84 = vsel %vm82, %v69, 0
  %v87 = vsel %vm82, %v70, 0
  %v90 = vsel %vm82, %v71, 0
  %v93 = vsel %vm82, %v72, 0
  %v96 = vsel %vm82, %v73, 0
  %v99 = vsel %vm82, %v74, 0
  %v102 = vsel %vm82, %v75, 0
  %104 = vmatprep.subr.mxu0 0.0
  %105 = vmatpush1.msra.mxu0 0.0
  %106 = vmatprep.subr.mxu0 0.0
  %107 = vmatpush1.msra.mxu0 0.0
  %108 = vmatprep.subr.mxu0 0.0
  %109 = vmatpush1.msra.mxu0 0.0
  %110 = vmatprep.subr.mxu0 0.0
  %111 = vmatpush1.msra.mxu0 0.0
  %112 = vmatprep.subr.mxu0 0.0
  %113 = vmatpush1.msra.mxu0 0.0
  %114 = vmatprep.subr.mxu0 0.0
  %115 = vmatpush1.msra.mxu0 0.0
  %116 = vmatprep.subr.mxu0 0.0
  %117 = vmatpush1.msra.mxu0 0.0
  %118 = vmatprep.subr.mxu0 0.0
  %119 = vmatpush1.msra.mxu0 0.0
  %120 = vmatprep.subr.mxu0 0.0
  %121 = vmatpush1.msra.mxu0 0.0
  %122 = vmatprep.subr.mxu0 0.0
  %123 = vmatpush1.msra.mxu0 0.0
  %124 = vmatprep.subr.mxu0 0.0
  %125 = vmatpush1.msra.mxu0 %v81
  %126 = vmatprep.subr.mxu0 0.0
  %127 = vmatpush1.msra.mxu0 %v80
  %128 = vmatprep.subr.mxu0 0.0
  %129 = vmatpush1.msra.mxu0 %v79
  %130 = vmatprep.subr.mxu0 0.0
  %131 = vmatpush1.msra.mxu0 %v78
  %132 = vmatprep.subr.mxu0 0.0
  %133 = vmatpush1.msra.mxu0 %v77
  %134 = vmatprep.subr.mxu0 0.0
  %135 = vmatpush1.msra.mxu0 %v76
  %136 = vmatprep.subr.mxu0 0.0
  %137 = vmatpush2.msra.mxu0 0.0
  %138 = vmatprep.subr.mxu0 0.0
  %139 = vmatpush2.msra.mxu0 0.0
  %140 = vmatprep.subr.mxu0 0.0
  %141 = vmatpush2.msra.mxu0 0.0
  %142 = vmatprep.subr.mxu0 0.0
  %143 = vmatpush2.msra.mxu0 0.0
  %144 = vmatprep.subr.mxu0 0.0
  %145 = vmatpush2.msra.mxu0 0.0
  %146 = vmatprep.subr.mxu0 0.0
  %147 = vmatpush2.msra.mxu0 0.0
  %148 = vmatprep.subr.mxu0 0.0
  %149 = vmatpush2.msra.mxu0 0.0
  %150 = vmatprep.subr.mxu0 0.0
  %151 = vmatpush2.msra.mxu0 0.0
  %152 = vmatprep.subr.mxu0 0.0
  %153 = vmatpush2.msra.mxu0 0.0
  %154 = vmatprep.subr.mxu0 0.0
  %155 = vmatpush2.msra.mxu0 0.0
  %156 = vmatprep.subr.mxu0 0.0
  %157 = vmatpush2.msra.mxu0 0.0
  %158 = vmatprep.subr.mxu0 0.0
  %159 = vmatpush2.msra.mxu0 0.0
  %160 = vmatprep.subr.mxu0 0.0
  %161 = vmatpush2.msra.mxu0 0.0
  %162 = vmatprep.subr.mxu0 0.0
  %163 = vmatpush2.msra.mxu0 0.0
  %164 = vmatprep.subr.mxu0 0.0
  %165 = vmatpush2.msra.mxu0 0.0
  %166 = vmatprep.subr.mxu0 0.0
  %167 = vmatpush2.msra.mxu0 0.0
  %168 = vmatprep.mubr.f32.mxu0 0.0
  %169 = vmatmul.mubr.f32.gmra.mxu0 %v84
  %v170 = vpop.f32.mrf.mxu0
  %v171 = vadd.f32 0.0, %v170
  %v172 = vpop.f32.mrf.mxu0
  %173 = vmatprep.mubr.f32.mxu0 0.0
  %174 = vmatmul.mubr.f32.gmra.mxu0 %v87
  %v175 = vpop.f32.mrf.mxu0
  %v176 = vadd.f32 0.0, %v175
  %v177 = vpop.f32.mrf.mxu0
  %178 = vmatprep.mubr.f32.mxu0 0.0
  %179 = vmatmul.mubr.f32.gmra.mxu0 %v90
  %v180 = vpop.f32.mrf.mxu0
  %v181 = vadd.f32 0.0, %v180
  %v182 = vpop.f32.mrf.mxu0
  %183 = vmatprep.mubr.f32.mxu0 0.0
  %184 = vmatmul.mubr.f32.gmra.mxu0 %v93
  %v185 = vpop.f32.mrf.mxu0
  %v186 = vadd.f32 0.0, %v185
  %v187 = vpop.f32.mrf.mxu0
  %188 = vmatprep.mubr.f32.mxu0 0.0
  %189 = vmatmul.mubr.f32.gmra.mxu0 %v96
  %v190 = vpop.f32.mrf.mxu0
  %v191 = vadd.f32 0.0, %v190
  %v192 = vpop.f32.mrf.mxu0
  %193 = vmatprep.mubr.f32.mxu0 0.0
  %194 = vmatmul.mubr.f32.gmra.mxu0 %v99
  %v195 = vpop.f32.mrf.mxu0
  %v196 = vadd.f32 0.0, %v195
  %v197 = vpop.f32.mrf.mxu0
  %198 = vmatprep.mubr.f32.mxu0 0.0
  %199 = vmatmul.mubr.f32.gmra.mxu0 %v102
  %v200 = vpop.f32.mrf.mxu0
  %v201 = vadd.f32 0.0, %v200
  %v202 = vpop.f32.mrf.mxu0
  %203 = vdwg.mxu0
  %v204 = vadd.f32 %v62, %v171
  %v205 = vadd.f32 %v63, %v176
  %v206 = vadd.f32 %v64, %v181
  %v207 = vadd.f32 %v65, %v186
  %v208 = vadd.f32 %v66, %v191
  %v209 = vadd.f32 %v67, %v196
  %v210 = vadd.f32 %v68, %v201
  %v211 = vlaneseq
  %v212 = vand.u32 %v211, 127
  %vm213 = vcmp.lt.s32.totalorder %v212, 54
  %v214 = vld [vmem:[%s3] sm:$0x1]
  %v215 = vld [vmem:[%s4] sm:$0x1]
  %vm216 = vcmask 261120
  %v217 = vsel %vm216, %v204, 0.0
  %218 = vadd.xlane.f32.xlu0 %v217
  %v219 = vpop.xlane.xlu0 %218
  %v220 = vsel %vm216, %v205, 0.0
  %221 = vadd.xlane.f32.xlu0 %v220
  %v222 = vpop.xlane.xlu0 %221
  %v223 = vsel %vm216, %v206, 0.0
  %224 = vadd.xlane.f32.xlu0 %v223
  %v225 = vpop.xlane.xlu0 %224
  %v226 = vsel %vm216, %v207, 0.0
  %227 = vadd.xlane.f32.xlu0 %v226
  %v228 = vpop.xlane.xlu0 %227
  %v229 = vsel %vm216, %v208, 0.0
  %230 = vadd.xlane.f32.xlu0 %v229
  %v231 = vpop.xlane.xlu0 %230
  %v232 = vsel %vm216, %v209, 0.0
  %233 = vadd.xlane.f32.xlu0 %v232
  %v234 = vpop.xlane.xlu0 %233
  %v235 = vsel %vm216, %v210, 0.0
  %236 = vadd.xlane.f32.xlu0 %v235
  %v237 = vpop.xlane.xlu0 %236
  %v238 = vrcp.pop 32.0
  %v239 = vmul.f32 %v219, %v238
  %v240 = vmul.f32 %v222, %v238
  %v241 = vmul.f32 %v225, %v238
  %v242 = vmul.f32 %v228, %v238
  %v243 = vmul.f32 %v231, %v238
  %v244 = vmul.f32 %v234, %v238
  %v245 = vmul.f32 %v237, %v238
  %v246 = vsub.f32 %v204, %v239
  %v247 = vsub.f32 %v205, %v240
  %v248 = vsub.f32 %v206, %v241
  %v249 = vsub.f32 %v207, %v242
  %v250 = vsub.f32 %v208, %v243
  %v251 = vsub.f32 %v209, %v244
  %v252 = vsub.f32 %v210, %v245
  %v253 = vmul.f32 %v246, %v246
  %v254 = vmul.f32 %v247, %v247
  %v255 = vmul.f32 %v248, %v248
  %v256 = vmul.f32 %v249, %v249
  %v257 = vmul.f32 %v250, %v250
  %v258 = vmul.f32 %v251, %v251
  %v259 = vmul.f32 %v252, %v252
  %v260 = vsel %vm216, %v253, 0.0
  %261 = vadd.xlane.f32.xlu0 %v260
  %v262 = vpop.xlane.xlu0 %261
  %v263 = vsel %vm216, %v254, 0.0
  %264 = vadd.xlane.f32.xlu0 %v263
  %v265 = vpop.xlane.xlu0 %264
  %v266 = vsel %vm216, %v255, 0.0
  %267 = vadd.xlane.f32.xlu0 %v266
  %v268 = vpop.xlane.xlu0 %267
  %v269 = vsel %vm216, %v256, 0.0
  %270 = vadd.xlane.f32.xlu0 %v269
  %v271 = vpop.xlane.xlu0 %270
  %v272 = vsel %vm216, %v257, 0.0
  %273 = vadd.xlane.f32.xlu0 %v272
  %v274 = vpop.xlane.xlu0 %273
  %v275 = vsel %vm216, %v258, 0.0
  %276 = vadd.xlane.f32.xlu0 %v275
  %v277 = vpop.xlane.xlu0 %276
  %v278 = vsel %vm216, %v259, 0.0
  %279 = vadd.xlane.f32.xlu0 %v278
  %v280 = vpop.xlane.xlu0 %279
  %v281 = vmul.f32 %v262, %v238
  %v282 = vmul.f32 %v265, %v238
  %v283 = vmul.f32 %v268, %v238
  %v284 = vmul.f32 %v271, %v238
  %v285 = vmul.f32 %v274, %v238
  %v286 = vmul.f32 %v277, %v238
  %v287 = vmul.f32 %v280, %v238
  %v288 = vadd.f32 %v281, 1e-06
  %v289 = vadd.f32 %v282, 1e-06
  %v290 = vadd.f32 %v283, 1e-06
  %v291 = vadd.f32 %v284, 1e-06
  %v292 = vadd.f32 %v285, 1e-06
  %v293 = vadd.f32 %v286, 1e-06
  %v294 = vadd.f32 %v287, 1e-06
  %v295 = vrsqrt.pop %v288
  %v296 = vrsqrt.pop %v289
  %v297 = vrsqrt.pop %v290
  %v298 = vrsqrt.pop %v291
  %v299 = vrsqrt.pop %v292
  %v300 = vrsqrt.pop %v293
  %v301 = vrsqrt.pop %v294
  %v302 = vmul.f32 %v246, %v295
  %v303 = vmul.f32 %v247, %v296
  %v304 = vmul.f32 %v248, %v297
  %v305 = vmul.f32 %v249, %v298
  %v306 = vmul.f32 %v250, %v299
  %v307 = vmul.f32 %v251, %v300
  %v308 = vmul.f32 %v252, %v301
  %v310 = vlaneseq
  %v311 = vshrl.u32 %v310, 7
  %v312 = vsub.s32 0, %v311
  %v313 = vrot.slane %v214, %v312
  %v315 = vmul.f32 %v302, %v313
  %v316 = vmul.f32 %v303, %v313
  %v317 = vmul.f32 %v304, %v313
  %v318 = vmul.f32 %v305, %v313
  %v319 = vmul.f32 %v306, %v313
  %v320 = vmul.f32 %v307, %v313
  %v321 = vmul.f32 %v308, %v313
  %v323 = vlaneseq
  %v324 = vshrl.u32 %v323, 7
  %v325 = vsub.s32 0, %v324
  %v326 = vrot.slane %v215, %v325
  %v328 = vadd.f32 %v315, %v326
  %v329 = vadd.f32 %v316, %v326
  %v330 = vadd.f32 %v317, %v326
  %v331 = vadd.f32 %v318, %v326
  %v332 = vadd.f32 %v319, %v326
  %v333 = vadd.f32 %v320, %v326
  %v334 = vadd.f32 %v321, %v326
  %v335 = vld [vmem:[%s5] sm:$0xff]
  %v336 = vld [vmem:[%s5 + $0x8] sm:$0xff]
  %v337 = vld [vmem:[%s5 + $0x10] sm:$0xff]
  %v338 = vld [vmem:[%s5 + $0x18] sm:$0xff]
  %v339 = vld [vmem:[%s6] sm:$0x1]
  %v341 = vlaneseq
  %v342 = vshrl.u32 %v341, 7
  %v343 = vsub.s32 0, %v342
  %v344 = vrot.slane %v339, %v343
  %v347 = vsel %vm216, %v328, 0
  %v350 = vsel %vm216, %v329, 0
  %v353 = vsel %vm216, %v330, 0
  %v356 = vsel %vm216, %v331, 0
  %v359 = vsel %vm216, %v332, 0
  %v362 = vsel %vm216, %v333, 0
  %v365 = vsel %vm216, %v334, 0
  %367 = vmatprep.subr.mxu0 0.0
  %368 = vmatpush1.msra.mxu0 0.0
  %369 = vmatprep.subr.mxu0 0.0
  %370 = vmatpush1.msra.mxu0 0.0
  %371 = vmatprep.subr.mxu0 0.0
  %372 = vmatpush1.msra.mxu0 0.0
  %373 = vmatprep.subr.mxu0 0.0
  %374 = vmatpush1.msra.mxu0 0.0
  %375 = vmatprep.subr.mxu0 0.0
  %376 = vmatpush1.msra.mxu0 0.0
  %377 = vmatprep.subr.mxu0 0.0
  %378 = vmatpush1.msra.mxu0 0.0
  %379 = vmatprep.subr.mxu0 0.0
  %380 = vmatpush1.msra.mxu0 0.0
  %381 = vmatprep.subr.mxu0 0.0
  %382 = vmatpush1.msra.mxu0 0.0
  %383 = vmatprep.subr.mxu0 0.0
  %384 = vmatpush1.msra.mxu0 0.0
  %385 = vmatprep.subr.mxu0 0.0
  %386 = vmatpush1.msra.mxu0 0.0
  %387 = vmatprep.subr.mxu0 0.0
  %388 = vmatpush1.msra.mxu0 0.0
  %389 = vmatprep.subr.mxu0 0.0
  %390 = vmatpush1.msra.mxu0 0.0
  %391 = vmatprep.subr.mxu0 0.0
  %392 = vmatpush1.msra.mxu0 %v338
  %393 = vmatprep.subr.mxu0 0.0
  %394 = vmatpush1.msra.mxu0 %v337
  %395 = vmatprep.subr.mxu0 0.0
  %396 = vmatpush1.msra.mxu0 %v336
  %397 = vmatprep.subr.mxu0 0.0
  %398 = vmatpush1.msra.mxu0 %v335
  %399 = vmatprep.subr.mxu0 0.0
  %400 = vmatpush2.msra.mxu0 0.0
  %401 = vmatprep.subr.mxu0 0.0
  %402 = vmatpush2.msra.mxu0 0.0
  %403 = vmatprep.subr.mxu0 0.0
  %404 = vmatpush2.msra.mxu0 0.0
  %405 = vmatprep.subr.mxu0 0.0
  %406 = vmatpush2.msra.mxu0 0.0
  %407 = vmatprep.subr.mxu0 0.0
  %408 = vmatpush2.msra.mxu0 0.0
  %409 = vmatprep.subr.mxu0 0.0
  %410 = vmatpush2.msra.mxu0 0.0
  %411 = vmatprep.subr.mxu0 0.0
  %412 = vmatpush2.msra.mxu0 0.0
  %413 = vmatprep.subr.mxu0 0.0
  %414 = vmatpush2.msra.mxu0 0.0
  %415 = vmatprep.subr.mxu0 0.0
  %416 = vmatpush2.msra.mxu0 0.0
  %417 = vmatprep.subr.mxu0 0.0
  %418 = vmatpush2.msra.mxu0 0.0
  %419 = vmatprep.subr.mxu0 0.0
  %420 = vmatpush2.msra.mxu0 0.0
  %421 = vmatprep.subr.mxu0 0.0
  %422 = vmatpush2.msra.mxu0 0.0
  %423 = vmatprep.subr.mxu0 0.0
  %424 = vmatpush2.msra.mxu0 0.0
  %425 = vmatprep.subr.mxu0 0.0
  %426 = vmatpush2.msra.mxu0 0.0
  %427 = vmatprep.subr.mxu0 0.0
  %428 = vmatpush2.msra.mxu0 0.0
  %429 = vmatprep.subr.mxu0 0.0
  %430 = vmatpush2.msra.mxu0 0.0
  %431 = vmatprep.mubr.f32.mxu0 0.0
  %432 = vmatmul.mubr.f32.gmra.mxu0 %v347
  %v433 = vpop.f32.mrf.mxu0
  %v434 = vadd.f32 %v344, %v433
  %v435 = vpop.f32.mrf.mxu0
  %436 = vmatprep.mubr.f32.mxu0 0.0
  %437 = vmatmul.mubr.f32.gmra.mxu0 %v350
  %v438 = vpop.f32.mrf.mxu0
  %v439 = vadd.f32 %v344, %v438
  %v440 = vpop.f32.mrf.mxu0
  %441 = vmatprep.mubr.f32.mxu0 0.0
  %442 = vmatmul.mubr.f32.gmra.mxu0 %v353
  %v443 = vpop.f32.mrf.mxu0
  %v444 = vadd.f32 %v344, %v443
  %v445 = vpop.f32.mrf.mxu0
  %446 = vmatprep.mubr.f32.mxu0 0.0
  %447 = vmatmul.mubr.f32.gmra.mxu0 %v356
  %v448 = vpop.f32.mrf.mxu0
  %v449 = vadd.f32 %v344, %v448
  %v450 = vpop.f32.mrf.mxu0
  %451 = vmatprep.mubr.f32.mxu0 0.0
  %452 = vmatmul.mubr.f32.gmra.mxu0 %v359
  %v453 = vpop.f32.mrf.mxu0
  %v454 = vadd.f32 %v344, %v453
  %v455 = vpop.f32.mrf.mxu0
  %456 = vmatprep.mubr.f32.mxu0 0.0
  %457 = vmatmul.mubr.f32.gmra.mxu0 %v362
  %v458 = vpop.f32.mrf.mxu0
  %v459 = vadd.f32 %v344, %v458
  %v460 = vpop.f32.mrf.mxu0
  %461 = vmatprep.mubr.f32.mxu0 0.0
  %462 = vmatmul.mubr.f32.gmra.mxu0 %v365
  %v463 = vpop.f32.mrf.mxu0
  %v464 = vadd.f32 %v344, %v463
  %v465 = vpop.f32.mrf.mxu0
  %466 = vdwg.mxu0
  %v467 = vld [vmem:[%s7] sm:$0xff]
  %v468 = vld [vmem:[%s7 + $0x8] sm:$0xff]
  %v469 = vld [vmem:[%s7 + $0x10] sm:$0xff]
  %v470 = vld [vmem:[%s7 + $0x18] sm:$0xff]
  %478 = vrot.lane.b32.xlu0 %v434, 96
  %v479 = vpop.permute.xlu0 %478
  %480 = vrot.lane.b32.xlu0 %v439, 96
  %v481 = vpop.permute.xlu0 %480
  %482 = vrot.lane.b32.xlu0 %v444, 96
  %v483 = vpop.permute.xlu0 %482
  %484 = vrot.lane.b32.xlu0 %v449, 96
  %v485 = vpop.permute.xlu0 %484
  %486 = vrot.lane.b32.xlu0 %v454, 96
  %v487 = vpop.permute.xlu0 %486
  %488 = vrot.lane.b32.xlu0 %v459, 96
  %v489 = vpop.permute.xlu0 %488
  %490 = vrot.lane.b32.xlu0 %v464, 96
  %v491 = vpop.permute.xlu0 %490
  %vm492 = vcmask 130048
  %v493 = vsel %vm492, %v434, 0
  %v495 = vsel %vm492, %v439, 0
  %v497 = vsel %vm492, %v444, 0
  %v499 = vsel %vm492, %v449, 0
  %v501 = vsel %vm492, %v454, 0
  %v503 = vsel %vm492, %v459, 0
  %v505 = vsel %vm492, %v464, 0
  %v507 = vsel %vm492, %v479, 0
  %v509 = vsel %vm492, %v481, 0
  %v511 = vsel %vm492, %v483, 0
  %v513 = vsel %vm492, %v485, 0
  %v515 = vsel %vm492, %v487, 0
  %v517 = vsel %vm492, %v489, 0
  %v519 = vsel %vm492, %v491, 0
  %521 = vmatprep.subr.mxu0 0.0
  %522 = vmatpush1.xpose.msra.mxu0 0.0
  %523 = vmatprep.subr.mxu0 0.0
  %524 = vmatpush1.xpose.msra.mxu0 0.0
  %525 = vmatprep.subr.mxu0 0.0
  %526 = vmatpush1.xpose.msra.mxu0 0.0
  %527 = vmatprep.subr.mxu0 0.0
  %528 = vmatpush1.xpose.msra.mxu0 0.0
  %529 = vmatprep.subr.mxu0 0.0
  %530 = vmatpush1.xpose.msra.mxu0 0.0
  %531 = vmatprep.subr.mxu0 0.0
  %532 = vmatpush1.xpose.msra.mxu0 0.0
  %533 = vmatprep.subr.mxu0 0.0
  %534 = vmatpush1.xpose.msra.mxu0 0.0
  %535 = vmatprep.subr.mxu0 0.0
  %536 = vmatpush1.xpose.msra.mxu0 0.0
  %537 = vmatprep.subr.mxu0 0.0
  %538 = vmatpush1.xpose.msra.mxu0 0.0
  %539 = vmatprep.subr.mxu0 0.0
  %540 = vmatpush1.xpose.msra.mxu0 %v519
  %541 = vmatprep.subr.mxu0 0.0
  %542 = vmatpush1.xpose.msra.mxu0 %v517
  %543 = vmatprep.subr.mxu0 0.0
  %544 = vmatpush1.xpose.msra.mxu0 %v515
  %545 = vmatprep.subr.mxu0 0.0
  %546 = vmatpush1.xpose.msra.mxu0 %v513
  %547 = vmatprep.subr.mxu0 0.0
  %548 = vmatpush1.xpose.msra.mxu0 %v511
  %549 = vmatprep.subr.mxu0 0.0
  %550 = vmatpush1.xpose.msra.mxu0 %v509
  %551 = vmatprep.subr.mxu0 0.0
  %552 = vmatpush1.xpose.msra.mxu0 %v507
  %553 = vmatprep.subr.mxu0 0.0
  %554 = vmatpush2.xpose.msra.mxu0 0.0
  %555 = vmatprep.subr.mxu0 0.0
  %556 = vmatpush2.xpose.msra.mxu0 0.0
  %557 = vmatprep.subr.mxu0 0.0
  %558 = vmatpush2.xpose.msra.mxu0 0.0
  %559 = vmatprep.subr.mxu0 0.0
  %560 = vmatpush2.xpose.msra.mxu0 0.0
  %561 = vmatprep.subr.mxu0 0.0
  %562 = vmatpush2.xpose.msra.mxu0 0.0
  %563 = vmatprep.subr.mxu0 0.0
  %564 = vmatpush2.xpose.msra.mxu0 0.0
  %565 = vmatprep.subr.mxu0 0.0
  %566 = vmatpush2.xpose.msra.mxu0 0.0
  %567 = vmatprep.subr.mxu0 0.0
  %568 = vmatpush2.xpose.msra.mxu0 0.0
  %569 = vmatprep.subr.mxu0 0.0
  %570 = vmatpush2.xpose.msra.mxu0 0.0
  %571 = vmatprep.subr.mxu0 0.0
  %572 = vmatpush2.xpose.msra.mxu0 0.0
  %573 = vmatprep.subr.mxu0 0.0
  %574 = vmatpush2.xpose.msra.mxu0 0.0
  %575 = vmatprep.subr.mxu0 0.0
  %576 = vmatpush2.xpose.msra.mxu0 0.0
  %577 = vmatprep.subr.mxu0 0.0
  %578 = vmatpush2.xpose.msra.mxu0 0.0
  %579 = vmatprep.subr.mxu0 0.0
  %580 = vmatpush2.xpose.msra.mxu0 0.0
  %581 = vmatprep.subr.mxu0 0.0
  %582 = vmatpush2.xpose.msra.mxu0 0.0
  %583 = vmatprep.subr.mxu0 0.0
  %584 = vmatpush2.xpose.msra.mxu0 0.0
  %585 = vmatprep.mubr.f32.mxu0 0.0
  %586 = vmatmul.mubr.f32.gmra.mxu0 %v493
  %v587 = vpop.f32.mrf.mxu0
  %v588 = vadd.f32 0.0, %v587
  %v589 = vpop.f32.mrf.mxu0
  %590 = vmatprep.mubr.f32.mxu0 0.0
  %591 = vmatmul.mubr.f32.gmra.mxu0 %v495
  %v592 = vpop.f32.mrf.mxu0
  %v593 = vadd.f32 0.0, %v592
  %v594 = vpop.f32.mrf.mxu0
  %595 = vmatprep.mubr.f32.mxu0 0.0
  %596 = vmatmul.mubr.f32.gmra.mxu0 %v497
  %v597 = vpop.f32.mrf.mxu0
  %v598 = vadd.f32 0.0, %v597
  %v599 = vpop.f32.mrf.mxu0
  %600 = vmatprep.mubr.f32.mxu0 0.0
  %601 = vmatmul.mubr.f32.gmra.mxu0 %v499
  %v602 = vpop.f32.mrf.mxu0
  %v603 = vadd.f32 0.0, %v602
  %v604 = vpop.f32.mrf.mxu0
  %605 = vmatprep.mubr.f32.mxu0 0.0
  %606 = vmatmul.mubr.f32.gmra.mxu0 %v501
  %v607 = vpop.f32.mrf.mxu0
  %v608 = vadd.f32 0.0, %v607
  %v609 = vpop.f32.mrf.mxu0
  %610 = vmatprep.mubr.f32.mxu0 0.0
  %611 = vmatmul.mubr.f32.gmra.mxu0 %v503
  %v612 = vpop.f32.mrf.mxu0
  %v613 = vadd.f32 0.0, %v612
  %v614 = vpop.f32.mrf.mxu0
  %615 = vmatprep.mubr.f32.mxu0 0.0
  %616 = vmatmul.mubr.f32.gmra.mxu0 %v505
  %v617 = vpop.f32.mrf.mxu0
  %v618 = vadd.f32 0.0, %v617
  %v619 = vpop.f32.mrf.mxu0
  %620 = vdwg.mxu0
  %v621 = vmul.f32 %v588, 0.25
  %v622 = vmul.f32 %v593, 0.25
  %v623 = vmul.f32 %v598, 0.25
  %v624 = vmul.f32 %v603, 0.25
  %v625 = vmul.f32 %v608, 0.25
  %v626 = vmul.f32 %v613, 0.25
  %v627 = vmul.f32 %v618, 0.25
  %v628 = vsel %vm213, %v621, -1e+30
  %v629 = vsel %vm213, %v622, -1e+30
  %v630 = vsel %vm213, %v623, -1e+30
  %v631 = vsel %vm213, %v624, -1e+30
  %v632 = vsel %vm213, %v625, -1e+30
  %v633 = vsel %vm213, %v626, -1e+30
  %v634 = vsel %vm213, %v627, -1e+30
  %vm635 = vcmask 457728
  %v636 = vsel %vm635, %v628, -inf
  %637 = vmax.xlane.f32.xlu0 %v636
  %v638 = vpop.xlane.xlu0 %637
  %v639 = vsel %vm635, %v629, -inf
  %640 = vmax.xlane.f32.xlu0 %v639
  %v641 = vpop.xlane.xlu0 %640
  %v642 = vsel %vm635, %v630, -inf
  %643 = vmax.xlane.f32.xlu0 %v642
  %v644 = vpop.xlane.xlu0 %643
  %v645 = vsel %vm635, %v631, -inf
  %646 = vmax.xlane.f32.xlu0 %v645
  %v647 = vpop.xlane.xlu0 %646
  %v648 = vsel %vm635, %v632, -inf
  %649 = vmax.xlane.f32.xlu0 %v648
  %v650 = vpop.xlane.xlu0 %649
  %v651 = vsel %vm635, %v633, -inf
  %652 = vmax.xlane.f32.xlu0 %v651
  %v653 = vpop.xlane.xlu0 %652
  %v654 = vsel %vm635, %v634, -inf
  %655 = vmax.xlane.f32.xlu0 %v654
  %v656 = vpop.xlane.xlu0 %655
  %v657 = vsub.f32 %v628, %v638
  %v658 = vsub.f32 %v629, %v641
  %v659 = vsub.f32 %v630, %v644
  %v660 = vsub.f32 %v631, %v647
  %v661 = vsub.f32 %v632, %v650
  %v662 = vsub.f32 %v633, %v653
  %v663 = vsub.f32 %v634, %v656
  %v664 = vmul.f32 %v657, 1.442695
  %v665 = vpow.pop %v664
  %v666 = vmul.f32 %v658, 1.442695
  %v667 = vpow.pop %v666
  %v668 = vmul.f32 %v659, 1.442695
  %v669 = vpow.pop %v668
  %v670 = vmul.f32 %v660, 1.442695
  %v671 = vpow.pop %v670
  %v672 = vmul.f32 %v661, 1.442695
  %v673 = vpow.pop %v672
  %v674 = vmul.f32 %v662, 1.442695
  %v675 = vpow.pop %v674
  %v676 = vmul.f32 %v663, 1.442695
  %v677 = vpow.pop %v676
  %v678 = vsel %vm635, %v665, 0.0
  %679 = vadd.xlane.f32.xlu0 %v678
  %v680 = vpop.xlane.xlu0 %679
  %v681 = vsel %vm635, %v667, 0.0
  %682 = vadd.xlane.f32.xlu0 %v681
  %v683 = vpop.xlane.xlu0 %682
  %v684 = vsel %vm635, %v669, 0.0
  %685 = vadd.xlane.f32.xlu0 %v684
  %v686 = vpop.xlane.xlu0 %685
  %v687 = vsel %vm635, %v671, 0.0
  %688 = vadd.xlane.f32.xlu0 %v687
  %v689 = vpop.xlane.xlu0 %688
  %v690 = vsel %vm635, %v673, 0.0
  %691 = vadd.xlane.f32.xlu0 %v690
  %v692 = vpop.xlane.xlu0 %691
  %v693 = vsel %vm635, %v675, 0.0
  %694 = vadd.xlane.f32.xlu0 %v693
  %v695 = vpop.xlane.xlu0 %694
  %v696 = vsel %vm635, %v677, 0.0
  %697 = vadd.xlane.f32.xlu0 %v696
  %v698 = vpop.xlane.xlu0 %697
  %v699 = vrcp.pop %v680
  %v700 = vmul.f32 %v665, %v699
  %v701 = vrcp.pop %v683
  %v702 = vmul.f32 %v667, %v701
  %v703 = vrcp.pop %v686
  %v704 = vmul.f32 %v669, %v703
  %v705 = vrcp.pop %v689
  %v706 = vmul.f32 %v671, %v705
  %v707 = vrcp.pop %v692
  %v708 = vmul.f32 %v673, %v707
  %v709 = vrcp.pop %v695
  %v710 = vmul.f32 %v675, %v709
  %v711 = vrcp.pop %v698
  %v712 = vmul.f32 %v677, %v711
  %713 = vrot.lane.b32.xlu0 %v434, 64
  %v714 = vpop.permute.xlu0 %713
  %715 = vrot.lane.b32.xlu0 %v439, 64
  %v716 = vpop.permute.xlu0 %715
  %717 = vrot.lane.b32.xlu0 %v444, 64
  %v718 = vpop.permute.xlu0 %717
  %719 = vrot.lane.b32.xlu0 %v449, 64
  %v720 = vpop.permute.xlu0 %719
  %721 = vrot.lane.b32.xlu0 %v454, 64
  %v722 = vpop.permute.xlu0 %721
  %723 = vrot.lane.b32.xlu0 %v459, 64
  %v724 = vpop.permute.xlu0 %723
  %725 = vrot.lane.b32.xlu0 %v464, 64
  %v726 = vpop.permute.xlu0 %725
  %v735 = vsel %vm635, %v700, 0
  %v738 = vsel %vm635, %v702, 0
  %v741 = vsel %vm635, %v704, 0
  %v744 = vsel %vm635, %v706, 0
  %v747 = vsel %vm635, %v708, 0
  %v750 = vsel %vm635, %v710, 0
  %v753 = vsel %vm635, %v712, 0
  %755 = vmatprep.subr.mxu0 0.0
  %756 = vmatpush1.msra.mxu0 0.0
  %757 = vmatprep.subr.mxu0 0.0
  %758 = vmatpush1.msra.mxu0 0.0
  %759 = vmatprep.subr.mxu0 0.0
  %760 = vmatpush1.msra.mxu0 0.0
  %761 = vmatprep.subr.mxu0 0.0
  %762 = vmatpush1.msra.mxu0 0.0
  %763 = vmatprep.subr.mxu0 0.0
  %764 = vmatpush1.msra.mxu0 0.0
  %765 = vmatprep.subr.mxu0 0.0
  %766 = vmatpush1.msra.mxu0 0.0
  %767 = vmatprep.subr.mxu0 0.0
  %768 = vmatpush1.msra.mxu0 0.0
  %769 = vmatprep.subr.mxu0 0.0
  %770 = vmatpush1.msra.mxu0 0.0
  %771 = vmatprep.subr.mxu0 0.0
  %772 = vmatpush1.msra.mxu0 0.0
  %773 = vmatprep.subr.mxu0 0.0
  %774 = vmatpush1.msra.mxu0 %v726
  %775 = vmatprep.subr.mxu0 0.0
  %776 = vmatpush1.msra.mxu0 %v724
  %777 = vmatprep.subr.mxu0 0.0
  %778 = vmatpush1.msra.mxu0 %v722
  %779 = vmatprep.subr.mxu0 0.0
  %780 = vmatpush1.msra.mxu0 %v720
  %781 = vmatprep.subr.mxu0 0.0
  %782 = vmatpush1.msra.mxu0 %v718
  %783 = vmatprep.subr.mxu0 0.0
  %784 = vmatpush1.msra.mxu0 %v716
  %785 = vmatprep.subr.mxu0 0.0
  %786 = vmatpush1.msra.mxu0 %v714
  %787 = vmatprep.subr.mxu0 0.0
  %788 = vmatpush2.msra.mxu0 0.0
  %789 = vmatprep.subr.mxu0 0.0
  %790 = vmatpush2.msra.mxu0 0.0
  %791 = vmatprep.subr.mxu0 0.0
  %792 = vmatpush2.msra.mxu0 0.0
  %793 = vmatprep.subr.mxu0 0.0
  %794 = vmatpush2.msra.mxu0 0.0
  %795 = vmatprep.subr.mxu0 0.0
  %796 = vmatpush2.msra.mxu0 0.0
  %797 = vmatprep.subr.mxu0 0.0
  %798 = vmatpush2.msra.mxu0 0.0
  %799 = vmatprep.subr.mxu0 0.0
  %800 = vmatpush2.msra.mxu0 0.0
  %801 = vmatprep.subr.mxu0 0.0
  %802 = vmatpush2.msra.mxu0 0.0
  %803 = vmatprep.subr.mxu0 0.0
  %804 = vmatpush2.msra.mxu0 0.0
  %805 = vmatprep.subr.mxu0 0.0
  %806 = vmatpush2.msra.mxu0 0.0
  %807 = vmatprep.subr.mxu0 0.0
  %808 = vmatpush2.msra.mxu0 0.0
  %809 = vmatprep.subr.mxu0 0.0
  %810 = vmatpush2.msra.mxu0 0.0
  %811 = vmatprep.subr.mxu0 0.0
  %812 = vmatpush2.msra.mxu0 0.0
  %813 = vmatprep.subr.mxu0 0.0
  %814 = vmatpush2.msra.mxu0 0.0
  %815 = vmatprep.subr.mxu0 0.0
  %816 = vmatpush2.msra.mxu0 0.0
  %817 = vmatprep.subr.mxu0 0.0
  %818 = vmatpush2.msra.mxu0 0.0
  %819 = vmatprep.mubr.f32.mxu0 0.0
  %820 = vmatmul.mubr.f32.gmra.mxu0 %v735
  %v821 = vpop.f32.mrf.mxu0
  %v822 = vadd.f32 0.0, %v821
  %v823 = vpop.f32.mrf.mxu0
  %824 = vmatprep.mubr.f32.mxu0 0.0
  %825 = vmatmul.mubr.f32.gmra.mxu0 %v738
  %v826 = vpop.f32.mrf.mxu0
  %v827 = vadd.f32 0.0, %v826
  %v828 = vpop.f32.mrf.mxu0
  %829 = vmatprep.mubr.f32.mxu0 0.0
  %830 = vmatmul.mubr.f32.gmra.mxu0 %v741
  %v831 = vpop.f32.mrf.mxu0
  %v832 = vadd.f32 0.0, %v831
  %v833 = vpop.f32.mrf.mxu0
  %834 = vmatprep.mubr.f32.mxu0 0.0
  %835 = vmatmul.mubr.f32.gmra.mxu0 %v744
  %v836 = vpop.f32.mrf.mxu0
  %v837 = vadd.f32 0.0, %v836
  %v838 = vpop.f32.mrf.mxu0
  %839 = vmatprep.mubr.f32.mxu0 0.0
  %840 = vmatmul.mubr.f32.gmra.mxu0 %v747
  %v841 = vpop.f32.mrf.mxu0
  %v842 = vadd.f32 0.0, %v841
  %v843 = vpop.f32.mrf.mxu0
  %844 = vmatprep.mubr.f32.mxu0 0.0
  %845 = vmatmul.mubr.f32.gmra.mxu0 %v750
  %v846 = vpop.f32.mrf.mxu0
  %v847 = vadd.f32 0.0, %v846
  %v848 = vpop.f32.mrf.mxu0
  %849 = vmatprep.mubr.f32.mxu0 0.0
  %850 = vmatmul.mubr.f32.gmra.mxu0 %v753
  %v851 = vpop.f32.mrf.mxu0
  %v852 = vadd.f32 0.0, %v851
  %v853 = vpop.f32.mrf.mxu0
  %854 = vdwg.mxu0
  %855 = vrot.lane.b32.xlu0 %v434, 112
  %v856 = vpop.permute.xlu0 %855
  %857 = vrot.lane.b32.xlu0 %v439, 112
  %v858 = vpop.permute.xlu0 %857
  %859 = vrot.lane.b32.xlu0 %v444, 112
  %v860 = vpop.permute.xlu0 %859
  %861 = vrot.lane.b32.xlu0 %v449, 112
  %v862 = vpop.permute.xlu0 %861
  %863 = vrot.lane.b32.xlu0 %v454, 112
  %v864 = vpop.permute.xlu0 %863
  %865 = vrot.lane.b32.xlu0 %v459, 112
  %v866 = vpop.permute.xlu0 %865
  %867 = vrot.lane.b32.xlu0 %v464, 112
  %v868 = vpop.permute.xlu0 %867
  %869 = vrot.lane.b32.xlu0 %v434, 80
  %v870 = vpop.permute.xlu0 %869
  %871 = vrot.lane.b32.xlu0 %v439, 80
  %v872 = vpop.permute.xlu0 %871
  %873 = vrot.lane.b32.xlu0 %v444, 80
  %v874 = vpop.permute.xlu0 %873
  %875 = vrot.lane.b32.xlu0 %v449, 80
  %v876 = vpop.permute.xlu0 %875
  %877 = vrot.lane.b32.xlu0 %v454, 80
  %v878 = vpop.permute.xlu0 %877
  %879 = vrot.lane.b32.xlu0 %v459, 80
  %v880 = vpop.permute.xlu0 %879
  %881 = vrot.lane.b32.xlu0 %v464, 80
  %v882 = vpop.permute.xlu0 %881
  %v883 = vsel %vm492, %v856, 0
  %v885 = vsel %vm492, %v858, 0
  %v887 = vsel %vm492, %v860, 0
  %v889 = vsel %vm492, %v862, 0
  %v891 = vsel %vm492, %v864, 0
  %v893 = vsel %vm492, %v866, 0
  %v895 = vsel %vm492, %v868, 0
  %v897 = vsel %vm492, %v870, 0
  %v899 = vsel %vm492, %v872, 0
  %v901 = vsel %vm492, %v874, 0
  %v903 = vsel %vm492, %v876, 0
  %v905 = vsel %vm492, %v878, 0
  %v907 = vsel %vm492, %v880, 0
  %v909 = vsel %vm492, %v882, 0
  %911 = vmatprep.subr.mxu0 0.0
  %912 = vmatpush1.xpose.msra.mxu0 0.0
  %913 = vmatprep.subr.mxu0 0.0
  %914 = vmatpush1.xpose.msra.mxu0 0.0
  %915 = vmatprep.subr.mxu0 0.0
  %916 = vmatpush1.xpose.msra.mxu0 0.0
  %917 = vmatprep.subr.mxu0 0.0
  %918 = vmatpush1.xpose.msra.mxu0 0.0
  %919 = vmatprep.subr.mxu0 0.0
  %920 = vmatpush1.xpose.msra.mxu0 0.0
  %921 = vmatprep.subr.mxu0 0.0
  %922 = vmatpush1.xpose.msra.mxu0 0.0
  %923 = vmatprep.subr.mxu0 0.0
  %924 = vmatpush1.xpose.msra.mxu0 0.0
  %925 = vmatprep.subr.mxu0 0.0
  %926 = vmatpush1.xpose.msra.mxu0 0.0
  %927 = vmatprep.subr.mxu0 0.0
  %928 = vmatpush1.xpose.msra.mxu0 0.0
  %929 = vmatprep.subr.mxu0 0.0
  %930 = vmatpush1.xpose.msra.mxu0 %v909
  %931 = vmatprep.subr.mxu0 0.0
  %932 = vmatpush1.xpose.msra.mxu0 %v907
  %933 = vmatprep.subr.mxu0 0.0
  %934 = vmatpush1.xpose.msra.mxu0 %v905
  %935 = vmatprep.subr.mxu0 0.0
  %936 = vmatpush1.xpose.msra.mxu0 %v903
  %937 = vmatprep.subr.mxu0 0.0
  %938 = vmatpush1.xpose.msra.mxu0 %v901
  %939 = vmatprep.subr.mxu0 0.0
  %940 = vmatpush1.xpose.msra.mxu0 %v899
  %941 = vmatprep.subr.mxu0 0.0
  %942 = vmatpush1.xpose.msra.mxu0 %v897
  %943 = vmatprep.subr.mxu0 0.0
  %944 = vmatpush2.xpose.msra.mxu0 0.0
  %945 = vmatprep.subr.mxu0 0.0
  %946 = vmatpush2.xpose.msra.mxu0 0.0
  %947 = vmatprep.subr.mxu0 0.0
  %948 = vmatpush2.xpose.msra.mxu0 0.0
  %949 = vmatprep.subr.mxu0 0.0
  %950 = vmatpush2.xpose.msra.mxu0 0.0
  %951 = vmatprep.subr.mxu0 0.0
  %952 = vmatpush2.xpose.msra.mxu0 0.0
  %953 = vmatprep.subr.mxu0 0.0
  %954 = vmatpush2.xpose.msra.mxu0 0.0
  %955 = vmatprep.subr.mxu0 0.0
  %956 = vmatpush2.xpose.msra.mxu0 0.0
  %957 = vmatprep.subr.mxu0 0.0
  %958 = vmatpush2.xpose.msra.mxu0 0.0
  %959 = vmatprep.subr.mxu0 0.0
  %960 = vmatpush2.xpose.msra.mxu0 0.0
  %961 = vmatprep.subr.mxu0 0.0
  %962 = vmatpush2.xpose.msra.mxu0 0.0
  %963 = vmatprep.subr.mxu0 0.0
  %964 = vmatpush2.xpose.msra.mxu0 0.0
  %965 = vmatprep.subr.mxu0 0.0
  %966 = vmatpush2.xpose.msra.mxu0 0.0
  %967 = vmatprep.subr.mxu0 0.0
  %968 = vmatpush2.xpose.msra.mxu0 0.0
  %969 = vmatprep.subr.mxu0 0.0
  %970 = vmatpush2.xpose.msra.mxu0 0.0
  %971 = vmatprep.subr.mxu0 0.0
  %972 = vmatpush2.xpose.msra.mxu0 0.0
  %973 = vmatprep.subr.mxu0 0.0
  %974 = vmatpush2.xpose.msra.mxu0 0.0
  %975 = vmatprep.mubr.f32.mxu0 0.0
  %976 = vmatmul.mubr.f32.gmra.mxu0 %v883
  %v977 = vpop.f32.mrf.mxu0
  %v978 = vadd.f32 0.0, %v977
  %v979 = vpop.f32.mrf.mxu0
  %980 = vmatprep.mubr.f32.mxu0 0.0
  %981 = vmatmul.mubr.f32.gmra.mxu0 %v885
  %v982 = vpop.f32.mrf.mxu0
  %v983 = vadd.f32 0.0, %v982
  %v984 = vpop.f32.mrf.mxu0
  %985 = vmatprep.mubr.f32.mxu0 0.0
  %986 = vmatmul.mubr.f32.gmra.mxu0 %v887
  %v987 = vpop.f32.mrf.mxu0
  %v988 = vadd.f32 0.0, %v987
  %v989 = vpop.f32.mrf.mxu0
  %990 = vmatprep.mubr.f32.mxu0 0.0
  %991 = vmatmul.mubr.f32.gmra.mxu0 %v889
  %v992 = vpop.f32.mrf.mxu0
  %v993 = vadd.f32 0.0, %v992
  %v994 = vpop.f32.mrf.mxu0
  %995 = vmatprep.mubr.f32.mxu0 0.0
  %996 = vmatmul.mubr.f32.gmra.mxu0 %v891
  %v997 = vpop.f32.mrf.mxu0
  %v998 = vadd.f32 0.0, %v997
  %v999 = vpop.f32.mrf.mxu0
  %1000 = vmatprep.mubr.f32.mxu0 0.0
  %1001 = vmatmul.mubr.f32.gmra.mxu0 %v893
  %v1002 = vpop.f32.mrf.mxu0
  %v1003 = vadd.f32 0.0, %v1002
  %v1004 = vpop.f32.mrf.mxu0
  %1005 = vmatprep.mubr.f32.mxu0 0.0
  %1006 = vmatmul.mubr.f32.gmra.mxu0 %v895
  %v1007 = vpop.f32.mrf.mxu0
  %v1008 = vadd.f32 0.0, %v1007
  %v1009 = vpop.f32.mrf.mxu0
  %1010 = vdwg.mxu0
  %v1011 = vmul.f32 %v978, 0.25
  %v1012 = vmul.f32 %v983, 0.25
  %v1013 = vmul.f32 %v988, 0.25
  %v1014 = vmul.f32 %v993, 0.25
  %v1015 = vmul.f32 %v998, 0.25
  %v1016 = vmul.f32 %v1003, 0.25
  %v1017 = vmul.f32 %v1008, 0.25
  %v1018 = vsel %vm213, %v1011, -1e+30
  %v1019 = vsel %vm213, %v1012, -1e+30
  %v1020 = vsel %vm213, %v1013, -1e+30
  %v1021 = vsel %vm213, %v1014, -1e+30
  %v1022 = vsel %vm213, %v1015, -1e+30
  %v1023 = vsel %vm213, %v1016, -1e+30
  %v1024 = vsel %vm213, %v1017, -1e+30
  %v1025 = vsel %vm635, %v1018, -inf
  %1026 = vmax.xlane.f32.xlu0 %v1025
  %v1027 = vpop.xlane.xlu0 %1026
  %v1028 = vsel %vm635, %v1019, -inf
  %1029 = vmax.xlane.f32.xlu0 %v1028
  %v1030 = vpop.xlane.xlu0 %1029
  %v1031 = vsel %vm635, %v1020, -inf
  %1032 = vmax.xlane.f32.xlu0 %v1031
  %v1033 = vpop.xlane.xlu0 %1032
  %v1034 = vsel %vm635, %v1021, -inf
  %1035 = vmax.xlane.f32.xlu0 %v1034
  %v1036 = vpop.xlane.xlu0 %1035
  %v1037 = vsel %vm635, %v1022, -inf
  %1038 = vmax.xlane.f32.xlu0 %v1037
  %v1039 = vpop.xlane.xlu0 %1038
  %v1040 = vsel %vm635, %v1023, -inf
  %1041 = vmax.xlane.f32.xlu0 %v1040
  %v1042 = vpop.xlane.xlu0 %1041
  %v1043 = vsel %vm635, %v1024, -inf
  %1044 = vmax.xlane.f32.xlu0 %v1043
  %v1045 = vpop.xlane.xlu0 %1044
  %v1046 = vsub.f32 %v1018, %v1027
  %v1047 = vsub.f32 %v1019, %v1030
  %v1048 = vsub.f32 %v1020, %v1033
  %v1049 = vsub.f32 %v1021, %v1036
  %v1050 = vsub.f32 %v1022, %v1039
  %v1051 = vsub.f32 %v1023, %v1042
  %v1052 = vsub.f32 %v1024, %v1045
  %v1053 = vmul.f32 %v1046, 1.442695
  %v1054 = vpow.pop %v1053
  %v1055 = vmul.f32 %v1047, 1.442695
  %v1056 = vpow.pop %v1055
  %v1057 = vmul.f32 %v1048, 1.442695
  %v1058 = vpow.pop %v1057
  %v1059 = vmul.f32 %v1049, 1.442695
  %v1060 = vpow.pop %v1059
  %v1061 = vmul.f32 %v1050, 1.442695
  %v1062 = vpow.pop %v1061
  %v1063 = vmul.f32 %v1051, 1.442695
  %v1064 = vpow.pop %v1063
  %v1065 = vmul.f32 %v1052, 1.442695
  %v1066 = vpow.pop %v1065
  %v1067 = vsel %vm635, %v1054, 0.0
  %1068 = vadd.xlane.f32.xlu0 %v1067
  %v1069 = vpop.xlane.xlu0 %1068
  %v1070 = vsel %vm635, %v1056, 0.0
  %1071 = vadd.xlane.f32.xlu0 %v1070
  %v1072 = vpop.xlane.xlu0 %1071
  %v1073 = vsel %vm635, %v1058, 0.0
  %1074 = vadd.xlane.f32.xlu0 %v1073
  %v1075 = vpop.xlane.xlu0 %1074
  %v1076 = vsel %vm635, %v1060, 0.0
  %1077 = vadd.xlane.f32.xlu0 %v1076
  %v1078 = vpop.xlane.xlu0 %1077
  %v1079 = vsel %vm635, %v1062, 0.0
  %1080 = vadd.xlane.f32.xlu0 %v1079
  %v1081 = vpop.xlane.xlu0 %1080
  %v1082 = vsel %vm635, %v1064, 0.0
  %1083 = vadd.xlane.f32.xlu0 %v1082
  %v1084 = vpop.xlane.xlu0 %1083
  %v1085 = vsel %vm635, %v1066, 0.0
  %1086 = vadd.xlane.f32.xlu0 %v1085
  %v1087 = vpop.xlane.xlu0 %1086
  %v1088 = vrcp.pop %v1069
  %v1089 = vmul.f32 %v1054, %v1088
  %v1090 = vrcp.pop %v1072
  %v1091 = vmul.f32 %v1056, %v1090
  %v1092 = vrcp.pop %v1075
  %v1093 = vmul.f32 %v1058, %v1092
  %v1094 = vrcp.pop %v1078
  %v1095 = vmul.f32 %v1060, %v1094
  %v1096 = vrcp.pop %v1081
  %v1097 = vmul.f32 %v1062, %v1096
  %v1098 = vrcp.pop %v1084
  %v1099 = vmul.f32 %v1064, %v1098
  %v1100 = vrcp.pop %v1087
  %v1101 = vmul.f32 %v1066, %v1100
  %1102 = vrot.lane.b32.xlu0 %v434, 48
  %v1103 = vpop.permute.xlu0 %1102
  %1104 = vrot.lane.b32.xlu0 %v439, 48
  %v1105 = vpop.permute.xlu0 %1104
  %1106 = vrot.lane.b32.xlu0 %v444, 48
  %v1107 = vpop.permute.xlu0 %1106
  %1108 = vrot.lane.b32.xlu0 %v449, 48
  %v1109 = vpop.permute.xlu0 %1108
  %1110 = vrot.lane.b32.xlu0 %v454, 48
  %v1111 = vpop.permute.xlu0 %1110
  %1112 = vrot.lane.b32.xlu0 %v459, 48
  %v1113 = vpop.permute.xlu0 %1112
  %1114 = vrot.lane.b32.xlu0 %v464, 48
  %v1115 = vpop.permute.xlu0 %1114
  %v1124 = vsel %vm635, %v1089, 0
  %v1127 = vsel %vm635, %v1091, 0
  %v1130 = vsel %vm635, %v1093, 0
  %v1133 = vsel %vm635, %v1095, 0
  %v1136 = vsel %vm635, %v1097, 0
  %v1139 = vsel %vm635, %v1099, 0
  %v1142 = vsel %vm635, %v1101, 0
  %1144 = vmatprep.subr.mxu0 0.0
  %1145 = vmatpush1.msra.mxu0 0.0
  %1146 = vmatprep.subr.mxu0 0.0
  %1147 = vmatpush1.msra.mxu0 0.0
  %1148 = vmatprep.subr.mxu0 0.0
  %1149 = vmatpush1.msra.mxu0 0.0
  %1150 = vmatprep.subr.mxu0 0.0
  %1151 = vmatpush1.msra.mxu0 0.0
  %1152 = vmatprep.subr.mxu0 0.0
  %1153 = vmatpush1.msra.mxu0 0.0
  %1154 = vmatprep.subr.mxu0 0.0
  %1155 = vmatpush1.msra.mxu0 0.0
  %1156 = vmatprep.subr.mxu0 0.0
  %1157 = vmatpush1.msra.mxu0 0.0
  %1158 = vmatprep.subr.mxu0 0.0
  %1159 = vmatpush1.msra.mxu0 0.0
  %1160 = vmatprep.subr.mxu0 0.0
  %1161 = vmatpush1.msra.mxu0 0.0
  %1162 = vmatprep.subr.mxu0 0.0
  %1163 = vmatpush1.msra.mxu0 %v1115
  %1164 = vmatprep.subr.mxu0 0.0
  %1165 = vmatpush1.msra.mxu0 %v1113
  %1166 = vmatprep.subr.mxu0 0.0
  %1167 = vmatpush1.msra.mxu0 %v1111
  %1168 = vmatprep.subr.mxu0 0.0
  %1169 = vmatpush1.msra.mxu0 %v1109
  %1170 = vmatprep.subr.mxu0 0.0
  %1171 = vmatpush1.msra.mxu0 %v1107
  %1172 = vmatprep.subr.mxu0 0.0
  %1173 = vmatpush1.msra.mxu0 %v1105
  %1174 = vmatprep.subr.mxu0 0.0
  %1175 = vmatpush1.msra.mxu0 %v1103
  %1176 = vmatprep.subr.mxu0 0.0
  %1177 = vmatpush2.msra.mxu0 0.0
  %1178 = vmatprep.subr.mxu0 0.0
  %1179 = vmatpush2.msra.mxu0 0.0
  %1180 = vmatprep.subr.mxu0 0.0
  %1181 = vmatpush2.msra.mxu0 0.0
  %1182 = vmatprep.subr.mxu0 0.0
  %1183 = vmatpush2.msra.mxu0 0.0
  %1184 = vmatprep.subr.mxu0 0.0
  %1185 = vmatpush2.msra.mxu0 0.0
  %1186 = vmatprep.subr.mxu0 0.0
  %1187 = vmatpush2.msra.mxu0 0.0
  %1188 = vmatprep.subr.mxu0 0.0
  %1189 = vmatpush2.msra.mxu0 0.0
  %1190 = vmatprep.subr.mxu0 0.0
  %1191 = vmatpush2.msra.mxu0 0.0
  %1192 = vmatprep.subr.mxu0 0.0
  %1193 = vmatpush2.msra.mxu0 0.0
  %1194 = vmatprep.subr.mxu0 0.0
  %1195 = vmatpush2.msra.mxu0 0.0
  %1196 = vmatprep.subr.mxu0 0.0
  %1197 = vmatpush2.msra.mxu0 0.0
  %1198 = vmatprep.subr.mxu0 0.0
  %1199 = vmatpush2.msra.mxu0 0.0
  %1200 = vmatprep.subr.mxu0 0.0
  %1201 = vmatpush2.msra.mxu0 0.0
  %1202 = vmatprep.subr.mxu0 0.0
  %1203 = vmatpush2.msra.mxu0 0.0
  %1204 = vmatprep.subr.mxu0 0.0
  %1205 = vmatpush2.msra.mxu0 0.0
  %1206 = vmatprep.subr.mxu0 0.0
  %1207 = vmatpush2.msra.mxu0 0.0
  %1208 = vmatprep.mubr.f32.mxu0 0.0
  %1209 = vmatmul.mubr.f32.gmra.mxu0 %v1124
  %v1210 = vpop.f32.mrf.mxu0
  %v1211 = vadd.f32 0.0, %v1210
  %v1212 = vpop.f32.mrf.mxu0
  %1213 = vmatprep.mubr.f32.mxu0 0.0
  %1214 = vmatmul.mubr.f32.gmra.mxu0 %v1127
  %v1215 = vpop.f32.mrf.mxu0
  %v1216 = vadd.f32 0.0, %v1215
  %v1217 = vpop.f32.mrf.mxu0
  %1218 = vmatprep.mubr.f32.mxu0 0.0
  %1219 = vmatmul.mubr.f32.gmra.mxu0 %v1130
  %v1220 = vpop.f32.mrf.mxu0
  %v1221 = vadd.f32 0.0, %v1220
  %v1222 = vpop.f32.mrf.mxu0
  %1223 = vmatprep.mubr.f32.mxu0 0.0
  %1224 = vmatmul.mubr.f32.gmra.mxu0 %v1133
  %v1225 = vpop.f32.mrf.mxu0
  %v1226 = vadd.f32 0.0, %v1225
  %v1227 = vpop.f32.mrf.mxu0
  %1228 = vmatprep.mubr.f32.mxu0 0.0
  %1229 = vmatmul.mubr.f32.gmra.mxu0 %v1136
  %v1230 = vpop.f32.mrf.mxu0
  %v1231 = vadd.f32 0.0, %v1230
  %v1232 = vpop.f32.mrf.mxu0
  %1233 = vmatprep.mubr.f32.mxu0 0.0
  %1234 = vmatmul.mubr.f32.gmra.mxu0 %v1139
  %v1235 = vpop.f32.mrf.mxu0
  %v1236 = vadd.f32 0.0, %v1235
  %v1237 = vpop.f32.mrf.mxu0
  %1238 = vmatprep.mubr.f32.mxu0 0.0
  %1239 = vmatmul.mubr.f32.gmra.mxu0 %v1142
  %v1240 = vpop.f32.mrf.mxu0
  %v1241 = vadd.f32 0.0, %v1240
  %v1242 = vpop.f32.mrf.mxu0
  %1243 = vdwg.mxu0
  %v1245 = vsel %vm492, %v1211, 0
  %v1248 = vsel %vm492, %v1216, 0
  %v1251 = vsel %vm492, %v1221, 0
  %v1254 = vsel %vm492, %v1226, 0
  %v1257 = vsel %vm492, %v1231, 0
  %v1260 = vsel %vm492, %v1236, 0
  %v1263 = vsel %vm492, %v1241, 0
  %1265 = vmatprep.subr.mxu0 0.0
  %1266 = vmatpush1.msra.mxu0 0.0
  %1267 = vmatprep.subr.mxu0 0.0
  %1268 = vmatpush1.msra.mxu0 0.0
  %1269 = vmatprep.subr.mxu0 0.0
  %1270 = vmatpush1.msra.mxu0 0.0
  %1271 = vmatprep.subr.mxu0 0.0
  %1272 = vmatpush1.msra.mxu0 0.0
  %1273 = vmatprep.subr.mxu0 0.0
  %1274 = vmatpush1.msra.mxu0 0.0
  %1275 = vmatprep.subr.mxu0 0.0
  %1276 = vmatpush1.msra.mxu0 0.0
  %1277 = vmatprep.subr.mxu0 0.0
  %1278 = vmatpush1.msra.mxu0 0.0
  %1279 = vmatprep.subr.mxu0 0.0
  %1280 = vmatpush1.msra.mxu0 0.0
  %1281 = vmatprep.subr.mxu0 0.0
  %1282 = vmatpush1.msra.mxu0 0.0
  %1283 = vmatprep.subr.mxu0 0.0
  %1284 = vmatpush1.msra.mxu0 0.0
  %1285 = vmatprep.subr.mxu0 0.0
  %1286 = vmatpush1.msra.mxu0 0.0
  %1287 = vmatprep.subr.mxu0 0.0
  %1288 = vmatpush1.msra.mxu0 0.0
  %1289 = vmatprep.subr.mxu0 0.0
  %1290 = vmatpush1.msra.mxu0 0.0
  %1291 = vmatprep.subr.mxu0 0.0
  %1292 = vmatpush1.msra.mxu0 0.0
  %1293 = vmatprep.subr.mxu0 0.0
  %1294 = vmatpush1.msra.mxu0 %v470
  %1295 = vmatprep.subr.mxu0 0.0
  %1296 = vmatpush1.msra.mxu0 %v469
  %1297 = vmatprep.subr.mxu0 0.0
  %1298 = vmatpush2.msra.mxu0 0.0
  %1299 = vmatprep.subr.mxu0 0.0
  %1300 = vmatpush2.msra.mxu0 0.0
  %1301 = vmatprep.subr.mxu0 0.0
  %1302 = vmatpush2.msra.mxu0 0.0
  %1303 = vmatprep.subr.mxu0 0.0
  %1304 = vmatpush2.msra.mxu0 0.0
  %1305 = vmatprep.subr.mxu0 0.0
  %1306 = vmatpush2.msra.mxu0 0.0
  %1307 = vmatprep.subr.mxu0 0.0
  %1308 = vmatpush2.msra.mxu0 0.0
  %1309 = vmatprep.subr.mxu0 0.0
  %1310 = vmatpush2.msra.mxu0 0.0
  %1311 = vmatprep.subr.mxu0 0.0
  %1312 = vmatpush2.msra.mxu0 0.0
  %1313 = vmatprep.subr.mxu0 0.0
  %1314 = vmatpush2.msra.mxu0 0.0
  %1315 = vmatprep.subr.mxu0 0.0
  %1316 = vmatpush2.msra.mxu0 0.0
  %1317 = vmatprep.subr.mxu0 0.0
  %1318 = vmatpush2.msra.mxu0 0.0
  %1319 = vmatprep.subr.mxu0 0.0
  %1320 = vmatpush2.msra.mxu0 0.0
  %1321 = vmatprep.subr.mxu0 0.0
  %1322 = vmatpush2.msra.mxu0 0.0
  %1323 = vmatprep.subr.mxu0 0.0
  %1324 = vmatpush2.msra.mxu0 0.0
  %1325 = vmatprep.subr.mxu0 0.0
  %1326 = vmatpush2.msra.mxu0 0.0
  %1327 = vmatprep.subr.mxu0 0.0
  %1328 = vmatpush2.msra.mxu0 0.0
  %1329 = vmatprep.mubr.f32.mxu0 0.0
  %1330 = vmatmul.mubr.f32.gmra.mxu0 %v1245
  %v1331 = vpop.f32.mrf.mxu0
  %v1332 = vadd.f32 0.0, %v1331
  %v1333 = vpop.f32.mrf.mxu0
  %1334 = vmatprep.mubr.f32.mxu0 0.0
  %1335 = vmatmul.mubr.f32.gmra.mxu0 %v1248
  %v1336 = vpop.f32.mrf.mxu0
  %v1337 = vadd.f32 0.0, %v1336
  %v1338 = vpop.f32.mrf.mxu0
  %1339 = vmatprep.mubr.f32.mxu0 0.0
  %1340 = vmatmul.mubr.f32.gmra.mxu0 %v1251
  %v1341 = vpop.f32.mrf.mxu0
  %v1342 = vadd.f32 0.0, %v1341
  %v1343 = vpop.f32.mrf.mxu0
  %1344 = vmatprep.mubr.f32.mxu0 0.0
  %1345 = vmatmul.mubr.f32.gmra.mxu0 %v1254
  %v1346 = vpop.f32.mrf.mxu0
  %v1347 = vadd.f32 0.0, %v1346
  %v1348 = vpop.f32.mrf.mxu0
  %1349 = vmatprep.mubr.f32.mxu0 0.0
  %1350 = vmatmul.mubr.f32.gmra.mxu0 %v1257
  %v1351 = vpop.f32.mrf.mxu0
  %v1352 = vadd.f32 0.0, %v1351
  %v1353 = vpop.f32.mrf.mxu0
  %1354 = vmatprep.mubr.f32.mxu0 0.0
  %1355 = vmatmul.mubr.f32.gmra.mxu0 %v1260
  %v1356 = vpop.f32.mrf.mxu0
  %v1357 = vadd.f32 0.0, %v1356
  %v1358 = vpop.f32.mrf.mxu0
  %1359 = vmatprep.mubr.f32.mxu0 0.0
  %1360 = vmatmul.mubr.f32.gmra.mxu0 %v1263
  %v1361 = vpop.f32.mrf.mxu0
  %v1362 = vadd.f32 0.0, %v1361
  %v1363 = vpop.f32.mrf.mxu0
  %1364 = vdwg.mxu0
  %v1366 = vsel %vm492, %v822, 0
  %v1369 = vsel %vm492, %v827, 0
  %v1372 = vsel %vm492, %v832, 0
  %v1375 = vsel %vm492, %v837, 0
  %v1378 = vsel %vm492, %v842, 0
  %v1381 = vsel %vm492, %v847, 0
  %v1384 = vsel %vm492, %v852, 0
  %1386 = vmatprep.subr.mxu0 0.0
  %1387 = vmatpush1.msra.mxu0 0.0
  %1388 = vmatprep.subr.mxu0 0.0
  %1389 = vmatpush1.msra.mxu0 0.0
  %1390 = vmatprep.subr.mxu0 0.0
  %1391 = vmatpush1.msra.mxu0 0.0
  %1392 = vmatprep.subr.mxu0 0.0
  %1393 = vmatpush1.msra.mxu0 0.0
  %1394 = vmatprep.subr.mxu0 0.0
  %1395 = vmatpush1.msra.mxu0 0.0
  %1396 = vmatprep.subr.mxu0 0.0
  %1397 = vmatpush1.msra.mxu0 0.0
  %1398 = vmatprep.subr.mxu0 0.0
  %1399 = vmatpush1.msra.mxu0 0.0
  %1400 = vmatprep.subr.mxu0 0.0
  %1401 = vmatpush1.msra.mxu0 0.0
  %1402 = vmatprep.subr.mxu0 0.0
  %1403 = vmatpush1.msra.mxu0 0.0
  %1404 = vmatprep.subr.mxu0 0.0
  %1405 = vmatpush1.msra.mxu0 0.0
  %1406 = vmatprep.subr.mxu0 0.0
  %1407 = vmatpush1.msra.mxu0 0.0
  %1408 = vmatprep.subr.mxu0 0.0
  %1409 = vmatpush1.msra.mxu0 0.0
  %1410 = vmatprep.subr.mxu0 0.0
  %1411 = vmatpush1.msra.mxu0 0.0
  %1412 = vmatprep.subr.mxu0 0.0
  %1413 = vmatpush1.msra.mxu0 0.0
  %1414 = vmatprep.subr.mxu0 0.0
  %1415 = vmatpush1.msra.mxu0 %v468
  %1416 = vmatprep.subr.mxu0 0.0
  %1417 = vmatpush1.msra.mxu0 %v467
  %1418 = vmatprep.subr.mxu0 0.0
  %1419 = vmatpush2.msra.mxu0 0.0
  %1420 = vmatprep.subr.mxu0 0.0
  %1421 = vmatpush2.msra.mxu0 0.0
  %1422 = vmatprep.subr.mxu0 0.0
  %1423 = vmatpush2.msra.mxu0 0.0
  %1424 = vmatprep.subr.mxu0 0.0
  %1425 = vmatpush2.msra.mxu0 0.0
  %1426 = vmatprep.subr.mxu0 0.0
  %1427 = vmatpush2.msra.mxu0 0.0
  %1428 = vmatprep.subr.mxu0 0.0
  %1429 = vmatpush2.msra.mxu0 0.0
  %1430 = vmatprep.subr.mxu0 0.0
  %1431 = vmatpush2.msra.mxu0 0.0
  %1432 = vmatprep.subr.mxu0 0.0
  %1433 = vmatpush2.msra.mxu0 0.0
  %1434 = vmatprep.subr.mxu0 0.0
  %1435 = vmatpush2.msra.mxu0 0.0
  %1436 = vmatprep.subr.mxu0 0.0
  %1437 = vmatpush2.msra.mxu0 0.0
  %1438 = vmatprep.subr.mxu0 0.0
  %1439 = vmatpush2.msra.mxu0 0.0
  %1440 = vmatprep.subr.mxu0 0.0
  %1441 = vmatpush2.msra.mxu0 0.0
  %1442 = vmatprep.subr.mxu0 0.0
  %1443 = vmatpush2.msra.mxu0 0.0
  %1444 = vmatprep.subr.mxu0 0.0
  %1445 = vmatpush2.msra.mxu0 0.0
  %1446 = vmatprep.subr.mxu0 0.0
  %1447 = vmatpush2.msra.mxu0 0.0
  %1448 = vmatprep.subr.mxu0 0.0
  %1449 = vmatpush2.msra.mxu0 0.0
  %1450 = vmatprep.mubr.f32.mxu0 0.0
  %1451 = vmatmul.mubr.f32.gmra.mxu0 %v1366
  %v1452 = vpop.f32.mrf.mxu0
  %v1453 = vadd.f32 %v1332, %v1452
  %v1454 = vpop.f32.mrf.mxu0
  %1455 = vmatprep.mubr.f32.mxu0 0.0
  %1456 = vmatmul.mubr.f32.gmra.mxu0 %v1369
  %v1457 = vpop.f32.mrf.mxu0
  %v1458 = vadd.f32 %v1337, %v1457
  %v1459 = vpop.f32.mrf.mxu0
  %1460 = vmatprep.mubr.f32.mxu0 0.0
  %1461 = vmatmul.mubr.f32.gmra.mxu0 %v1372
  %v1462 = vpop.f32.mrf.mxu0
  %v1463 = vadd.f32 %v1342, %v1462
  %v1464 = vpop.f32.mrf.mxu0
  %1465 = vmatprep.mubr.f32.mxu0 0.0
  %1466 = vmatmul.mubr.f32.gmra.mxu0 %v1375
  %v1467 = vpop.f32.mrf.mxu0
  %v1468 = vadd.f32 %v1347, %v1467
  %v1469 = vpop.f32.mrf.mxu0
  %1470 = vmatprep.mubr.f32.mxu0 0.0
  %1471 = vmatmul.mubr.f32.gmra.mxu0 %v1378
  %v1472 = vpop.f32.mrf.mxu0
  %v1473 = vadd.f32 %v1352, %v1472
  %v1474 = vpop.f32.mrf.mxu0
  %1475 = vmatprep.mubr.f32.mxu0 0.0
  %1476 = vmatmul.mubr.f32.gmra.mxu0 %v1381
  %v1477 = vpop.f32.mrf.mxu0
  %v1478 = vadd.f32 %v1357, %v1477
  %v1479 = vpop.f32.mrf.mxu0
  %1480 = vmatprep.mubr.f32.mxu0 0.0
  %1481 = vmatmul.mubr.f32.gmra.mxu0 %v1384
  %v1482 = vpop.f32.mrf.mxu0
  %v1483 = vadd.f32 %v1362, %v1482
  %v1484 = vpop.f32.mrf.mxu0
  %1485 = vdwg.mxu0
  %v1486 = vld [vmem:[%s8] sm:$0x1]
  %v1488 = vlaneseq
  %v1489 = vshrl.u32 %v1488, 7
  %v1490 = vsub.s32 0, %v1489
  %v1491 = vrot.slane %v1486, %v1490
  %v1493 = vadd.f32 %v1453, %v1491
  %v1494 = vadd.f32 %v1458, %v1491
  %v1495 = vadd.f32 %v1463, %v1491
  %v1496 = vadd.f32 %v1468, %v1491
  %v1497 = vadd.f32 %v1473, %v1491
  %v1498 = vadd.f32 %v1478, %v1491
  %v1499 = vadd.f32 %v1483, %v1491
  %v1500 = vld [vmem:[%s9] sm:$0x1]
  %v1502 = vlaneseq
  %v1503 = vshrl.u32 %v1502, 7
  %v1504 = vsub.s32 0, %v1503
  %v1505 = vrot.slane %v1500, %v1504
  %v1507 = vmul.f32 %v1505, %v1493
  %v1508 = vmul.f32 %v1505, %v1494
  %v1509 = vmul.f32 %v1505, %v1495
  %v1510 = vmul.f32 %v1505, %v1496
  %v1511 = vmul.f32 %v1505, %v1497
  %v1512 = vmul.f32 %v1505, %v1498
  %v1513 = vmul.f32 %v1505, %v1499
  %v1514 = vadd.f32 %v204, %v1507
  %v1515 = vadd.f32 %v205, %v1508
  %v1516 = vadd.f32 %v206, %v1509
  %v1517 = vadd.f32 %v207, %v1510
  %v1518 = vadd.f32 %v208, %v1511
  %v1519 = vadd.f32 %v209, %v1512
  %v1520 = vadd.f32 %v210, %v1513
  %v1521 = vld [vmem:[%s10] sm:$0x1]
  %v1522 = vld [vmem:[%s11] sm:$0x1]
  %v1523 = vsel %vm216, %v1514, 0.0
  %1524 = vadd.xlane.f32.xlu0 %v1523
  %v1525 = vpop.xlane.xlu0 %1524
  %v1526 = vsel %vm216, %v1515, 0.0
  %1527 = vadd.xlane.f32.xlu0 %v1526
  %v1528 = vpop.xlane.xlu0 %1527
  %v1529 = vsel %vm216, %v1516, 0.0
  %1530 = vadd.xlane.f32.xlu0 %v1529
  %v1531 = vpop.xlane.xlu0 %1530
  %v1532 = vsel %vm216, %v1517, 0.0
  %1533 = vadd.xlane.f32.xlu0 %v1532
  %v1534 = vpop.xlane.xlu0 %1533
  %v1535 = vsel %vm216, %v1518, 0.0
  %1536 = vadd.xlane.f32.xlu0 %v1535
  %v1537 = vpop.xlane.xlu0 %1536
  %v1538 = vsel %vm216, %v1519, 0.0
  %1539 = vadd.xlane.f32.xlu0 %v1538
  %v1540 = vpop.xlane.xlu0 %1539
  %v1541 = vsel %vm216, %v1520, 0.0
  %1542 = vadd.xlane.f32.xlu0 %v1541
  %v1543 = vpop.xlane.xlu0 %1542
  %v1544 = vmul.f32 %v1525, %v238
  %v1545 = vmul.f32 %v1528, %v238
  %v1546 = vmul.f32 %v1531, %v238
  %v1547 = vmul.f32 %v1534, %v238
  %v1548 = vmul.f32 %v1537, %v238
  %v1549 = vmul.f32 %v1540, %v238
  %v1550 = vmul.f32 %v1543, %v238
  %v1551 = vsub.f32 %v1514, %v1544
  %v1552 = vsub.f32 %v1515, %v1545
  %v1553 = vsub.f32 %v1516, %v1546
  %v1554 = vsub.f32 %v1517, %v1547
  %v1555 = vsub.f32 %v1518, %v1548
  %v1556 = vsub.f32 %v1519, %v1549
  %v1557 = vsub.f32 %v1520, %v1550
  %v1558 = vmul.f32 %v1551, %v1551
  %v1559 = vmul.f32 %v1552, %v1552
  %v1560 = vmul.f32 %v1553, %v1553
  %v1561 = vmul.f32 %v1554, %v1554
  %v1562 = vmul.f32 %v1555, %v1555
  %v1563 = vmul.f32 %v1556, %v1556
  %v1564 = vmul.f32 %v1557, %v1557
  %v1565 = vsel %vm216, %v1558, 0.0
  %1566 = vadd.xlane.f32.xlu0 %v1565
  %v1567 = vpop.xlane.xlu0 %1566
  %v1568 = vsel %vm216, %v1559, 0.0
  %1569 = vadd.xlane.f32.xlu0 %v1568
  %v1570 = vpop.xlane.xlu0 %1569
  %v1571 = vsel %vm216, %v1560, 0.0
  %1572 = vadd.xlane.f32.xlu0 %v1571
  %v1573 = vpop.xlane.xlu0 %1572
  %v1574 = vsel %vm216, %v1561, 0.0
  %1575 = vadd.xlane.f32.xlu0 %v1574
  %v1576 = vpop.xlane.xlu0 %1575
  %v1577 = vsel %vm216, %v1562, 0.0
  %1578 = vadd.xlane.f32.xlu0 %v1577
  %v1579 = vpop.xlane.xlu0 %1578
  %v1580 = vsel %vm216, %v1563, 0.0
  %1581 = vadd.xlane.f32.xlu0 %v1580
  %v1582 = vpop.xlane.xlu0 %1581
  %v1583 = vsel %vm216, %v1564, 0.0
  %1584 = vadd.xlane.f32.xlu0 %v1583
  %v1585 = vpop.xlane.xlu0 %1584
  %v1586 = vmul.f32 %v1567, %v238
  %v1587 = vmul.f32 %v1570, %v238
  %v1588 = vmul.f32 %v1573, %v238
  %v1589 = vmul.f32 %v1576, %v238
  %v1590 = vmul.f32 %v1579, %v238
  %v1591 = vmul.f32 %v1582, %v238
  %v1592 = vmul.f32 %v1585, %v238
  %v1593 = vadd.f32 %v1586, 1e-06
  %v1594 = vadd.f32 %v1587, 1e-06
  %v1595 = vadd.f32 %v1588, 1e-06
  %v1596 = vadd.f32 %v1589, 1e-06
  %v1597 = vadd.f32 %v1590, 1e-06
  %v1598 = vadd.f32 %v1591, 1e-06
  %v1599 = vadd.f32 %v1592, 1e-06
  %v1600 = vrsqrt.pop %v1593
  %v1601 = vrsqrt.pop %v1594
  %v1602 = vrsqrt.pop %v1595
  %v1603 = vrsqrt.pop %v1596
  %v1604 = vrsqrt.pop %v1597
  %v1605 = vrsqrt.pop %v1598
  %v1606 = vrsqrt.pop %v1599
  %v1607 = vmul.f32 %v1551, %v1600
  %v1608 = vmul.f32 %v1552, %v1601
  %v1609 = vmul.f32 %v1553, %v1602
  %v1610 = vmul.f32 %v1554, %v1603
  %v1611 = vmul.f32 %v1555, %v1604
  %v1612 = vmul.f32 %v1556, %v1605
  %v1613 = vmul.f32 %v1557, %v1606
  %v1615 = vlaneseq
  %v1616 = vshrl.u32 %v1615, 7
  %v1617 = vsub.s32 0, %v1616
  %v1618 = vrot.slane %v1521, %v1617
  %v1620 = vmul.f32 %v1607, %v1618
  %v1621 = vmul.f32 %v1608, %v1618
  %v1622 = vmul.f32 %v1609, %v1618
  %v1623 = vmul.f32 %v1610, %v1618
  %v1624 = vmul.f32 %v1611, %v1618
  %v1625 = vmul.f32 %v1612, %v1618
  %v1626 = vmul.f32 %v1613, %v1618
  %v1628 = vlaneseq
  %v1629 = vshrl.u32 %v1628, 7
  %v1630 = vsub.s32 0, %v1629
  %v1631 = vrot.slane %v1522, %v1630
  %v1633 = vadd.f32 %v1620, %v1631
  %v1634 = vadd.f32 %v1621, %v1631
  %v1635 = vadd.f32 %v1622, %v1631
  %v1636 = vadd.f32 %v1623, %v1631
  %v1637 = vadd.f32 %v1624, %v1631
  %v1638 = vadd.f32 %v1625, %v1631
  %v1639 = vadd.f32 %v1626, %v1631
  %v1640 = vld [vmem:[%s12] sm:$0xff]
  %v1641 = vld [vmem:[%s12 + $0x8] sm:$0xff]
  %v1642 = vld [vmem:[%s12 + $0x10] sm:$0xff]
  %v1643 = vld [vmem:[%s12 + $0x18] sm:$0xff]
  %v1644 = vld [vmem:[%s13] sm:$0x1]
  %v1646 = vlaneseq
  %v1647 = vshrl.u32 %v1646, 7
  %v1648 = vsub.s32 0, %v1647
  %v1649 = vrot.slane %v1644, %v1648
  %v1652 = vsel %vm216, %v1633, 0
  %v1655 = vsel %vm216, %v1634, 0
  %v1658 = vsel %vm216, %v1635, 0
  %v1661 = vsel %vm216, %v1636, 0
  %v1664 = vsel %vm216, %v1637, 0
  %v1667 = vsel %vm216, %v1638, 0
  %v1670 = vsel %vm216, %v1639, 0
  %1672 = vmatprep.subr.mxu0 0.0
  %1673 = vmatpush1.msra.mxu0 0.0
  %1674 = vmatprep.subr.mxu0 0.0
  %1675 = vmatpush1.msra.mxu0 0.0
  %1676 = vmatprep.subr.mxu0 0.0
  %1677 = vmatpush1.msra.mxu0 0.0
  %1678 = vmatprep.subr.mxu0 0.0
  %1679 = vmatpush1.msra.mxu0 0.0
  %1680 = vmatprep.subr.mxu0 0.0
  %1681 = vmatpush1.msra.mxu0 0.0
  %1682 = vmatprep.subr.mxu0 0.0
  %1683 = vmatpush1.msra.mxu0 0.0
  %1684 = vmatprep.subr.mxu0 0.0
  %1685 = vmatpush1.msra.mxu0 0.0
  %1686 = vmatprep.subr.mxu0 0.0
  %1687 = vmatpush1.msra.mxu0 0.0
  %1688 = vmatprep.subr.mxu0 0.0
  %1689 = vmatpush1.msra.mxu0 0.0
  %1690 = vmatprep.subr.mxu0 0.0
  %1691 = vmatpush1.msra.mxu0 0.0
  %1692 = vmatprep.subr.mxu0 0.0
  %1693 = vmatpush1.msra.mxu0 0.0
  %1694 = vmatprep.subr.mxu0 0.0
  %1695 = vmatpush1.msra.mxu0 0.0
  %1696 = vmatprep.subr.mxu0 0.0
  %1697 = vmatpush1.msra.mxu0 %v1643
  %1698 = vmatprep.subr.mxu0 0.0
  %1699 = vmatpush1.msra.mxu0 %v1642
  %1700 = vmatprep.subr.mxu0 0.0
  %1701 = vmatpush1.msra.mxu0 %v1641
  %1702 = vmatprep.subr.mxu0 0.0
  %1703 = vmatpush1.msra.mxu0 %v1640
  %1704 = vmatprep.subr.mxu0 0.0
  %1705 = vmatpush2.msra.mxu0 0.0
  %1706 = vmatprep.subr.mxu0 0.0
  %1707 = vmatpush2.msra.mxu0 0.0
  %1708 = vmatprep.subr.mxu0 0.0
  %1709 = vmatpush2.msra.mxu0 0.0
  %1710 = vmatprep.subr.mxu0 0.0
  %1711 = vmatpush2.msra.mxu0 0.0
  %1712 = vmatprep.subr.mxu0 0.0
  %1713 = vmatpush2.msra.mxu0 0.0
  %1714 = vmatprep.subr.mxu0 0.0
  %1715 = vmatpush2.msra.mxu0 0.0
  %1716 = vmatprep.subr.mxu0 0.0
  %1717 = vmatpush2.msra.mxu0 0.0
  %1718 = vmatprep.subr.mxu0 0.0
  %1719 = vmatpush2.msra.mxu0 0.0
  %1720 = vmatprep.subr.mxu0 0.0
  %1721 = vmatpush2.msra.mxu0 0.0
  %1722 = vmatprep.subr.mxu0 0.0
  %1723 = vmatpush2.msra.mxu0 0.0
  %1724 = vmatprep.subr.mxu0 0.0
  %1725 = vmatpush2.msra.mxu0 0.0
  %1726 = vmatprep.subr.mxu0 0.0
  %1727 = vmatpush2.msra.mxu0 0.0
  %1728 = vmatprep.subr.mxu0 0.0
  %1729 = vmatpush2.msra.mxu0 0.0
  %1730 = vmatprep.subr.mxu0 0.0
  %1731 = vmatpush2.msra.mxu0 0.0
  %1732 = vmatprep.subr.mxu0 0.0
  %1733 = vmatpush2.msra.mxu0 0.0
  %1734 = vmatprep.subr.mxu0 0.0
  %1735 = vmatpush2.msra.mxu0 0.0
  %1736 = vmatprep.mubr.f32.mxu0 0.0
  %1737 = vmatmul.mubr.f32.gmra.mxu0 %v1652
  %v1738 = vpop.f32.mrf.mxu0
  %v1739 = vadd.f32 %v1649, %v1738
  %v1740 = vpop.f32.mrf.mxu0
  %1741 = vmatprep.mubr.f32.mxu0 0.0
  %1742 = vmatmul.mubr.f32.gmra.mxu0 %v1655
  %v1743 = vpop.f32.mrf.mxu0
  %v1744 = vadd.f32 %v1649, %v1743
  %v1745 = vpop.f32.mrf.mxu0
  %1746 = vmatprep.mubr.f32.mxu0 0.0
  %1747 = vmatmul.mubr.f32.gmra.mxu0 %v1658
  %v1748 = vpop.f32.mrf.mxu0
  %v1749 = vadd.f32 %v1649, %v1748
  %v1750 = vpop.f32.mrf.mxu0
  %1751 = vmatprep.mubr.f32.mxu0 0.0
  %1752 = vmatmul.mubr.f32.gmra.mxu0 %v1661
  %v1753 = vpop.f32.mrf.mxu0
  %v1754 = vadd.f32 %v1649, %v1753
  %v1755 = vpop.f32.mrf.mxu0
  %1756 = vmatprep.mubr.f32.mxu0 0.0
  %1757 = vmatmul.mubr.f32.gmra.mxu0 %v1664
  %v1758 = vpop.f32.mrf.mxu0
  %v1759 = vadd.f32 %v1649, %v1758
  %v1760 = vpop.f32.mrf.mxu0
  %1761 = vmatprep.mubr.f32.mxu0 0.0
  %1762 = vmatmul.mubr.f32.gmra.mxu0 %v1667
  %v1763 = vpop.f32.mrf.mxu0
  %v1764 = vadd.f32 %v1649, %v1763
  %v1765 = vpop.f32.mrf.mxu0
  %1766 = vmatprep.mubr.f32.mxu0 0.0
  %1767 = vmatmul.mubr.f32.gmra.mxu0 %v1670
  %v1768 = vpop.f32.mrf.mxu0
  %v1769 = vadd.f32 %v1649, %v1768
  %v1770 = vpop.f32.mrf.mxu0
  %1771 = vdwg.mxu0
  %v1772 = vmul.f32 %v1739, %v1739
  %v1773 = vmul.f32 %v1744, %v1744
  %v1774 = vmul.f32 %v1749, %v1749
  %v1775 = vmul.f32 %v1754, %v1754
  %v1776 = vmul.f32 %v1759, %v1759
  %v1777 = vmul.f32 %v1764, %v1764
  %v1778 = vmul.f32 %v1769, %v1769
  %v1779 = vmul.f32 %v1739, %v1772
  %v1780 = vmul.f32 %v1744, %v1773
  %v1781 = vmul.f32 %v1749, %v1774
  %v1782 = vmul.f32 %v1754, %v1775
  %v1783 = vmul.f32 %v1759, %v1776
  %v1784 = vmul.f32 %v1764, %v1777
  %v1785 = vmul.f32 %v1769, %v1778
  %v1786 = vmul.f32 %v1779, 0.044715
  %v1787 = vmul.f32 %v1780, 0.044715
  %v1788 = vmul.f32 %v1781, 0.044715
  %v1789 = vmul.f32 %v1782, 0.044715
  %v1790 = vmul.f32 %v1783, 0.044715
  %v1791 = vmul.f32 %v1784, 0.044715
  %v1792 = vmul.f32 %v1785, 0.044715
  %v1793 = vadd.f32 %v1739, %v1786
  %v1794 = vadd.f32 %v1744, %v1787
  %v1795 = vadd.f32 %v1749, %v1788
  %v1796 = vadd.f32 %v1754, %v1789
  %v1797 = vadd.f32 %v1759, %v1790
  %v1798 = vadd.f32 %v1764, %v1791
  %v1799 = vadd.f32 %v1769, %v1792
  %v1800 = vmul.f32 %v1793, 0.7978846
  %v1801 = vmul.f32 %v1794, 0.7978846
  %v1802 = vmul.f32 %v1795, 0.7978846
  %v1803 = vmul.f32 %v1796, 0.7978846
  %v1804 = vmul.f32 %v1797, 0.7978846
  %v1805 = vmul.f32 %v1798, 0.7978846
  %v1806 = vmul.f32 %v1799, 0.7978846
  %v1807 = vtanh.pop %v1800
  %v1808 = vtanh.pop %v1801
  %v1809 = vtanh.pop %v1802
  %v1810 = vtanh.pop %v1803
  %v1811 = vtanh.pop %v1804
  %v1812 = vtanh.pop %v1805
  %v1813 = vtanh.pop %v1806
  %v1814 = vadd.f32 %v1807, 1.0
  %v1815 = vadd.f32 %v1808, 1.0
  %v1816 = vadd.f32 %v1809, 1.0
  %v1817 = vadd.f32 %v1810, 1.0
  %v1818 = vadd.f32 %v1811, 1.0
  %v1819 = vadd.f32 %v1812, 1.0
  %v1820 = vadd.f32 %v1813, 1.0
  %v1821 = vmul.f32 %v1814, 0.5
  %v1822 = vmul.f32 %v1815, 0.5
  %v1823 = vmul.f32 %v1816, 0.5
  %v1824 = vmul.f32 %v1817, 0.5
  %v1825 = vmul.f32 %v1818, 0.5
  %v1826 = vmul.f32 %v1819, 0.5
  %v1827 = vmul.f32 %v1820, 0.5
  %v1828 = vmul.f32 %v1739, %v1821
  %v1829 = vmul.f32 %v1744, %v1822
  %v1830 = vmul.f32 %v1749, %v1823
  %v1831 = vmul.f32 %v1754, %v1824
  %v1832 = vmul.f32 %v1759, %v1825
  %v1833 = vmul.f32 %v1764, %v1826
  %v1834 = vmul.f32 %v1769, %v1827
  %v1835 = vld [vmem:[%s14] sm:$0xff]
  %v1836 = vld [vmem:[%s14 + $0x8] sm:$0xff]
  %v1837 = vld [vmem:[%s14 + $0x10] sm:$0xff]
  %v1838 = vld [vmem:[%s14 + $0x18] sm:$0xff]
  %v1839 = vld [vmem:[%s14 + $0x20] sm:$0xff]
  %v1840 = vld [vmem:[%s14 + $0x28] sm:$0xff]
  %v1841 = vld [vmem:[%s14 + $0x30] sm:$0xff]
  %v1842 = vld [vmem:[%s14 + $0x38] sm:$0xff]
  %v1843 = vld [vmem:[%s14 + $0x40] sm:$0xff]
  %v1844 = vld [vmem:[%s14 + $0x48] sm:$0xff]
  %v1845 = vld [vmem:[%s14 + $0x50] sm:$0xff]
  %v1846 = vld [vmem:[%s14 + $0x58] sm:$0xff]
  %v1847 = vld [vmem:[%s14 + $0x60] sm:$0xff]
  %v1848 = vld [vmem:[%s14 + $0x68] sm:$0xff]
  %v1849 = vld [vmem:[%s14 + $0x70] sm:$0xff]
  %v1850 = vld [vmem:[%s14 + $0x78] sm:$0xff]
  %v1851 = vld [vmem:[%s15] sm:$0x1]
  %v1853 = vlaneseq
  %v1854 = vshrl.u32 %v1853, 7
  %v1855 = vsub.s32 0, %v1854
  %v1856 = vrot.slane %v1851, %v1855
  %1858 = vmatprep.subr.mxu0 0.0
  %1859 = vmatpush1.msra.mxu0 %v1850
  %1860 = vmatprep.subr.mxu0 0.0
  %1861 = vmatpush1.msra.mxu0 %v1849
  %1862 = vmatprep.subr.mxu0 0.0
  %1863 = vmatpush1.msra.mxu0 %v1848
  %1864 = vmatprep.subr.mxu0 0.0
  %1865 = vmatpush1.msra.mxu0 %v1847
  %1866 = vmatprep.subr.mxu0 0.0
  %1867 = vmatpush1.msra.mxu0 %v1846
  %1868 = vmatprep.subr.mxu0 0.0
  %1869 = vmatpush1.msra.mxu0 %v1845
  %1870 = vmatprep.subr.mxu0 0.0
  %1871 = vmatpush1.msra.mxu0 %v1844
  %1872 = vmatprep.subr.mxu0 0.0
  %1873 = vmatpush1.msra.mxu0 %v1843
  %1874 = vmatprep.subr.mxu0 0.0
  %1875 = vmatpush1.msra.mxu0 %v1842
  %1876 = vmatprep.subr.mxu0 0.0
  %1877 = vmatpush1.msra.mxu0 %v1841
  %1878 = vmatprep.subr.mxu0 0.0
  %1879 = vmatpush1.msra.mxu0 %v1840
  %1880 = vmatprep.subr.mxu0 0.0
  %1881 = vmatpush1.msra.mxu0 %v1839
  %1882 = vmatprep.subr.mxu0 0.0
  %1883 = vmatpush1.msra.mxu0 %v1838
  %1884 = vmatprep.subr.mxu0 0.0
  %1885 = vmatpush1.msra.mxu0 %v1837
  %1886 = vmatprep.subr.mxu0 0.0
  %1887 = vmatpush1.msra.mxu0 %v1836
  %1888 = vmatprep.subr.mxu0 0.0
  %1889 = vmatpush1.msra.mxu0 %v1835
  %1890 = vmatprep.subr.mxu0 0.0
  %1891 = vmatpush2.msra.mxu0 0.0
  %1892 = vmatprep.subr.mxu0 0.0
  %1893 = vmatpush2.msra.mxu0 0.0
  %1894 = vmatprep.subr.mxu0 0.0
  %1895 = vmatpush2.msra.mxu0 0.0
  %1896 = vmatprep.subr.mxu0 0.0
  %1897 = vmatpush2.msra.mxu0 0.0
  %1898 = vmatprep.subr.mxu0 0.0
  %1899 = vmatpush2.msra.mxu0 0.0
  %1900 = vmatprep.subr.mxu0 0.0
  %1901 = vmatpush2.msra.mxu0 0.0
  %1902 = vmatprep.subr.mxu0 0.0
  %1903 = vmatpush2.msra.mxu0 0.0
  %1904 = vmatprep.subr.mxu0 0.0
  %1905 = vmatpush2.msra.mxu0 0.0
  %1906 = vmatprep.subr.mxu0 0.0
  %1907 = vmatpush2.msra.mxu0 0.0
  %1908 = vmatprep.subr.mxu0 0.0
  %1909 = vmatpush2.msra.mxu0 0.0
  %1910 = vmatprep.subr.mxu0 0.0
  %1911 = vmatpush2.msra.mxu0 0.0
  %1912 = vmatprep.subr.mxu0 0.0
  %1913 = vmatpush2.msra.mxu0 0.0
  %1914 = vmatprep.subr.mxu0 0.0
  %1915 = vmatpush2.msra.mxu0 0.0
  %1916 = vmatprep.subr.mxu0 0.0
  %1917 = vmatpush2.msra.mxu0 0.0
  %1918 = vmatprep.subr.mxu0 0.0
  %1919 = vmatpush2.msra.mxu0 0.0
  %1920 = vmatprep.subr.mxu0 0.0
  %1921 = vmatpush2.msra.mxu0 0.0
  %1922 = vmatprep.mubr.f32.mxu0 0.0
  %1923 = vmatmul.mubr.f32.gmra.mxu0 %v1828
  %v1924 = vpop.f32.mrf.mxu0
  %v1925 = vadd.f32 %v1856, %v1924
  %v1926 = vpop.f32.mrf.mxu0
  %1927 = vmatprep.mubr.f32.mxu0 0.0
  %1928 = vmatmul.mubr.f32.gmra.mxu0 %v1829
  %v1929 = vpop.f32.mrf.mxu0
  %v1930 = vadd.f32 %v1856, %v1929
  %v1931 = vpop.f32.mrf.mxu0
  %1932 = vmatprep.mubr.f32.mxu0 0.0
  %1933 = vmatmul.mubr.f32.gmra.mxu0 %v1830
  %v1934 = vpop.f32.mrf.mxu0
  %v1935 = vadd.f32 %v1856, %v1934
  %v1936 = vpop.f32.mrf.mxu0
  %1937 = vmatprep.mubr.f32.mxu0 0.0
  %1938 = vmatmul.mubr.f32.gmra.mxu0 %v1831
  %v1939 = vpop.f32.mrf.mxu0
  %v1940 = vadd.f32 %v1856, %v1939
  %v1941 = vpop.f32.mrf.mxu0
  %1942 = vmatprep.mubr.f32.mxu0 0.0
  %1943 = vmatmul.mubr.f32.gmra.mxu0 %v1832
  %v1944 = vpop.f32.mrf.mxu0
  %v1945 = vadd.f32 %v1856, %v1944
  %v1946 = vpop.f32.mrf.mxu0
  %1947 = vmatprep.mubr.f32.mxu0 0.0
  %1948 = vmatmul.mubr.f32.gmra.mxu0 %v1833
  %v1949 = vpop.f32.mrf.mxu0
  %v1950 = vadd.f32 %v1856, %v1949
  %v1951 = vpop.f32.mrf.mxu0
  %1952 = vmatprep.mubr.f32.mxu0 0.0
  %1953 = vmatmul.mubr.f32.gmra.mxu0 %v1834
  %v1954 = vpop.f32.mrf.mxu0
  %v1955 = vadd.f32 %v1856, %v1954
  %v1956 = vpop.f32.mrf.mxu0
  %1957 = vdwg.mxu0
  %v1958 = vld [vmem:[%s16] sm:$0x1]
  %v1960 = vlaneseq
  %v1961 = vshrl.u32 %v1960, 7
  %v1962 = vsub.s32 0, %v1961
  %v1963 = vrot.slane %v1958, %v1962
  %v1965 = vmul.f32 %v1963, %v1925
  %v1966 = vmul.f32 %v1963, %v1930
  %v1967 = vmul.f32 %v1963, %v1935
  %v1968 = vmul.f32 %v1963, %v1940
  %v1969 = vmul.f32 %v1963, %v1945
  %v1970 = vmul.f32 %v1963, %v1950
  %v1971 = vmul.f32 %v1963, %v1955
  %v1972 = vadd.f32 %v1514, %v1965
  %v1973 = vadd.f32 %v1515, %v1966
  %v1974 = vadd.f32 %v1516, %v1967
  %v1975 = vadd.f32 %v1517, %v1968
  %v1976 = vadd.f32 %v1518, %v1969
  %v1977 = vadd.f32 %v1519, %v1970
  %v1978 = vadd.f32 %v1520, %v1971
  %s1979 = scalar_lea.vmem %s3, 1
  %v1980 = vld [vmem:[%s1979] sm:$0x1]
  %s1981 = scalar_lea.vmem %s4, 1
  %v1982 = vld [vmem:[%s1981] sm:$0x1]
  %v1983 = vsel %vm216, %v1972, 0.0
  %1984 = vadd.xlane.f32.xlu0 %v1983
  %v1985 = vpop.xlane.xlu0 %1984
  %v1986 = vsel %vm216, %v1973, 0.0
  %1987 = vadd.xlane.f32.xlu0 %v1986
  %v1988 = vpop.xlane.xlu0 %1987
  %v1989 = vsel %vm216, %v1974, 0.0
  %1990 = vadd.xlane.f32.xlu0 %v1989
  %v1991 = vpop.xlane.xlu0 %1990
  %v1992 = vsel %vm216, %v1975, 0.0
  %1993 = vadd.xlane.f32.xlu0 %v1992
  %v1994 = vpop.xlane.xlu0 %1993
  %v1995 = vsel %vm216, %v1976, 0.0
  %1996 = vadd.xlane.f32.xlu0 %v1995
  %v1997 = vpop.xlane.xlu0 %1996
  %v1998 = vsel %vm216, %v1977, 0.0
  %1999 = vadd.xlane.f32.xlu0 %v1998
  %v2000 = vpop.xlane.xlu0 %1999
  %v2001 = vsel %vm216, %v1978, 0.0
  %2002 = vadd.xlane.f32.xlu0 %v2001
  %v2003 = vpop.xlane.xlu0 %2002
  %v2004 = vmul.f32 %v1985, %v238
  %v2005 = vmul.f32 %v1988, %v238
  %v2006 = vmul.f32 %v1991, %v238
  %v2007 = vmul.f32 %v1994, %v238
  %v2008 = vmul.f32 %v1997, %v238
  %v2009 = vmul.f32 %v2000, %v238
  %v2010 = vmul.f32 %v2003, %v238
  %v2011 = vsub.f32 %v1972, %v2004
  %v2012 = vsub.f32 %v1973, %v2005
  %v2013 = vsub.f32 %v1974, %v2006
  %v2014 = vsub.f32 %v1975, %v2007
  %v2015 = vsub.f32 %v1976, %v2008
  %v2016 = vsub.f32 %v1977, %v2009
  %v2017 = vsub.f32 %v1978, %v2010
  %v2018 = vmul.f32 %v2011, %v2011
  %v2019 = vmul.f32 %v2012, %v2012
  %v2020 = vmul.f32 %v2013, %v2013
  %v2021 = vmul.f32 %v2014, %v2014
  %v2022 = vmul.f32 %v2015, %v2015
  %v2023 = vmul.f32 %v2016, %v2016
  %v2024 = vmul.f32 %v2017, %v2017
  %v2025 = vsel %vm216, %v2018, 0.0
  %2026 = vadd.xlane.f32.xlu0 %v2025
  %v2027 = vpop.xlane.xlu0 %2026
  %v2028 = vsel %vm216, %v2019, 0.0
  %2029 = vadd.xlane.f32.xlu0 %v2028
  %v2030 = vpop.xlane.xlu0 %2029
  %v2031 = vsel %vm216, %v2020, 0.0
  %2032 = vadd.xlane.f32.xlu0 %v2031
  %v2033 = vpop.xlane.xlu0 %2032
  %v2034 = vsel %vm216, %v2021, 0.0
  %2035 = vadd.xlane.f32.xlu0 %v2034
  %v2036 = vpop.xlane.xlu0 %2035
  %v2037 = vsel %vm216, %v2022, 0.0
  %2038 = vadd.xlane.f32.xlu0 %v2037
  %v2039 = vpop.xlane.xlu0 %2038
  %v2040 = vsel %vm216, %v2023, 0.0
  %2041 = vadd.xlane.f32.xlu0 %v2040
  %v2042 = vpop.xlane.xlu0 %2041
  %v2043 = vsel %vm216, %v2024, 0.0
  %2044 = vadd.xlane.f32.xlu0 %v2043
  %v2045 = vpop.xlane.xlu0 %2044
  %v2046 = vmul.f32 %v2027, %v238
  %v2047 = vmul.f32 %v2030, %v238
  %v2048 = vmul.f32 %v2033, %v238
  %v2049 = vmul.f32 %v2036, %v238
  %v2050 = vmul.f32 %v2039, %v238
  %v2051 = vmul.f32 %v2042, %v238
  %v2052 = vmul.f32 %v2045, %v238
  %v2053 = vadd.f32 %v2046, 1e-06
  %v2054 = vadd.f32 %v2047, 1e-06
  %v2055 = vadd.f32 %v2048, 1e-06
  %v2056 = vadd.f32 %v2049, 1e-06
  %v2057 = vadd.f32 %v2050, 1e-06
  %v2058 = vadd.f32 %v2051, 1e-06
  %v2059 = vadd.f32 %v2052, 1e-06
  %v2060 = vrsqrt.pop %v2053
  %v2061 = vrsqrt.pop %v2054
  %v2062 = vrsqrt.pop %v2055
  %v2063 = vrsqrt.pop %v2056
  %v2064 = vrsqrt.pop %v2057
  %v2065 = vrsqrt.pop %v2058
  %v2066 = vrsqrt.pop %v2059
  %v2067 = vmul.f32 %v2011, %v2060
  %v2068 = vmul.f32 %v2012, %v2061
  %v2069 = vmul.f32 %v2013, %v2062
  %v2070 = vmul.f32 %v2014, %v2063
  %v2071 = vmul.f32 %v2015, %v2064
  %v2072 = vmul.f32 %v2016, %v2065
  %v2073 = vmul.f32 %v2017, %v2066
  %v2075 = vlaneseq
  %v2076 = vshrl.u32 %v2075, 7
  %v2077 = vsub.s32 0, %v2076
  %v2078 = vrot.slane %v1980, %v2077
  %v2080 = vmul.f32 %v2067, %v2078
  %v2081 = vmul.f32 %v2068, %v2078
  %v2082 = vmul.f32 %v2069, %v2078
  %v2083 = vmul.f32 %v2070, %v2078
  %v2084 = vmul.f32 %v2071, %v2078
  %v2085 = vmul.f32 %v2072, %v2078
  %v2086 = vmul.f32 %v2073, %v2078
  %v2088 = vlaneseq
  %v2089 = vshrl.u32 %v2088, 7
  %v2090 = vsub.s32 0, %v2089
  %v2091 = vrot.slane %v1982, %v2090
  %v2093 = vadd.f32 %v2080, %v2091
  %v2094 = vadd.f32 %v2081, %v2091
  %v2095 = vadd.f32 %v2082, %v2091
  %v2096 = vadd.f32 %v2083, %v2091
  %v2097 = vadd.f32 %v2084, %v2091
  %v2098 = vadd.f32 %v2085, %v2091
  %v2099 = vadd.f32 %v2086, %v2091
  %s2100 = scalar_lea.vmem %s5, 32
  %v2101 = vld [vmem:[%s2100] sm:$0xff]
  %v2102 = vld [vmem:[%s2100 + $0x8] sm:$0xff]
  %v2103 = vld [vmem:[%s2100 + $0x10] sm:$0xff]
  %v2104 = vld [vmem:[%s2100 + $0x18] sm:$0xff]
  %s2105 = scalar_lea.vmem %s6, 1
  %v2106 = vld [vmem:[%s2105] sm:$0x1]
  %v2108 = vlaneseq
  %v2109 = vshrl.u32 %v2108, 7
  %v2110 = vsub.s32 0, %v2109
  %v2111 = vrot.slane %v2106, %v2110
  %v2114 = vsel %vm216, %v2093, 0
  %v2117 = vsel %vm216, %v2094, 0
  %v2120 = vsel %vm216, %v2095, 0
  %v2123 = vsel %vm216, %v2096, 0
  %v2126 = vsel %vm216, %v2097, 0
  %v2129 = vsel %vm216, %v2098, 0
  %v2132 = vsel %vm216, %v2099, 0
  %2134 = vmatprep.subr.mxu0 0.0
  %2135 = vmatpush1.msra.mxu0 0.0
  %2136 = vmatprep.subr.mxu0 0.0
  %2137 = vmatpush1.msra.mxu0 0.0
  %2138 = vmatprep.subr.mxu0 0.0
  %2139 = vmatpush1.msra.mxu0 0.0
  %2140 = vmatprep.subr.mxu0 0.0
  %2141 = vmatpush1.msra.mxu0 0.0
  %2142 = vmatprep.subr.mxu0 0.0
  %2143 = vmatpush1.msra.mxu0 0.0
  %2144 = vmatprep.subr.mxu0 0.0
  %2145 = vmatpush1.msra.mxu0 0.0
  %2146 = vmatprep.subr.mxu0 0.0
  %2147 = vmatpush1.msra.mxu0 0.0
  %2148 = vmatprep.subr.mxu0 0.0
  %2149 = vmatpush1.msra.mxu0 0.0
  %2150 = vmatprep.subr.mxu0 0.0
  %2151 = vmatpush1.msra.mxu0 0.0
  %2152 = vmatprep.subr.mxu0 0.0
  %2153 = vmatpush1.msra.mxu0 0.0
  %2154 = vmatprep.subr.mxu0 0.0
  %2155 = vmatpush1.msra.mxu0 0.0
  %2156 = vmatprep.subr.mxu0 0.0
  %2157 = vmatpush1.msra.mxu0 0.0
  %2158 = vmatprep.subr.mxu0 0.0
  %2159 = vmatpush1.msra.mxu0 %v2104
  %2160 = vmatprep.subr.mxu0 0.0
  %2161 = vmatpush1.msra.mxu0 %v2103
  %2162 = vmatprep.subr.mxu0 0.0
  %2163 = vmatpush1.msra.mxu0 %v2102
  %2164 = vmatprep.subr.mxu0 0.0
  %2165 = vmatpush1.msra.mxu0 %v2101
  %2166 = vmatprep.subr.mxu0 0.0
  %2167 = vmatpush2.msra.mxu0 0.0
  %2168 = vmatprep.subr.mxu0 0.0
  %2169 = vmatpush2.msra.mxu0 0.0
  %2170 = vmatprep.subr.mxu0 0.0
  %2171 = vmatpush2.msra.mxu0 0.0
  %2172 = vmatprep.subr.mxu0 0.0
  %2173 = vmatpush2.msra.mxu0 0.0
  %2174 = vmatprep.subr.mxu0 0.0
  %2175 = vmatpush2.msra.mxu0 0.0
  %2176 = vmatprep.subr.mxu0 0.0
  %2177 = vmatpush2.msra.mxu0 0.0
  %2178 = vmatprep.subr.mxu0 0.0
  %2179 = vmatpush2.msra.mxu0 0.0
  %2180 = vmatprep.subr.mxu0 0.0
  %2181 = vmatpush2.msra.mxu0 0.0
  %2182 = vmatprep.subr.mxu0 0.0
  %2183 = vmatpush2.msra.mxu0 0.0
  %2184 = vmatprep.subr.mxu0 0.0
  %2185 = vmatpush2.msra.mxu0 0.0
  %2186 = vmatprep.subr.mxu0 0.0
  %2187 = vmatpush2.msra.mxu0 0.0
  %2188 = vmatprep.subr.mxu0 0.0
  %2189 = vmatpush2.msra.mxu0 0.0
  %2190 = vmatprep.subr.mxu0 0.0
  %2191 = vmatpush2.msra.mxu0 0.0
  %2192 = vmatprep.subr.mxu0 0.0
  %2193 = vmatpush2.msra.mxu0 0.0
  %2194 = vmatprep.subr.mxu0 0.0
  %2195 = vmatpush2.msra.mxu0 0.0
  %2196 = vmatprep.subr.mxu0 0.0
  %2197 = vmatpush2.msra.mxu0 0.0
  %2198 = vmatprep.mubr.f32.mxu0 0.0
  %2199 = vmatmul.mubr.f32.gmra.mxu0 %v2114
  %v2200 = vpop.f32.mrf.mxu0
  %v2201 = vadd.f32 %v2111, %v2200
  %v2202 = vpop.f32.mrf.mxu0
  %2203 = vmatprep.mubr.f32.mxu0 0.0
  %2204 = vmatmul.mubr.f32.gmra.mxu0 %v2117
  %v2205 = vpop.f32.mrf.mxu0
  %v2206 = vadd.f32 %v2111, %v2205
  %v2207 = vpop.f32.mrf.mxu0
  %2208 = vmatprep.mubr.f32.mxu0 0.0
  %2209 = vmatmul.mubr.f32.gmra.mxu0 %v2120
  %v2210 = vpop.f32.mrf.mxu0
  %v2211 = vadd.f32 %v2111, %v2210
  %v2212 = vpop.f32.mrf.mxu0
  %2213 = vmatprep.mubr.f32.mxu0 0.0
  %2214 = vmatmul.mubr.f32.gmra.mxu0 %v2123
  %v2215 = vpop.f32.mrf.mxu0
  %v2216 = vadd.f32 %v2111, %v2215
  %v2217 = vpop.f32.mrf.mxu0
  %2218 = vmatprep.mubr.f32.mxu0 0.0
  %2219 = vmatmul.mubr.f32.gmra.mxu0 %v2126
  %v2220 = vpop.f32.mrf.mxu0
  %v2221 = vadd.f32 %v2111, %v2220
  %v2222 = vpop.f32.mrf.mxu0
  %2223 = vmatprep.mubr.f32.mxu0 0.0
  %2224 = vmatmul.mubr.f32.gmra.mxu0 %v2129
  %v2225 = vpop.f32.mrf.mxu0
  %v2226 = vadd.f32 %v2111, %v2225
  %v2227 = vpop.f32.mrf.mxu0
  %2228 = vmatprep.mubr.f32.mxu0 0.0
  %2229 = vmatmul.mubr.f32.gmra.mxu0 %v2132
  %v2230 = vpop.f32.mrf.mxu0
  %v2231 = vadd.f32 %v2111, %v2230
  %v2232 = vpop.f32.mrf.mxu0
  %2233 = vdwg.mxu0
  %s2234 = scalar_lea.vmem %s7, 32
  %v2235 = vld [vmem:[%s2234] sm:$0xff]
  %v2236 = vld [vmem:[%s2234 + $0x8] sm:$0xff]
  %v2237 = vld [vmem:[%s2234 + $0x10] sm:$0xff]
  %v2238 = vld [vmem:[%s2234 + $0x18] sm:$0xff]
  %2246 = vrot.lane.b32.xlu0 %v2201, 96
  %v2247 = vpop.permute.xlu0 %2246
  %2248 = vrot.lane.b32.xlu0 %v2206, 96
  %v2249 = vpop.permute.xlu0 %2248
  %2250 = vrot.lane.b32.xlu0 %v2211, 96
  %v2251 = vpop.permute.xlu0 %2250
  %2252 = vrot.lane.b32.xlu0 %v2216, 96
  %v2253 = vpop.permute.xlu0 %2252
  %2254 = vrot.lane.b32.xlu0 %v2221, 96
  %v2255 = vpop.permute.xlu0 %2254
  %2256 = vrot.lane.b32.xlu0 %v2226, 96
  %v2257 = vpop.permute.xlu0 %2256
  %2258 = vrot.lane.b32.xlu0 %v2231, 96
  %v2259 = vpop.permute.xlu0 %2258
  %v2260 = vsel %vm492, %v2201, 0
  %v2262 = vsel %vm492, %v2206, 0
  %v2264 = vsel %vm492, %v2211, 0
  %v2266 = vsel %vm492, %v2216, 0
  %v2268 = vsel %vm492, %v2221, 0
  %v2270 = vsel %vm492, %v2226, 0
  %v2272 = vsel %vm492, %v2231, 0
  %v2274 = vsel %vm492, %v2247, 0
  %v2276 = vsel %vm492, %v2249, 0
  %v2278 = vsel %vm492, %v2251, 0
  %v2280 = vsel %vm492, %v2253, 0
  %v2282 = vsel %vm492, %v2255, 0
  %v2284 = vsel %vm492, %v2257, 0
  %v2286 = vsel %vm492, %v2259, 0
  %2288 = vmatprep.subr.mxu0 0.0
  %2289 = vmatpush1.xpose.msra.mxu0 0.0
  %2290 = vmatprep.subr.mxu0 0.0
  %2291 = vmatpush1.xpose.msra.mxu0 0.0
  %2292 = vmatprep.subr.mxu0 0.0
  %2293 = vmatpush1.xpose.msra.mxu0 0.0
  %2294 = vmatprep.subr.mxu0 0.0
  %2295 = vmatpush1.xpose.msra.mxu0 0.0
  %2296 = vmatprep.subr.mxu0 0.0
  %2297 = vmatpush1.xpose.msra.mxu0 0.0
  %2298 = vmatprep.subr.mxu0 0.0
  %2299 = vmatpush1.xpose.msra.mxu0 0.0
  %2300 = vmatprep.subr.mxu0 0.0
  %2301 = vmatpush1.xpose.msra.mxu0 0.0
  %2302 = vmatprep.subr.mxu0 0.0
  %2303 = vmatpush1.xpose.msra.mxu0 0.0
  %2304 = vmatprep.subr.mxu0 0.0
  %2305 = vmatpush1.xpose.msra.mxu0 0.0
  %2306 = vmatprep.subr.mxu0 0.0
  %2307 = vmatpush1.xpose.msra.mxu0 %v2286
  %2308 = vmatprep.subr.mxu0 0.0
  %2309 = vmatpush1.xpose.msra.mxu0 %v2284
  %2310 = vmatprep.subr.mxu0 0.0
  %2311 = vmatpush1.xpose.msra.mxu0 %v2282
  %2312 = vmatprep.subr.mxu0 0.0
  %2313 = vmatpush1.xpose.msra.mxu0 %v2280
  %2314 = vmatprep.subr.mxu0 0.0
  %2315 = vmatpush1.xpose.msra.mxu0 %v2278
  %2316 = vmatprep.subr.mxu0 0.0
  %2317 = vmatpush1.xpose.msra.mxu0 %v2276
  %2318 = vmatprep.subr.mxu0 0.0
  %2319 = vmatpush1.xpose.msra.mxu0 %v2274
  %2320 = vmatprep.subr.mxu0 0.0
  %2321 = vmatpush2.xpose.msra.mxu0 0.0
  %2322 = vmatprep.subr.mxu0 0.0
  %2323 = vmatpush2.xpose.msra.mxu0 0.0
  %2324 = vmatprep.subr.mxu0 0.0
  %2325 = vmatpush2.xpose.msra.mxu0 0.0
  %2326 = vmatprep.subr.mxu0 0.0
  %2327 = vmatpush2.xpose.msra.mxu0 0.0
  %2328 = vmatprep.subr.mxu0 0.0
  %2329 = vmatpush2.xpose.msra.mxu0 0.0
  %2330 = vmatprep.subr.mxu0 0.0
  %2331 = vmatpush2.xpose.msra.mxu0 0.0
  %2332 = vmatprep.subr.mxu0 0.0
  %2333 = vmatpush2.xpose.msra.mxu0 0.0
  %2334 = vmatprep.subr.mxu0 0.0
  %2335 = vmatpush2.xpose.msra.mxu0 0.0
  %2336 = vmatprep.subr.mxu0 0.0
  %2337 = vmatpush2.xpose.msra.mxu0 0.0
  %2338 = vmatprep.subr.mxu0 0.0
  %2339 = vmatpush2.xpose.msra.mxu0 0.0
  %2340 = vmatprep.subr.mxu0 0.0
  %2341 = vmatpush2.xpose.msra.mxu0 0.0
  %2342 = vmatprep.subr.mxu0 0.0
  %2343 = vmatpush2.xpose.msra.mxu0 0.0
  %2344 = vmatprep.subr.mxu0 0.0
  %2345 = vmatpush2.xpose.msra.mxu0 0.0
  %2346 = vmatprep.subr.mxu0 0.0
  %2347 = vmatpush2.xpose.msra.mxu0 0.0
  %2348 = vmatprep.subr.mxu0 0.0
  %2349 = vmatpush2.xpose.msra.mxu0 0.0
  %2350 = vmatprep.subr.mxu0 0.0
  %2351 = vmatpush2.xpose.msra.mxu0 0.0
  %2352 = vmatprep.mubr.f32.mxu0 0.0
  %2353 = vmatmul.mubr.f32.gmra.mxu0 %v2260
  %v2354 = vpop.f32.mrf.mxu0
  %v2355 = vadd.f32 0.0, %v2354
  %v2356 = vpop.f32.mrf.mxu0
  %2357 = vmatprep.mubr.f32.mxu0 0.0
  %2358 = vmatmul.mubr.f32.gmra.mxu0 %v2262
  %v2359 = vpop.f32.mrf.mxu0
  %v2360 = vadd.f32 0.0, %v2359
  %v2361 = vpop.f32.mrf.mxu0
  %2362 = vmatprep.mubr.f32.mxu0 0.0
  %2363 = vmatmul.mubr.f32.gmra.mxu0 %v2264
  %v2364 = vpop.f32.mrf.mxu0
  %v2365 = vadd.f32 0.0, %v2364
  %v2366 = vpop.f32.mrf.mxu0
  %2367 = vmatprep.mubr.f32.mxu0 0.0
  %2368 = vmatmul.mubr.f32.gmra.mxu0 %v2266
  %v2369 = vpop.f32.mrf.mxu0
  %v2370 = vadd.f32 0.0, %v2369
  %v2371 = vpop.f32.mrf.mxu0
  %2372 = vmatprep.mubr.f32.mxu0 0.0
  %2373 = vmatmul.mubr.f32.gmra.mxu0 %v2268
  %v2374 = vpop.f32.mrf.mxu0
  %v2375 = vadd.f32 0.0, %v2374
  %v2376 = vpop.f32.mrf.mxu0
  %2377 = vmatprep.mubr.f32.mxu0 0.0
  %2378 = vmatmul.mubr.f32.gmra.mxu0 %v2270
  %v2379 = vpop.f32.mrf.mxu0
  %v2380 = vadd.f32 0.0, %v2379
  %v2381 = vpop.f32.mrf.mxu0
  %2382 = vmatprep.mubr.f32.mxu0 0.0
  %2383 = vmatmul.mubr.f32.gmra.mxu0 %v2272
  %v2384 = vpop.f32.mrf.mxu0
  %v2385 = vadd.f32 0.0, %v2384
  %v2386 = vpop.f32.mrf.mxu0
  %2387 = vdwg.mxu0
  %v2388 = vmul.f32 %v2355, 0.25
  %v2389 = vmul.f32 %v2360, 0.25
  %v2390 = vmul.f32 %v2365, 0.25
  %v2391 = vmul.f32 %v2370, 0.25
  %v2392 = vmul.f32 %v2375, 0.25
  %v2393 = vmul.f32 %v2380, 0.25
  %v2394 = vmul.f32 %v2385, 0.25
  %v2395 = vsel %vm213, %v2388, -1e+30
  %v2396 = vsel %vm213, %v2389, -1e+30
  %v2397 = vsel %vm213, %v2390, -1e+30
  %v2398 = vsel %vm213, %v2391, -1e+30
  %v2399 = vsel %vm213, %v2392, -1e+30
  %v2400 = vsel %vm213, %v2393, -1e+30
  %v2401 = vsel %vm213, %v2394, -1e+30
  %v2402 = vsel %vm635, %v2395, -inf
  %2403 = vmax.xlane.f32.xlu0 %v2402
  %v2404 = vpop.xlane.xlu0 %2403
  %v2405 = vsel %vm635, %v2396, -inf
  %2406 = vmax.xlane.f32.xlu0 %v2405
  %v2407 = vpop.xlane.xlu0 %2406
  %v2408 = vsel %vm635, %v2397, -inf
  %2409 = vmax.xlane.f32.xlu0 %v2408
  %v2410 = vpop.xlane.xlu0 %2409
  %v2411 = vsel %vm635, %v2398, -inf
  %2412 = vmax.xlane.f32.xlu0 %v2411
  %v2413 = vpop.xlane.xlu0 %2412
  %v2414 = vsel %vm635, %v2399, -inf
  %2415 = vmax.xlane.f32.xlu0 %v2414
  %v2416 = vpop.xlane.xlu0 %2415
  %v2417 = vsel %vm635, %v2400, -inf
  %2418 = vmax.xlane.f32.xlu0 %v2417
  %v2419 = vpop.xlane.xlu0 %2418
  %v2420 = vsel %vm635, %v2401, -inf
  %2421 = vmax.xlane.f32.xlu0 %v2420
  %v2422 = vpop.xlane.xlu0 %2421
  %v2423 = vsub.f32 %v2395, %v2404
  %v2424 = vsub.f32 %v2396, %v2407
  %v2425 = vsub.f32 %v2397, %v2410
  %v2426 = vsub.f32 %v2398, %v2413
  %v2427 = vsub.f32 %v2399, %v2416
  %v2428 = vsub.f32 %v2400, %v2419
  %v2429 = vsub.f32 %v2401, %v2422
  %v2430 = vmul.f32 %v2423, 1.442695
  %v2431 = vpow.pop %v2430
  %v2432 = vmul.f32 %v2424, 1.442695
  %v2433 = vpow.pop %v2432
  %v2434 = vmul.f32 %v2425, 1.442695
  %v2435 = vpow.pop %v2434
  %v2436 = vmul.f32 %v2426, 1.442695
  %v2437 = vpow.pop %v2436
  %v2438 = vmul.f32 %v2427, 1.442695
  %v2439 = vpow.pop %v2438
  %v2440 = vmul.f32 %v2428, 1.442695
  %v2441 = vpow.pop %v2440
  %v2442 = vmul.f32 %v2429, 1.442695
  %v2443 = vpow.pop %v2442
  %v2444 = vsel %vm635, %v2431, 0.0
  %2445 = vadd.xlane.f32.xlu0 %v2444
  %v2446 = vpop.xlane.xlu0 %2445
  %v2447 = vsel %vm635, %v2433, 0.0
  %2448 = vadd.xlane.f32.xlu0 %v2447
  %v2449 = vpop.xlane.xlu0 %2448
  %v2450 = vsel %vm635, %v2435, 0.0
  %2451 = vadd.xlane.f32.xlu0 %v2450
  %v2452 = vpop.xlane.xlu0 %2451
  %v2453 = vsel %vm635, %v2437, 0.0
  %2454 = vadd.xlane.f32.xlu0 %v2453
  %v2455 = vpop.xlane.xlu0 %2454
  %v2456 = vsel %vm635, %v2439, 0.0
  %2457 = vadd.xlane.f32.xlu0 %v2456
  %v2458 = vpop.xlane.xlu0 %2457
  %v2459 = vsel %vm635, %v2441, 0.0
  %2460 = vadd.xlane.f32.xlu0 %v2459
  %v2461 = vpop.xlane.xlu0 %2460
  %v2462 = vsel %vm635, %v2443, 0.0
  %2463 = vadd.xlane.f32.xlu0 %v2462
  %v2464 = vpop.xlane.xlu0 %2463
  %v2465 = vrcp.pop %v2446
  %v2466 = vmul.f32 %v2431, %v2465
  %v2467 = vrcp.pop %v2449
  %v2468 = vmul.f32 %v2433, %v2467
  %v2469 = vrcp.pop %v2452
  %v2470 = vmul.f32 %v2435, %v2469
  %v2471 = vrcp.pop %v2455
  %v2472 = vmul.f32 %v2437, %v2471
  %v2473 = vrcp.pop %v2458
  %v2474 = vmul.f32 %v2439, %v2473
  %v2475 = vrcp.pop %v2461
  %v2476 = vmul.f32 %v2441, %v2475
  %v2477 = vrcp.pop %v2464
  %v2478 = vmul.f32 %v2443, %v2477
  %2479 = vrot.lane.b32.xlu0 %v2201, 64
  %v2480 = vpop.permute.xlu0 %2479
  %2481 = vrot.lane.b32.xlu0 %v2206, 64
  %v2482 = vpop.permute.xlu0 %2481
  %2483 = vrot.lane.b32.xlu0 %v2211, 64
  %v2484 = vpop.permute.xlu0 %2483
  %2485 = vrot.lane.b32.xlu0 %v2216, 64
  %v2486 = vpop.permute.xlu0 %2485
  %2487 = vrot.lane.b32.xlu0 %v2221, 64
  %v2488 = vpop.permute.xlu0 %2487
  %2489 = vrot.lane.b32.xlu0 %v2226, 64
  %v2490 = vpop.permute.xlu0 %2489
  %2491 = vrot.lane.b32.xlu0 %v2231, 64
  %v2492 = vpop.permute.xlu0 %2491
  %v2501 = vsel %vm635, %v2466, 0
  %v2504 = vsel %vm635, %v2468, 0
  %v2507 = vsel %vm635, %v2470, 0
  %v2510 = vsel %vm635, %v2472, 0
  %v2513 = vsel %vm635, %v2474, 0
  %v2516 = vsel %vm635, %v2476, 0
  %v2519 = vsel %vm635, %v2478, 0
  %2521 = vmatprep.subr.mxu0 0.0
  %2522 = vmatpush1.msra.mxu0 0.0
  %2523 = vmatprep.subr.mxu0 0.0
  %2524 = vmatpush1.msra.mxu0 0.0
  %2525 = vmatprep.subr.mxu0 0.0
  %2526 = vmatpush1.msra.mxu0 0.0
  %2527 = vmatprep.subr.mxu0 0.0
  %2528 = vmatpush1.msra.mxu0 0.0
  %2529 = vmatprep.subr.mxu0 0.0
  %2530 = vmatpush1.msra.mxu0 0.0
  %2531 = vmatprep.subr.mxu0 0.0
  %2532 = vmatpush1.msra.mxu0 0.0
  %2533 = vmatprep.subr.mxu0 0.0
  %2534 = vmatpush1.msra.mxu0 0.0
  %2535 = vmatprep.subr.mxu0 0.0
  %2536 = vmatpush1.msra.mxu0 0.0
  %2537 = vmatprep.subr.mxu0 0.0
  %2538 = vmatpush1.msra.mxu0 0.0
  %2539 = vmatprep.subr.mxu0 0.0
  %2540 = vmatpush1.msra.mxu0 %v2492
  %2541 = vmatprep.subr.mxu0 0.0
  %2542 = vmatpush1.msra.mxu0 %v2490
  %2543 = vmatprep.subr.mxu0 0.0
  %2544 = vmatpush1.msra.mxu0 %v2488
  %2545 = vmatprep.subr.mxu0 0.0
  %2546 = vmatpush1.msra.mxu0 %v2486
  %2547 = vmatprep.subr.mxu0 0.0
  %2548 = vmatpush1.msra.mxu0 %v2484
  %2549 = vmatprep.subr.mxu0 0.0
  %2550 = vmatpush1.msra.mxu0 %v2482
  %2551 = vmatprep.subr.mxu0 0.0
  %2552 = vmatpush1.msra.mxu0 %v2480
  %2553 = vmatprep.subr.mxu0 0.0
  %2554 = vmatpush2.msra.mxu0 0.0
  %2555 = vmatprep.subr.mxu0 0.0
  %2556 = vmatpush2.msra.mxu0 0.0
  %2557 = vmatprep.subr.mxu0 0.0
  %2558 = vmatpush2.msra.mxu0 0.0
  %2559 = vmatprep.subr.mxu0 0.0
  %2560 = vmatpush2.msra.mxu0 0.0
  %2561 = vmatprep.subr.mxu0 0.0
  %2562 = vmatpush2.msra.mxu0 0.0
  %2563 = vmatprep.subr.mxu0 0.0
  %2564 = vmatpush2.msra.mxu0 0.0
  %2565 = vmatprep.subr.mxu0 0.0
  %2566 = vmatpush2.msra.mxu0 0.0
  %2567 = vmatprep.subr.mxu0 0.0
  %2568 = vmatpush2.msra.mxu0 0.0
  %2569 = vmatprep.subr.mxu0 0.0
  %2570 = vmatpush2.msra.mxu0 0.0
  %2571 = vmatprep.subr.mxu0 0.0
  %2572 = vmatpush2.msra.mxu0 0.0
  %2573 = vmatprep.subr.mxu0 0.0
  %2574 = vmatpush2.msra.mxu0 0.0
  %2575 = vmatprep.subr.mxu0 0.0
  %2576 = vmatpush2.msra.mxu0 0.0
  %2577 = vmatprep.subr.mxu0 0.0
  %2578 = vmatpush2.msra.mxu0 0.0
  %2579 = vmatprep.subr.mxu0 0.0
  %2580 = vmatpush2.msra.mxu0 0.0
  %2581 = vmatprep.subr.mxu0 0.0
  %2582 = vmatpush2.msra.mxu0 0.0
  %2583 = vmatprep.subr.mxu0 0.0
  %2584 = vmatpush2.msra.mxu0 0.0
  %2585 = vmatprep.mubr.f32.mxu0 0.0
  %2586 = vmatmul.mubr.f32.gmra.mxu0 %v2501
  %v2587 = vpop.f32.mrf.mxu0
  %v2588 = vadd.f32 0.0, %v2587
  %v2589 = vpop.f32.mrf.mxu0
  %2590 = vmatprep.mubr.f32.mxu0 0.0
  %2591 = vmatmul.mubr.f32.gmra.mxu0 %v2504
  %v2592 = vpop.f32.mrf.mxu0
  %v2593 = vadd.f32 0.0, %v2592
  %v2594 = vpop.f32.mrf.mxu0
  %2595 = vmatprep.mubr.f32.mxu0 0.0
  %2596 = vmatmul.mubr.f32.gmra.mxu0 %v2507
  %v2597 = vpop.f32.mrf.mxu0
  %v2598 = vadd.f32 0.0, %v2597
  %v2599 = vpop.f32.mrf.mxu0
  %2600 = vmatprep.mubr.f32.mxu0 0.0
  %2601 = vmatmul.mubr.f32.gmra.mxu0 %v2510
  %v2602 = vpop.f32.mrf.mxu0
  %v2603 = vadd.f32 0.0, %v2602
  %v2604 = vpop.f32.mrf.mxu0
  %2605 = vmatprep.mubr.f32.mxu0 0.0
  %2606 = vmatmul.mubr.f32.gmra.mxu0 %v2513
  %v2607 = vpop.f32.mrf.mxu0
  %v2608 = vadd.f32 0.0, %v2607
  %v2609 = vpop.f32.mrf.mxu0
  %2610 = vmatprep.mubr.f32.mxu0 0.0
  %2611 = vmatmul.mubr.f32.gmra.mxu0 %v2516
  %v2612 = vpop.f32.mrf.mxu0
  %v2613 = vadd.f32 0.0, %v2612
  %v2614 = vpop.f32.mrf.mxu0
  %2615 = vmatprep.mubr.f32.mxu0 0.0
  %2616 = vmatmul.mubr.f32.gmra.mxu0 %v2519
  %v2617 = vpop.f32.mrf.mxu0
  %v2618 = vadd.f32 0.0, %v2617
  %v2619 = vpop.f32.mrf.mxu0
  %2620 = vdwg.mxu0
  %2621 = vrot.lane.b32.xlu0 %v2201, 112
  %v2622 = vpop.permute.xlu0 %2621
  %2623 = vrot.lane.b32.xlu0 %v2206, 112
  %v2624 = vpop.permute.xlu0 %2623
  %2625 = vrot.lane.b32.xlu0 %v2211, 112
  %v2626 = vpop.permute.xlu0 %2625
  %2627 = vrot.lane.b32.xlu0 %v2216, 112
  %v2628 = vpop.permute.xlu0 %2627
  %2629 = vrot.lane.b32.xlu0 %v2221, 112
  %v2630 = vpop.permute.xlu0 %2629
  %2631 = vrot.lane.b32.xlu0 %v2226, 112
  %v2632 = vpop.permute.xlu0 %2631
  %2633 = vrot.lane.b32.xlu0 %v2231, 112
  %v2634 = vpop.permute.xlu0 %2633
  %2635 = vrot.lane.b32.xlu0 %v2201, 80
  %v2636 = vpop.permute.xlu0 %2635
  %2637 = vrot.lane.b32.xlu0 %v2206, 80
  %v2638 = vpop.permute.xlu0 %2637
  %2639 = vrot.lane.b32.xlu0 %v2211, 80
  %v2640 = vpop.permute.xlu0 %2639
  %2641 = vrot.lane.b32.xlu0 %v2216, 80
  %v2642 = vpop.permute.xlu0 %2641
  %2643 = vrot.lane.b32.xlu0 %v2221, 80
  %v2644 = vpop.permute.xlu0 %2643
  %2645 = vrot.lane.b32.xlu0 %v2226, 80
  %v2646 = vpop.permute.xlu0 %2645
  %2647 = vrot.lane.b32.xlu0 %v2231, 80
  %v2648 = vpop.permute.xlu0 %2647
  %v2649 = vsel %vm492, %v2622, 0
  %v2651 = vsel %vm492, %v2624, 0
  %v2653 = vsel %vm492, %v2626, 0
  %v2655 = vsel %vm492, %v2628, 0
  %v2657 = vsel %vm492, %v2630, 0
  %v2659 = vsel %vm492, %v2632, 0
  %v2661 = vsel %vm492, %v2634, 0
  %v2663 = vsel %vm492, %v2636, 0
  %v2665 = vsel %vm492, %v2638, 0
  %v2667 = vsel %vm492, %v2640, 0
  %v2669 = vsel %vm492, %v2642, 0
  %v2671 = vsel %vm492, %v2644, 0
  %v2673 = vsel %vm492, %v2646, 0
  %v2675 = vsel %vm492, %v2648, 0
  %2677 = vmatprep.subr.mxu0 0.0
  %2678 = vmatpush1.xpose.msra.mxu0 0.0
  %2679 = vmatprep.subr.mxu0 0.0
  %2680 = vmatpush1.xpose.msra.mxu0 0.0
  %2681 = vmatprep.subr.mxu0 0.0
  %2682 = vmatpush1.xpose.msra.mxu0 0.0
  %2683 = vmatprep.subr.mxu0 0.0
  %2684 = vmatpush1.xpose.msra.mxu0 0.0
  %2685 = vmatprep.subr.mxu0 0.0
  %2686 = vmatpush1.xpose.msra.mxu0 0.0
  %2687 = vmatprep.subr.mxu0 0.0
  %2688 = vmatpush1.xpose.msra.mxu0 0.0
  %2689 = vmatprep.subr.mxu0 0.0
  %2690 = vmatpush1.xpose.msra.mxu0 0.0
  %2691 = vmatprep.subr.mxu0 0.0
  %2692 = vmatpush1.xpose.msra.mxu0 0.0
  %2693 = vmatprep.subr.mxu0 0.0
  %2694 = vmatpush1.xpose.msra.mxu0 0.0
  %2695 = vmatprep.subr.mxu0 0.0
  %2696 = vmatpush1.xpose.msra.mxu0 %v2675
  %2697 = vmatprep.subr.mxu0 0.0
  %2698 = vmatpush1.xpose.msra.mxu0 %v2673
  %2699 = vmatprep.subr.mxu0 0.0
  %2700 = vmatpush1.xpose.msra.mxu0 %v2671
  %2701 = vmatprep.subr.mxu0 0.0
  %2702 = vmatpush1.xpose.msra.mxu0 %v2669
  %2703 = vmatprep.subr.mxu0 0.0
  %2704 = vmatpush1.xpose.msra.mxu0 %v2667
  %2705 = vmatprep.subr.mxu0 0.0
  %2706 = vmatpush1.xpose.msra.mxu0 %v2665
  %2707 = vmatprep.subr.mxu0 0.0
  %2708 = vmatpush1.xpose.msra.mxu0 %v2663
  %2709 = vmatprep.subr.mxu0 0.0
  %2710 = vmatpush2.xpose.msra.mxu0 0.0
  %2711 = vmatprep.subr.mxu0 0.0
  %2712 = vmatpush2.xpose.msra.mxu0 0.0
  %2713 = vmatprep.subr.mxu0 0.0
  %2714 = vmatpush2.xpose.msra.mxu0 0.0
  %2715 = vmatprep.subr.mxu0 0.0
  %2716 = vmatpush2.xpose.msra.mxu0 0.0
  %2717 = vmatprep.subr.mxu0 0.0
  %2718 = vmatpush2.xpose.msra.mxu0 0.0
  %2719 = vmatprep.subr.mxu0 0.0
  %2720 = vmatpush2.xpose.msra.mxu0 0.0
  %2721 = vmatprep.subr.mxu0 0.0
  %2722 = vmatpush2.xpose.msra.mxu0 0.0
  %2723 = vmatprep.subr.mxu0 0.0
  %2724 = vmatpush2.xpose.msra.mxu0 0.0
  %2725 = vmatprep.subr.mxu0 0.0
  %2726 = vmatpush2.xpose.msra.mxu0 0.0
  %2727 = vmatprep.subr.mxu0 0.0
  %2728 = vmatpush2.xpose.msra.mxu0 0.0
  %2729 = vmatprep.subr.mxu0 0.0
  %2730 = vmatpush2.xpose.msra.mxu0 0.0
  %2731 = vmatprep.subr.mxu0 0.0
  %2732 = vmatpush2.xpose.msra.mxu0 0.0
  %2733 = vmatprep.subr.mxu0 0.0
  %2734 = vmatpush2.xpose.msra.mxu0 0.0
  %2735 = vmatprep.subr.mxu0 0.0
  %2736 = vmatpush2.xpose.msra.mxu0 0.0
  %2737 = vmatprep.subr.mxu0 0.0
  %2738 = vmatpush2.xpose.msra.mxu0 0.0
  %2739 = vmatprep.subr.mxu0 0.0
  %2740 = vmatpush2.xpose.msra.mxu0 0.0
  %2741 = vmatprep.mubr.f32.mxu0 0.0
  %2742 = vmatmul.mubr.f32.gmra.mxu0 %v2649
  %v2743 = vpop.f32.mrf.mxu0
  %v2744 = vadd.f32 0.0, %v2743
  %v2745 = vpop.f32.mrf.mxu0
  %2746 = vmatprep.mubr.f32.mxu0 0.0
  %2747 = vmatmul.mubr.f32.gmra.mxu0 %v2651
  %v2748 = vpop.f32.mrf.mxu0
  %v2749 = vadd.f32 0.0, %v2748
  %v2750 = vpop.f32.mrf.mxu0
  %2751 = vmatprep.mubr.f32.mxu0 0.0
  %2752 = vmatmul.mubr.f32.gmra.mxu0 %v2653
  %v2753 = vpop.f32.mrf.mxu0
  %v2754 = vadd.f32 0.0, %v2753
  %v2755 = vpop.f32.mrf.mxu0
  %2756 = vmatprep.mubr.f32.mxu0 0.0
  %2757 = vmatmul.mubr.f32.gmra.mxu0 %v2655
  %v2758 = vpop.f32.mrf.mxu0
  %v2759 = vadd.f32 0.0, %v2758
  %v2760 = vpop.f32.mrf.mxu0
  %2761 = vmatprep.mubr.f32.mxu0 0.0
  %2762 = vmatmul.mubr.f32.gmra.mxu0 %v2657
  %v2763 = vpop.f32.mrf.mxu0
  %v2764 = vadd.f32 0.0, %v2763
  %v2765 = vpop.f32.mrf.mxu0
  %2766 = vmatprep.mubr.f32.mxu0 0.0
  %2767 = vmatmul.mubr.f32.gmra.mxu0 %v2659
  %v2768 = vpop.f32.mrf.mxu0
  %v2769 = vadd.f32 0.0, %v2768
  %v2770 = vpop.f32.mrf.mxu0
  %2771 = vmatprep.mubr.f32.mxu0 0.0
  %2772 = vmatmul.mubr.f32.gmra.mxu0 %v2661
  %v2773 = vpop.f32.mrf.mxu0
  %v2774 = vadd.f32 0.0, %v2773
  %v2775 = vpop.f32.mrf.mxu0
  %2776 = vdwg.mxu0
  %v2777 = vmul.f32 %v2744, 0.25
  %v2778 = vmul.f32 %v2749, 0.25
  %v2779 = vmul.f32 %v2754, 0.25
  %v2780 = vmul.f32 %v2759, 0.25
  %v2781 = vmul.f32 %v2764, 0.25
  %v2782 = vmul.f32 %v2769, 0.25
  %v2783 = vmul.f32 %v2774, 0.25
  %v2784 = vsel %vm213, %v2777, -1e+30
  %v2785 = vsel %vm213, %v2778, -1e+30
  %v2786 = vsel %vm213, %v2779, -1e+30
  %v2787 = vsel %vm213, %v2780, -1e+30
  %v2788 = vsel %vm213, %v2781, -1e+30
  %v2789 = vsel %vm213, %v2782, -1e+30
  %v2790 = vsel %vm213, %v2783, -1e+30
  %v2791 = vsel %vm635, %v2784, -inf
  %2792 = vmax.xlane.f32.xlu0 %v2791
  %v2793 = vpop.xlane.xlu0 %2792
  %v2794 = vsel %vm635, %v2785, -inf
  %2795 = vmax.xlane.f32.xlu0 %v2794
  %v2796 = vpop.xlane.xlu0 %2795
  %v2797 = vsel %vm635, %v2786, -inf
  %2798 = vmax.xlane.f32.xlu0 %v2797
  %v2799 = vpop.xlane.xlu0 %2798
  %v2800 = vsel %vm635, %v2787, -inf
  %2801 = vmax.xlane.f32.xlu0 %v2800
  %v2802 = vpop.xlane.xlu0 %2801
  %v2803 = vsel %vm635, %v2788, -inf
  %2804 = vmax.xlane.f32.xlu0 %v2803
  %v2805 = vpop.xlane.xlu0 %2804
  %v2806 = vsel %vm635, %v2789, -inf
  %2807 = vmax.xlane.f32.xlu0 %v2806
  %v2808 = vpop.xlane.xlu0 %2807
  %v2809 = vsel %vm635, %v2790, -inf
  %2810 = vmax.xlane.f32.xlu0 %v2809
  %v2811 = vpop.xlane.xlu0 %2810
  %v2812 = vsub.f32 %v2784, %v2793
  %v2813 = vsub.f32 %v2785, %v2796
  %v2814 = vsub.f32 %v2786, %v2799
  %v2815 = vsub.f32 %v2787, %v2802
  %v2816 = vsub.f32 %v2788, %v2805
  %v2817 = vsub.f32 %v2789, %v2808
  %v2818 = vsub.f32 %v2790, %v2811
  %v2819 = vmul.f32 %v2812, 1.442695
  %v2820 = vpow.pop %v2819
  %v2821 = vmul.f32 %v2813, 1.442695
  %v2822 = vpow.pop %v2821
  %v2823 = vmul.f32 %v2814, 1.442695
  %v2824 = vpow.pop %v2823
  %v2825 = vmul.f32 %v2815, 1.442695
  %v2826 = vpow.pop %v2825
  %v2827 = vmul.f32 %v2816, 1.442695
  %v2828 = vpow.pop %v2827
  %v2829 = vmul.f32 %v2817, 1.442695
  %v2830 = vpow.pop %v2829
  %v2831 = vmul.f32 %v2818, 1.442695
  %v2832 = vpow.pop %v2831
  %v2833 = vsel %vm635, %v2820, 0.0
  %2834 = vadd.xlane.f32.xlu0 %v2833
  %v2835 = vpop.xlane.xlu0 %2834
  %v2836 = vsel %vm635, %v2822, 0.0
  %2837 = vadd.xlane.f32.xlu0 %v2836
  %v2838 = vpop.xlane.xlu0 %2837
  %v2839 = vsel %vm635, %v2824, 0.0
  %2840 = vadd.xlane.f32.xlu0 %v2839
  %v2841 = vpop.xlane.xlu0 %2840
  %v2842 = vsel %vm635, %v2826, 0.0
  %2843 = vadd.xlane.f32.xlu0 %v2842
  %v2844 = vpop.xlane.xlu0 %2843
  %v2845 = vsel %vm635, %v2828, 0.0
  %2846 = vadd.xlane.f32.xlu0 %v2845
  %v2847 = vpop.xlane.xlu0 %2846
  %v2848 = vsel %vm635, %v2830, 0.0
  %2849 = vadd.xlane.f32.xlu0 %v2848
  %v2850 = vpop.xlane.xlu0 %2849
  %v2851 = vsel %vm635, %v2832, 0.0
  %2852 = vadd.xlane.f32.xlu0 %v2851
  %v2853 = vpop.xlane.xlu0 %2852
  %v2854 = vrcp.pop %v2835
  %v2855 = vmul.f32 %v2820, %v2854
  %v2856 = vrcp.pop %v2838
  %v2857 = vmul.f32 %v2822, %v2856
  %v2858 = vrcp.pop %v2841
  %v2859 = vmul.f32 %v2824, %v2858
  %v2860 = vrcp.pop %v2844
  %v2861 = vmul.f32 %v2826, %v2860
  %v2862 = vrcp.pop %v2847
  %v2863 = vmul.f32 %v2828, %v2862
  %v2864 = vrcp.pop %v2850
  %v2865 = vmul.f32 %v2830, %v2864
  %v2866 = vrcp.pop %v2853
  %v2867 = vmul.f32 %v2832, %v2866
  %2868 = vrot.lane.b32.xlu0 %v2201, 48
  %v2869 = vpop.permute.xlu0 %2868
  %2870 = vrot.lane.b32.xlu0 %v2206, 48
  %v2871 = vpop.permute.xlu0 %2870
  %2872 = vrot.lane.b32.xlu0 %v2211, 48
  %v2873 = vpop.permute.xlu0 %2872
  %2874 = vrot.lane.b32.xlu0 %v2216, 48
  %v2875 = vpop.permute.xlu0 %2874
  %2876 = vrot.lane.b32.xlu0 %v2221, 48
  %v2877 = vpop.permute.xlu0 %2876
  %2878 = vrot.lane.b32.xlu0 %v2226, 48
  %v2879 = vpop.permute.xlu0 %2878
  %2880 = vrot.lane.b32.xlu0 %v2231, 48
  %v2881 = vpop.permute.xlu0 %2880
  %v2890 = vsel %vm635, %v2855, 0
  %v2893 = vsel %vm635, %v2857, 0
  %v2896 = vsel %vm635, %v2859, 0
  %v2899 = vsel %vm635, %v2861, 0
  %v2902 = vsel %vm635, %v2863, 0
  %v2905 = vsel %vm635, %v2865, 0
  %v2908 = vsel %vm635, %v2867, 0
  %2910 = vmatprep.subr.mxu0 0.0
  %2911 = vmatpush1.msra.mxu0 0.0
  %2912 = vmatprep.subr.mxu0 0.0
  %2913 = vmatpush1.msra.mxu0 0.0
  %2914 = vmatprep.subr.mxu0 0.0
  %2915 = vmatpush1.msra.mxu0 0.0
  %2916 = vmatprep.subr.mxu0 0.0
  %2917 = vmatpush1.msra.mxu0 0.0
  %2918 = vmatprep.subr.mxu0 0.0
  %2919 = vmatpush1.msra.mxu0 0.0
  %2920 = vmatprep.subr.mxu0 0.0
  %2921 = vmatpush1.msra.mxu0 0.0
  %2922 = vmatprep.subr.mxu0 0.0
  %2923 = vmatpush1.msra.mxu0 0.0
  %2924 = vmatprep.subr.mxu0 0.0
  %2925 = vmatpush1.msra.mxu0 0.0
  %2926 = vmatprep.subr.mxu0 0.0
  %2927 = vmatpush1.msra.mxu0 0.0
  %2928 = vmatprep.subr.mxu0 0.0
  %2929 = vmatpush1.msra.mxu0 %v2881
  %2930 = vmatprep.subr.mxu0 0.0
  %2931 = vmatpush1.msra.mxu0 %v2879
  %2932 = vmatprep.subr.mxu0 0.0
  %2933 = vmatpush1.msra.mxu0 %v2877
  %2934 = vmatprep.subr.mxu0 0.0
  %2935 = vmatpush1.msra.mxu0 %v2875
  %2936 = vmatprep.subr.mxu0 0.0
  %2937 = vmatpush1.msra.mxu0 %v2873
  %2938 = vmatprep.subr.mxu0 0.0
  %2939 = vmatpush1.msra.mxu0 %v2871
  %2940 = vmatprep.subr.mxu0 0.0
  %2941 = vmatpush1.msra.mxu0 %v2869
  %2942 = vmatprep.subr.mxu0 0.0
  %2943 = vmatpush2.msra.mxu0 0.0
  %2944 = vmatprep.subr.mxu0 0.0
  %2945 = vmatpush2.msra.mxu0 0.0
  %2946 = vmatprep.subr.mxu0 0.0
  %2947 = vmatpush2.msra.mxu0 0.0
  %2948 = vmatprep.subr.mxu0 0.0
  %2949 = vmatpush2.msra.mxu0 0.0
  %2950 = vmatprep.subr.mxu0 0.0
  %2951 = vmatpush2.msra.mxu0 0.0
  %2952 = vmatprep.subr.mxu0 0.0
  %2953 = vmatpush2.msra.mxu0 0.0
  %2954 = vmatprep.subr.mxu0 0.0
  %2955 = vmatpush2.msra.mxu0 0.0
  %2956 = vmatprep.subr.mxu0 0.0
  %2957 = vmatpush2.msra.mxu0 0.0
  %2958 = vmatprep.subr.mxu0 0.0
  %2959 = vmatpush2.msra.mxu0 0.0
  %2960 = vmatprep.subr.mxu0 0.0
  %2961 = vmatpush2.msra.mxu0 0.0
  %2962 = vmatprep.subr.mxu0 0.0
  %2963 = vmatpush2.msra.mxu0 0.0
  %2964 = vmatprep.subr.mxu0 0.0
  %2965 = vmatpush2.msra.mxu0 0.0
  %2966 = vmatprep.subr.mxu0 0.0
  %2967 = vmatpush2.msra.mxu0 0.0
  %2968 = vmatprep.subr.mxu0 0.0
  %2969 = vmatpush2.msra.mxu0 0.0
  %2970 = vmatprep.subr.mxu0 0.0
  %2971 = vmatpush2.msra.mxu0 0.0
  %2972 = vmatprep.subr.mxu0 0.0
  %2973 = vmatpush2.msra.mxu0 0.0
  %2974 = vmatprep.mubr.f32.mxu0 0.0
  %2975 = vmatmul.mubr.f32.gmra.mxu0 %v2890
  %v2976 = vpop.f32.mrf.mxu0
  %v2977 = vadd.f32 0.0, %v2976
  %v2978 = vpop.f32.mrf.mxu0
  %2979 = vmatprep.mubr.f32.mxu0 0.0
  %2980 = vmatmul.mubr.f32.gmra.mxu0 %v2893
  %v2981 = vpop.f32.mrf.mxu0
  %v2982 = vadd.f32 0.0, %v2981
  %v2983 = vpop.f32.mrf.mxu0
  %2984 = vmatprep.mubr.f32.mxu0 0.0
  %2985 = vmatmul.mubr.f32.gmra.mxu0 %v2896
  %v2986 = vpop.f32.mrf.mxu0
  %v2987 = vadd.f32 0.0, %v2986
  %v2988 = vpop.f32.mrf.mxu0
  %2989 = vmatprep.mubr.f32.mxu0 0.0
  %2990 = vmatmul.mubr.f32.gmra.mxu0 %v2899
  %v2991 = vpop.f32.mrf.mxu0
  %v2992 = vadd.f32 0.0, %v2991
  %v2993 = vpop.f32.mrf.mxu0
  %2994 = vmatprep.mubr.f32.mxu0 0.0
  %2995 = vmatmul.mubr.f32.gmra.mxu0 %v2902
  %v2996 = vpop.f32.mrf.mxu0
  %v2997 = vadd.f32 0.0, %v2996
  %v2998 = vpop.f32.mrf.mxu0
  %2999 = vmatprep.mubr.f32.mxu0 0.0
  %3000 = vmatmul.mubr.f32.gmra.mxu0 %v2905
  %v3001 = vpop.f32.mrf.mxu0
  %v3002 = vadd.f32 0.0, %v3001
  %v3003 = vpop.f32.mrf.mxu0
  %3004 = vmatprep.mubr.f32.mxu0 0.0
  %3005 = vmatmul.mubr.f32.gmra.mxu0 %v2908
  %v3006 = vpop.f32.mrf.mxu0
  %v3007 = vadd.f32 0.0, %v3006
  %v3008 = vpop.f32.mrf.mxu0
  %3009 = vdwg.mxu0
  %v3011 = vsel %vm492, %v2977, 0
  %v3014 = vsel %vm492, %v2982, 0
  %v3017 = vsel %vm492, %v2987, 0
  %v3020 = vsel %vm492, %v2992, 0
  %v3023 = vsel %vm492, %v2997, 0
  %v3026 = vsel %vm492, %v3002, 0
  %v3029 = vsel %vm492, %v3007, 0
  %3031 = vmatprep.subr.mxu0 0.0
  %3032 = vmatpush1.msra.mxu0 0.0
  %3033 = vmatprep.subr.mxu0 0.0
  %3034 = vmatpush1.msra.mxu0 0.0
  %3035 = vmatprep.subr.mxu0 0.0
  %3036 = vmatpush1.msra.mxu0 0.0
  %3037 = vmatprep.subr.mxu0 0.0
  %3038 = vmatpush1.msra.mxu0 0.0
  %3039 = vmatprep.subr.mxu0 0.0
  %3040 = vmatpush1.msra.mxu0 0.0
  %3041 = vmatprep.subr.mxu0 0.0
  %3042 = vmatpush1.msra.mxu0 0.0
  %3043 = vmatprep.subr.mxu0 0.0
  %3044 = vmatpush1.msra.mxu0 0.0
  %3045 = vmatprep.subr.mxu0 0.0
  %3046 = vmatpush1.msra.mxu0 0.0
  %3047 = vmatprep.subr.mxu0 0.0
  %3048 = vmatpush1.msra.mxu0 0.0
  %3049 = vmatprep.subr.mxu0 0.0
  %3050 = vmatpush1.msra.mxu0 0.0
  %3051 = vmatprep.subr.mxu0 0.0
  %3052 = vmatpush1.msra.mxu0 0.0
  %3053 = vmatprep.subr.mxu0 0.0
  %3054 = vmatpush1.msra.mxu0 0.0
  %3055 = vmatprep.subr.mxu0 0.0
  %3056 = vmatpush1.msra.mxu0 0.0
  %3057 = vmatprep.subr.mxu0 0.0
  %3058 = vmatpush1.msra.mxu0 0.0
  %3059 = vmatprep.subr.mxu0 0.0
  %3060 = vmatpush1.msra.mxu0 %v2238
  %3061 = vmatprep.subr.mxu0 0.0
  %3062 = vmatpush1.msra.mxu0 %v2237
  %3063 = vmatprep.subr.mxu0 0.0
  %3064 = vmatpush2.msra.mxu0 0.0
  %3065 = vmatprep.subr.mxu0 0.0
  %3066 = vmatpush2.msra.mxu0 0.0
  %3067 = vmatprep.subr.mxu0 0.0
  %3068 = vmatpush2.msra.mxu0 0.0
  %3069 = vmatprep.subr.mxu0 0.0
  %3070 = vmatpush2.msra.mxu0 0.0
  %3071 = vmatprep.subr.mxu0 0.0
  %3072 = vmatpush2.msra.mxu0 0.0
  %3073 = vmatprep.subr.mxu0 0.0
  %3074 = vmatpush2.msra.mxu0 0.0
  %3075 = vmatprep.subr.mxu0 0.0
  %3076 = vmatpush2.msra.mxu0 0.0
  %3077 = vmatprep.subr.mxu0 0.0
  %3078 = vmatpush2.msra.mxu0 0.0
  %3079 = vmatprep.subr.mxu0 0.0
  %3080 = vmatpush2.msra.mxu0 0.0
  %3081 = vmatprep.subr.mxu0 0.0
  %3082 = vmatpush2.msra.mxu0 0.0
  %3083 = vmatprep.subr.mxu0 0.0
  %3084 = vmatpush2.msra.mxu0 0.0
  %3085 = vmatprep.subr.mxu0 0.0
  %3086 = vmatpush2.msra.mxu0 0.0
  %3087 = vmatprep.subr.mxu0 0.0
  %3088 = vmatpush2.msra.mxu0 0.0
  %3089 = vmatprep.subr.mxu0 0.0
  %3090 = vmatpush2.msra.mxu0 0.0
  %3091 = vmatprep.subr.mxu0 0.0
  %3092 = vmatpush2.msra.mxu0 0.0
  %3093 = vmatprep.subr.mxu0 0.0
  %3094 = vmatpush2.msra.mxu0 0.0
  %3095 = vmatprep.mubr.f32.mxu0 0.0
  %3096 = vmatmul.mubr.f32.gmra.mxu0 %v3011
  %v3097 = vpop.f32.mrf.mxu0
  %v3098 = vadd.f32 0.0, %v3097
  %v3099 = vpop.f32.mrf.mxu0
  %3100 = vmatprep.mubr.f32.mxu0 0.0
  %3101 = vmatmul.mubr.f32.gmra.mxu0 %v3014
  %v3102 = vpop.f32.mrf.mxu0
  %v3103 = vadd.f32 0.0, %v3102
  %v3104 = vpop.f32.mrf.mxu0
  %3105 = vmatprep.mubr.f32.mxu0 0.0
  %3106 = vmatmul.mubr.f32.gmra.mxu0 %v3017
  %v3107 = vpop.f32.mrf.mxu0
  %v3108 = vadd.f32 0.0, %v3107
  %v3109 = vpop.f32.mrf.mxu0
  %3110 = vmatprep.mubr.f32.mxu0 0.0
  %3111 = vmatmul.mubr.f32.gmra.mxu0 %v3020
  %v3112 = vpop.f32.mrf.mxu0
  %v3113 = vadd.f32 0.0, %v3112
  %v3114 = vpop.f32.mrf.mxu0
  %3115 = vmatprep.mubr.f32.mxu0 0.0
  %3116 = vmatmul.mubr.f32.gmra.mxu0 %v3023
  %v3117 = vpop.f32.mrf.mxu0
  %v3118 = vadd.f32 0.0, %v3117
  %v3119 = vpop.f32.mrf.mxu0
  %3120 = vmatprep.mubr.f32.mxu0 0.0
  %3121 = vmatmul.mubr.f32.gmra.mxu0 %v3026
  %v3122 = vpop.f32.mrf.mxu0
  %v3123 = vadd.f32 0.0, %v3122
  %v3124 = vpop.f32.mrf.mxu0
  %3125 = vmatprep.mubr.f32.mxu0 0.0
  %3126 = vmatmul.mubr.f32.gmra.mxu0 %v3029
  %v3127 = vpop.f32.mrf.mxu0
  %v3128 = vadd.f32 0.0, %v3127
  %v3129 = vpop.f32.mrf.mxu0
  %3130 = vdwg.mxu0
  %v3132 = vsel %vm492, %v2588, 0
  %v3135 = vsel %vm492, %v2593, 0
  %v3138 = vsel %vm492, %v2598, 0
  %v3141 = vsel %vm492, %v2603, 0
  %v3144 = vsel %vm492, %v2608, 0
  %v3147 = vsel %vm492, %v2613, 0
  %v3150 = vsel %vm492, %v2618, 0
  %3152 = vmatprep.subr.mxu0 0.0
  %3153 = vmatpush1.msra.mxu0 0.0
  %3154 = vmatprep.subr.mxu0 0.0
  %3155 = vmatpush1.msra.mxu0 0.0
  %3156 = vmatprep.subr.mxu0 0.0
  %3157 = vmatpush1.msra.mxu0 0.0
  %3158 = vmatprep.subr.mxu0 0.0
  %3159 = vmatpush1.msra.mxu0 0.0
  %3160 = vmatprep.subr.mxu0 0.0
  %3161 = vmatpush1.msra.mxu0 0.0
  %3162 = vmatprep.subr.mxu0 0.0
  %3163 = vmatpush1.msra.mxu0 0.0
  %3164 = vmatprep.subr.mxu0 0.0
  %3165 = vmatpush1.msra.mxu0 0.0
  %3166 = vmatprep.subr.mxu0 0.0
  %3167 = vmatpush1.msra.mxu0 0.0
  %3168 = vmatprep.subr.mxu0 0.0
  %3169 = vmatpush1.msra.mxu0 0.0
  %3170 = vmatprep.subr.mxu0 0.0
  %3171 = vmatpush1.msra.mxu0 0.0
  %3172 = vmatprep.subr.mxu0 0.0
  %3173 = vmatpush1.msra.mxu0 0.0
  %3174 = vmatprep.subr.mxu0 0.0
  %3175 = vmatpush1.msra.mxu0 0.0
  %3176 = vmatprep.subr.mxu0 0.0
  %3177 = vmatpush1.msra.mxu0 0.0
  %3178 = vmatprep.subr.mxu0 0.0
  %3179 = vmatpush1.msra.mxu0 0.0
  %3180 = vmatprep.subr.mxu0 0.0
  %3181 = vmatpush1.msra.mxu0 %v2236
  %3182 = vmatprep.subr.mxu0 0.0
  %3183 = vmatpush1.msra.mxu0 %v2235
  %3184 = vmatprep.subr.mxu0 0.0
  %3185 = vmatpush2.msra.mxu0 0.0
  %3186 = vmatprep.subr.mxu0 0.0
  %3187 = vmatpush2.msra.mxu0 0.0
  %3188 = vmatprep.subr.mxu0 0.0
  %3189 = vmatpush2.msra.mxu0 0.0
  %3190 = vmatprep.subr.mxu0 0.0
  %3191 = vmatpush2.msra.mxu0 0.0
  %3192 = vmatprep.subr.mxu0 0.0
  %3193 = vmatpush2.msra.mxu0 0.0
  %3194 = vmatprep.subr.mxu0 0.0
  %3195 = vmatpush2.msra.mxu0 0.0
  %3196 = vmatprep.subr.mxu0 0.0
  %3197 = vmatpush2.msra.mxu0 0.0
  %3198 = vmatprep.subr.mxu0 0.0
  %3199 = vmatpush2.msra.mxu0 0.0
  %3200 = vmatprep.subr.mxu0 0.0
  %3201 = vmatpush2.msra.mxu0 0.0
  %3202 = vmatprep.subr.mxu0 0.0
  %3203 = vmatpush2.msra.mxu0 0.0
  %3204 = vmatprep.subr.mxu0 0.0
  %3205 = vmatpush2.msra.mxu0 0.0
  %3206 = vmatprep.subr.mxu0 0.0
  %3207 = vmatpush2.msra.mxu0 0.0
  %3208 = vmatprep.subr.mxu0 0.0
  %3209 = vmatpush2.msra.mxu0 0.0
  %3210 = vmatprep.subr.mxu0 0.0
  %3211 = vmatpush2.msra.mxu0 0.0
  %3212 = vmatprep.subr.mxu0 0.0
  %3213 = vmatpush2.msra.mxu0 0.0
  %3214 = vmatprep.subr.mxu0 0.0
  %3215 = vmatpush2.msra.mxu0 0.0
  %3216 = vmatprep.mubr.f32.mxu0 0.0
  %3217 = vmatmul.mubr.f32.gmra.mxu0 %v3132
  %v3218 = vpop.f32.mrf.mxu0
  %v3219 = vadd.f32 %v3098, %v3218
  %v3220 = vpop.f32.mrf.mxu0
  %3221 = vmatprep.mubr.f32.mxu0 0.0
  %3222 = vmatmul.mubr.f32.gmra.mxu0 %v3135
  %v3223 = vpop.f32.mrf.mxu0
  %v3224 = vadd.f32 %v3103, %v3223
  %v3225 = vpop.f32.mrf.mxu0
  %3226 = vmatprep.mubr.f32.mxu0 0.0
  %3227 = vmatmul.mubr.f32.gmra.mxu0 %v3138
  %v3228 = vpop.f32.mrf.mxu0
  %v3229 = vadd.f32 %v3108, %v3228
  %v3230 = vpop.f32.mrf.mxu0
  %3231 = vmatprep.mubr.f32.mxu0 0.0
  %3232 = vmatmul.mubr.f32.gmra.mxu0 %v3141
  %v3233 = vpop.f32.mrf.mxu0
  %v3234 = vadd.f32 %v3113, %v3233
  %v3235 = vpop.f32.mrf.mxu0
  %3236 = vmatprep.mubr.f32.mxu0 0.0
  %3237 = vmatmul.mubr.f32.gmra.mxu0 %v3144
  %v3238 = vpop.f32.mrf.mxu0
  %v3239 = vadd.f32 %v3118, %v3238
  %v3240 = vpop.f32.mrf.mxu0
  %3241 = vmatprep.mubr.f32.mxu0 0.0
  %3242 = vmatmul.mubr.f32.gmra.mxu0 %v3147
  %v3243 = vpop.f32.mrf.mxu0
  %v3244 = vadd.f32 %v3123, %v3243
  %v3245 = vpop.f32.mrf.mxu0
  %3246 = vmatprep.mubr.f32.mxu0 0.0
  %3247 = vmatmul.mubr.f32.gmra.mxu0 %v3150
  %v3248 = vpop.f32.mrf.mxu0
  %v3249 = vadd.f32 %v3128, %v3248
  %v3250 = vpop.f32.mrf.mxu0
  %3251 = vdwg.mxu0
  %s3252 = scalar_lea.vmem %s8, 1
  %v3253 = vld [vmem:[%s3252] sm:$0x1]
  %v3255 = vlaneseq
  %v3256 = vshrl.u32 %v3255, 7
  %v3257 = vsub.s32 0, %v3256
  %v3258 = vrot.slane %v3253, %v3257
  %v3260 = vadd.f32 %v3219, %v3258
  %v3261 = vadd.f32 %v3224, %v3258
  %v3262 = vadd.f32 %v3229, %v3258
  %v3263 = vadd.f32 %v3234, %v3258
  %v3264 = vadd.f32 %v3239, %v3258
  %v3265 = vadd.f32 %v3244, %v3258
  %v3266 = vadd.f32 %v3249, %v3258
  %s3267 = scalar_lea.vmem %s9, 1
  %v3268 = vld [vmem:[%s3267] sm:$0x1]
  %v3270 = vlaneseq
  %v3271 = vshrl.u32 %v3270, 7
  %v3272 = vsub.s32 0, %v3271
  %v3273 = vrot.slane %v3268, %v3272
  %v3275 = vmul.f32 %v3273, %v3260
  %v3276 = vmul.f32 %v3273, %v3261
  %v3277 = vmul.f32 %v3273, %v3262
  %v3278 = vmul.f32 %v3273, %v3263
  %v3279 = vmul.f32 %v3273, %v3264
  %v3280 = vmul.f32 %v3273, %v3265
  %v3281 = vmul.f32 %v3273, %v3266
  %v3282 = vadd.f32 %v1972, %v3275
  %v3283 = vadd.f32 %v1973, %v3276
  %v3284 = vadd.f32 %v1974, %v3277
  %v3285 = vadd.f32 %v1975, %v3278
  %v3286 = vadd.f32 %v1976, %v3279
  %v3287 = vadd.f32 %v1977, %v3280
  %v3288 = vadd.f32 %v1978, %v3281
  %s3289 = scalar_lea.vmem %s10, 1
  %v3290 = vld [vmem:[%s3289] sm:$0x1]
  %s3291 = scalar_lea.vmem %s11, 1
  %v3292 = vld [vmem:[%s3291] sm:$0x1]
  %v3293 = vsel %vm216, %v3282, 0.0
  %3294 = vadd.xlane.f32.xlu0 %v3293
  %v3295 = vpop.xlane.xlu0 %3294
  %v3296 = vsel %vm216, %v3283, 0.0
  %3297 = vadd.xlane.f32.xlu0 %v3296
  %v3298 = vpop.xlane.xlu0 %3297
  %v3299 = vsel %vm216, %v3284, 0.0
  %3300 = vadd.xlane.f32.xlu0 %v3299
  %v3301 = vpop.xlane.xlu0 %3300
  %v3302 = vsel %vm216, %v3285, 0.0
  %3303 = vadd.xlane.f32.xlu0 %v3302
  %v3304 = vpop.xlane.xlu0 %3303
  %v3305 = vsel %vm216, %v3286, 0.0
  %3306 = vadd.xlane.f32.xlu0 %v3305
  %v3307 = vpop.xlane.xlu0 %3306
  %v3308 = vsel %vm216, %v3287, 0.0
  %3309 = vadd.xlane.f32.xlu0 %v3308
  %v3310 = vpop.xlane.xlu0 %3309
  %v3311 = vsel %vm216, %v3288, 0.0
  %3312 = vadd.xlane.f32.xlu0 %v3311
  %v3313 = vpop.xlane.xlu0 %3312
  %v3314 = vmul.f32 %v3295, %v238
  %v3315 = vmul.f32 %v3298, %v238
  %v3316 = vmul.f32 %v3301, %v238
  %v3317 = vmul.f32 %v3304, %v238
  %v3318 = vmul.f32 %v3307, %v238
  %v3319 = vmul.f32 %v3310, %v238
  %v3320 = vmul.f32 %v3313, %v238
  %v3321 = vsub.f32 %v3282, %v3314
  %v3322 = vsub.f32 %v3283, %v3315
  %v3323 = vsub.f32 %v3284, %v3316
  %v3324 = vsub.f32 %v3285, %v3317
  %v3325 = vsub.f32 %v3286, %v3318
  %v3326 = vsub.f32 %v3287, %v3319
  %v3327 = vsub.f32 %v3288, %v3320
  %v3328 = vmul.f32 %v3321, %v3321
  %v3329 = vmul.f32 %v3322, %v3322
  %v3330 = vmul.f32 %v3323, %v3323
  %v3331 = vmul.f32 %v3324, %v3324
  %v3332 = vmul.f32 %v3325, %v3325
  %v3333 = vmul.f32 %v3326, %v3326
  %v3334 = vmul.f32 %v3327, %v3327
  %v3335 = vsel %vm216, %v3328, 0.0
  %3336 = vadd.xlane.f32.xlu0 %v3335
  %v3337 = vpop.xlane.xlu0 %3336
  %v3338 = vsel %vm216, %v3329, 0.0
  %3339 = vadd.xlane.f32.xlu0 %v3338
  %v3340 = vpop.xlane.xlu0 %3339
  %v3341 = vsel %vm216, %v3330, 0.0
  %3342 = vadd.xlane.f32.xlu0 %v3341
  %v3343 = vpop.xlane.xlu0 %3342
  %v3344 = vsel %vm216, %v3331, 0.0
  %3345 = vadd.xlane.f32.xlu0 %v3344
  %v3346 = vpop.xlane.xlu0 %3345
  %v3347 = vsel %vm216, %v3332, 0.0
  %3348 = vadd.xlane.f32.xlu0 %v3347
  %v3349 = vpop.xlane.xlu0 %3348
  %v3350 = vsel %vm216, %v3333, 0.0
  %3351 = vadd.xlane.f32.xlu0 %v3350
  %v3352 = vpop.xlane.xlu0 %3351
  %v3353 = vsel %vm216, %v3334, 0.0
  %3354 = vadd.xlane.f32.xlu0 %v3353
  %v3355 = vpop.xlane.xlu0 %3354
  %v3356 = vmul.f32 %v3337, %v238
  %v3357 = vmul.f32 %v3340, %v238
  %v3358 = vmul.f32 %v3343, %v238
  %v3359 = vmul.f32 %v3346, %v238
  %v3360 = vmul.f32 %v3349, %v238
  %v3361 = vmul.f32 %v3352, %v238
  %v3362 = vmul.f32 %v3355, %v238
  %v3363 = vadd.f32 %v3356, 1e-06
  %v3364 = vadd.f32 %v3357, 1e-06
  %v3365 = vadd.f32 %v3358, 1e-06
  %v3366 = vadd.f32 %v3359, 1e-06
  %v3367 = vadd.f32 %v3360, 1e-06
  %v3368 = vadd.f32 %v3361, 1e-06
  %v3369 = vadd.f32 %v3362, 1e-06
  %v3370 = vrsqrt.pop %v3363
  %v3371 = vrsqrt.pop %v3364
  %v3372 = vrsqrt.pop %v3365
  %v3373 = vrsqrt.pop %v3366
  %v3374 = vrsqrt.pop %v3367
  %v3375 = vrsqrt.pop %v3368
  %v3376 = vrsqrt.pop %v3369
  %v3377 = vmul.f32 %v3321, %v3370
  %v3378 = vmul.f32 %v3322, %v3371
  %v3379 = vmul.f32 %v3323, %v3372
  %v3380 = vmul.f32 %v3324, %v3373
  %v3381 = vmul.f32 %v3325, %v3374
  %v3382 = vmul.f32 %v3326, %v3375
  %v3383 = vmul.f32 %v3327, %v3376
  %v3385 = vlaneseq
  %v3386 = vshrl.u32 %v3385, 7
  %v3387 = vsub.s32 0, %v3386
  %v3388 = vrot.slane %v3290, %v3387
  %v3390 = vmul.f32 %v3377, %v3388
  %v3391 = vmul.f32 %v3378, %v3388
  %v3392 = vmul.f32 %v3379, %v3388
  %v3393 = vmul.f32 %v3380, %v3388
  %v3394 = vmul.f32 %v3381, %v3388
  %v3395 = vmul.f32 %v3382, %v3388
  %v3396 = vmul.f32 %v3383, %v3388
  %v3398 = vlaneseq
  %v3399 = vshrl.u32 %v3398, 7
  %v3400 = vsub.s32 0, %v3399
  %v3401 = vrot.slane %v3292, %v3400
  %v3403 = vadd.f32 %v3390, %v3401
  %v3404 = vadd.f32 %v3391, %v3401
  %v3405 = vadd.f32 %v3392, %v3401
  %v3406 = vadd.f32 %v3393, %v3401
  %v3407 = vadd.f32 %v3394, %v3401
  %v3408 = vadd.f32 %v3395, %v3401
  %v3409 = vadd.f32 %v3396, %v3401
  %s3410 = scalar_lea.vmem %s12, 32
  %v3411 = vld [vmem:[%s3410] sm:$0xff]
  %v3412 = vld [vmem:[%s3410 + $0x8] sm:$0xff]
  %v3413 = vld [vmem:[%s3410 + $0x10] sm:$0xff]
  %v3414 = vld [vmem:[%s3410 + $0x18] sm:$0xff]
  %s3415 = scalar_lea.vmem %s13, 1
  %v3416 = vld [vmem:[%s3415] sm:$0x1]
  %v3418 = vlaneseq
  %v3419 = vshrl.u32 %v3418, 7
  %v3420 = vsub.s32 0, %v3419
  %v3421 = vrot.slane %v3416, %v3420
  %v3424 = vsel %vm216, %v3403, 0
  %v3427 = vsel %vm216, %v3404, 0
  %v3430 = vsel %vm216, %v3405, 0
  %v3433 = vsel %vm216, %v3406, 0
  %v3436 = vsel %vm216, %v3407, 0
  %v3439 = vsel %vm216, %v3408, 0
  %v3442 = vsel %vm216, %v3409, 0
  %3444 = vmatprep.subr.mxu0 0.0
  %3445 = vmatpush1.msra.mxu0 0.0
  %3446 = vmatprep.subr.mxu0 0.0
  %3447 = vmatpush1.msra.mxu0 0.0
  %3448 = vmatprep.subr.mxu0 0.0
  %3449 = vmatpush1.msra.mxu0 0.0
  %3450 = vmatprep.subr.mxu0 0.0
  %3451 = vmatpush1.msra.mxu0 0.0
  %3452 = vmatprep.subr.mxu0 0.0
  %3453 = vmatpush1.msra.mxu0 0.0
  %3454 = vmatprep.subr.mxu0 0.0
  %3455 = vmatpush1.msra.mxu0 0.0
  %3456 = vmatprep.subr.mxu0 0.0
  %3457 = vmatpush1.msra.mxu0 0.0
  %3458 = vmatprep.subr.mxu0 0.0
  %3459 = vmatpush1.msra.mxu0 0.0
  %3460 = vmatprep.subr.mxu0 0.0
  %3461 = vmatpush1.msra.mxu0 0.0
  %3462 = vmatprep.subr.mxu0 0.0
  %3463 = vmatpush1.msra.mxu0 0.0
  %3464 = vmatprep.subr.mxu0 0.0
  %3465 = vmatpush1.msra.mxu0 0.0
  %3466 = vmatprep.subr.mxu0 0.0
  %3467 = vmatpush1.msra.mxu0 0.0
  %3468 = vmatprep.subr.mxu0 0.0
  %3469 = vmatpush1.msra.mxu0 %v3414
  %3470 = vmatprep.subr.mxu0 0.0
  %3471 = vmatpush1.msra.mxu0 %v3413
  %3472 = vmatprep.subr.mxu0 0.0
  %3473 = vmatpush1.msra.mxu0 %v3412
  %3474 = vmatprep.subr.mxu0 0.0
  %3475 = vmatpush1.msra.mxu0 %v3411
  %3476 = vmatprep.subr.mxu0 0.0
  %3477 = vmatpush2.msra.mxu0 0.0
  %3478 = vmatprep.subr.mxu0 0.0
  %3479 = vmatpush2.msra.mxu0 0.0
  %3480 = vmatprep.subr.mxu0 0.0
  %3481 = vmatpush2.msra.mxu0 0.0
  %3482 = vmatprep.subr.mxu0 0.0
  %3483 = vmatpush2.msra.mxu0 0.0
  %3484 = vmatprep.subr.mxu0 0.0
  %3485 = vmatpush2.msra.mxu0 0.0
  %3486 = vmatprep.subr.mxu0 0.0
  %3487 = vmatpush2.msra.mxu0 0.0
  %3488 = vmatprep.subr.mxu0 0.0
  %3489 = vmatpush2.msra.mxu0 0.0
  %3490 = vmatprep.subr.mxu0 0.0
  %3491 = vmatpush2.msra.mxu0 0.0
  %3492 = vmatprep.subr.mxu0 0.0
  %3493 = vmatpush2.msra.mxu0 0.0
  %3494 = vmatprep.subr.mxu0 0.0
  %3495 = vmatpush2.msra.mxu0 0.0
  %3496 = vmatprep.subr.mxu0 0.0
  %3497 = vmatpush2.msra.mxu0 0.0
  %3498 = vmatprep.subr.mxu0 0.0
  %3499 = vmatpush2.msra.mxu0 0.0
  %3500 = vmatprep.subr.mxu0 0.0
  %3501 = vmatpush2.msra.mxu0 0.0
  %3502 = vmatprep.subr.mxu0 0.0
  %3503 = vmatpush2.msra.mxu0 0.0
  %3504 = vmatprep.subr.mxu0 0.0
  %3505 = vmatpush2.msra.mxu0 0.0
  %3506 = vmatprep.subr.mxu0 0.0
  %3507 = vmatpush2.msra.mxu0 0.0
  %3508 = vmatprep.mubr.f32.mxu0 0.0
  %3509 = vmatmul.mubr.f32.gmra.mxu0 %v3424
  %v3510 = vpop.f32.mrf.mxu0
  %v3511 = vadd.f32 %v3421, %v3510
  %v3512 = vpop.f32.mrf.mxu0
  %3513 = vmatprep.mubr.f32.mxu0 0.0
  %3514 = vmatmul.mubr.f32.gmra.mxu0 %v3427
  %v3515 = vpop.f32.mrf.mxu0
  %v3516 = vadd.f32 %v3421, %v3515
  %v3517 = vpop.f32.mrf.mxu0
  %3518 = vmatprep.mubr.f32.mxu0 0.0
  %3519 = vmatmul.mubr.f32.gmra.mxu0 %v3430
  %v3520 = vpop.f32.mrf.mxu0
  %v3521 = vadd.f32 %v3421, %v3520
  %v3522 = vpop.f32.mrf.mxu0
  %3523 = vmatprep.mubr.f32.mxu0 0.0
  %3524 = vmatmul.mubr.f32.gmra.mxu0 %v3433
  %v3525 = vpop.f32.mrf.mxu0
  %v3526 = vadd.f32 %v3421, %v3525
  %v3527 = vpop.f32.mrf.mxu0
  %3528 = vmatprep.mubr.f32.mxu0 0.0
  %3529 = vmatmul.mubr.f32.gmra.mxu0 %v3436
  %v3530 = vpop.f32.mrf.mxu0
  %v3531 = vadd.f32 %v3421, %v3530
  %v3532 = vpop.f32.mrf.mxu0
  %3533 = vmatprep.mubr.f32.mxu0 0.0
  %3534 = vmatmul.mubr.f32.gmra.mxu0 %v3439
  %v3535 = vpop.f32.mrf.mxu0
  %v3536 = vadd.f32 %v3421, %v3535
  %v3537 = vpop.f32.mrf.mxu0
  %3538 = vmatprep.mubr.f32.mxu0 0.0
  %3539 = vmatmul.mubr.f32.gmra.mxu0 %v3442
  %v3540 = vpop.f32.mrf.mxu0
  %v3541 = vadd.f32 %v3421, %v3540
  %v3542 = vpop.f32.mrf.mxu0
  %3543 = vdwg.mxu0
  %v3544 = vmul.f32 %v3511, %v3511
  %v3545 = vmul.f32 %v3516, %v3516
  %v3546 = vmul.f32 %v3521, %v3521
  %v3547 = vmul.f32 %v3526, %v3526
  %v3548 = vmul.f32 %v3531, %v3531
  %v3549 = vmul.f32 %v3536, %v3536
  %v3550 = vmul.f32 %v3541, %v3541
  %v3551 = vmul.f32 %v3511, %v3544
  %v3552 = vmul.f32 %v3516, %v3545
  %v3553 = vmul.f32 %v3521, %v3546
  %v3554 = vmul.f32 %v3526, %v3547
  %v3555 = vmul.f32 %v3531, %v3548
  %v3556 = vmul.f32 %v3536, %v3549
  %v3557 = vmul.f32 %v3541, %v3550
  %v3558 = vmul.f32 %v3551, 0.044715
  %v3559 = vmul.f32 %v3552, 0.044715
  %v3560 = vmul.f32 %v3553, 0.044715
  %v3561 = vmul.f32 %v3554, 0.044715
  %v3562 = vmul.f32 %v3555, 0.044715
  %v3563 = vmul.f32 %v3556, 0.044715
  %v3564 = vmul.f32 %v3557, 0.044715
  %v3565 = vadd.f32 %v3511, %v3558
  %v3566 = vadd.f32 %v3516, %v3559
  %v3567 = vadd.f32 %v3521, %v3560
  %v3568 = vadd.f32 %v3526, %v3561
  %v3569 = vadd.f32 %v3531, %v3562
  %v3570 = vadd.f32 %v3536, %v3563
  %v3571 = vadd.f32 %v3541, %v3564
  %v3572 = vmul.f32 %v3565, 0.7978846
  %v3573 = vmul.f32 %v3566, 0.7978846
  %v3574 = vmul.f32 %v3567, 0.7978846
  %v3575 = vmul.f32 %v3568, 0.7978846
  %v3576 = vmul.f32 %v3569, 0.7978846
  %v3577 = vmul.f32 %v3570, 0.7978846
  %v3578 = vmul.f32 %v3571, 0.7978846
  %v3579 = vtanh.pop %v3572
  %v3580 = vtanh.pop %v3573
  %v3581 = vtanh.pop %v3574
  %v3582 = vtanh.pop %v3575
  %v3583 = vtanh.pop %v3576
  %v3584 = vtanh.pop %v3577
  %v3585 = vtanh.pop %v3578
  %v3586 = vadd.f32 %v3579, 1.0
  %v3587 = vadd.f32 %v3580, 1.0
  %v3588 = vadd.f32 %v3581, 1.0
  %v3589 = vadd.f32 %v3582, 1.0
  %v3590 = vadd.f32 %v3583, 1.0
  %v3591 = vadd.f32 %v3584, 1.0
  %v3592 = vadd.f32 %v3585, 1.0
  %v3593 = vmul.f32 %v3586, 0.5
  %v3594 = vmul.f32 %v3587, 0.5
  %v3595 = vmul.f32 %v3588, 0.5
  %v3596 = vmul.f32 %v3589, 0.5
  %v3597 = vmul.f32 %v3590, 0.5
  %v3598 = vmul.f32 %v3591, 0.5
  %v3599 = vmul.f32 %v3592, 0.5
  %v3600 = vmul.f32 %v3511, %v3593
  %v3601 = vmul.f32 %v3516, %v3594
  %v3602 = vmul.f32 %v3521, %v3595
  %v3603 = vmul.f32 %v3526, %v3596
  %v3604 = vmul.f32 %v3531, %v3597
  %v3605 = vmul.f32 %v3536, %v3598
  %v3606 = vmul.f32 %v3541, %v3599
  %s3607 = scalar_lea.vmem %s14, 128
  %v3608 = vld [vmem:[%s3607] sm:$0xff]
  %v3609 = vld [vmem:[%s3607 + $0x8] sm:$0xff]
  %v3610 = vld [vmem:[%s3607 + $0x10] sm:$0xff]
  %v3611 = vld [vmem:[%s3607 + $0x18] sm:$0xff]
  %v3612 = vld [vmem:[%s3607 + $0x20] sm:$0xff]
  %v3613 = vld [vmem:[%s3607 + $0x28] sm:$0xff]
  %v3614 = vld [vmem:[%s3607 + $0x30] sm:$0xff]
  %v3615 = vld [vmem:[%s3607 + $0x38] sm:$0xff]
  %v3616 = vld [vmem:[%s3607 + $0x40] sm:$0xff]
  %v3617 = vld [vmem:[%s3607 + $0x48] sm:$0xff]
  %v3618 = vld [vmem:[%s3607 + $0x50] sm:$0xff]
  %v3619 = vld [vmem:[%s3607 + $0x58] sm:$0xff]
  %v3620 = vld [vmem:[%s3607 + $0x60] sm:$0xff]
  %v3621 = vld [vmem:[%s3607 + $0x68] sm:$0xff]
  %v3622 = vld [vmem:[%s3607 + $0x70] sm:$0xff]
  %v3623 = vld [vmem:[%s3607 + $0x78] sm:$0xff]
  %s3624 = scalar_lea.vmem %s15, 1
  %v3625 = vld [vmem:[%s3624] sm:$0x1]
  %v3627 = vlaneseq
  %v3628 = vshrl.u32 %v3627, 7
  %v3629 = vsub.s32 0, %v3628
  %v3630 = vrot.slane %v3625, %v3629
  %3632 = vmatprep.subr.mxu0 0.0
  %3633 = vmatpush1.msra.mxu0 %v3623
  %3634 = vmatprep.subr.mxu0 0.0
  %3635 = vmatpush1.msra.mxu0 %v3622
  %3636 = vmatprep.subr.mxu0 0.0
  %3637 = vmatpush1.msra.mxu0 %v3621
  %3638 = vmatprep.subr.mxu0 0.0
  %3639 = vmatpush1.msra.mxu0 %v3620
  %3640 = vmatprep.subr.mxu0 0.0
  %3641 = vmatpush1.msra.mxu0 %v3619
  %3642 = vmatprep.subr.mxu0 0.0
  %3643 = vmatpush1.msra.mxu0 %v3618
  %3644 = vmatprep.subr.mxu0 0.0
  %3645 = vmatpush1.msra.mxu0 %v3617
  %3646 = vmatprep.subr.mxu0 0.0
  %3647 = vmatpush1.msra.mxu0 %v3616
  %3648 = vmatprep.subr.mxu0 0.0
  %3649 = vmatpush1.msra.mxu0 %v3615
  %3650 = vmatprep.subr.mxu0 0.0
  %3651 = vmatpush1.msra.mxu0 %v3614
  %3652 = vmatprep.subr.mxu0 0.0
  %3653 = vmatpush1.msra.mxu0 %v3613
  %3654 = vmatprep.subr.mxu0 0.0
  %3655 = vmatpush1.msra.mxu0 %v3612
  %3656 = vmatprep.subr.mxu0 0.0
  %3657 = vmatpush1.msra.mxu0 %v3611
  %3658 = vmatprep.subr.mxu0 0.0
  %3659 = vmatpush1.msra.mxu0 %v3610
  %3660 = vmatprep.subr.mxu0 0.0
  %3661 = vmatpush1.msra.mxu0 %v3609
  %3662 = vmatprep.subr.mxu0 0.0
  %3663 = vmatpush1.msra.mxu0 %v3608
  %3664 = vmatprep.subr.mxu0 0.0
  %3665 = vmatpush2.msra.mxu0 0.0
  %3666 = vmatprep.subr.mxu0 0.0
  %3667 = vmatpush2.msra.mxu0 0.0
  %3668 = vmatprep.subr.mxu0 0.0
  %3669 = vmatpush2.msra.mxu0 0.0
  %3670 = vmatprep.subr.mxu0 0.0
  %3671 = vmatpush2.msra.mxu0 0.0
  %3672 = vmatprep.subr.mxu0 0.0
  %3673 = vmatpush2.msra.mxu0 0.0
  %3674 = vmatprep.subr.mxu0 0.0
  %3675 = vmatpush2.msra.mxu0 0.0
  %3676 = vmatprep.subr.mxu0 0.0
  %3677 = vmatpush2.msra.mxu0 0.0
  %3678 = vmatprep.subr.mxu0 0.0
  %3679 = vmatpush2.msra.mxu0 0.0
  %3680 = vmatprep.subr.mxu0 0.0
  %3681 = vmatpush2.msra.mxu0 0.0
  %3682 = vmatprep.subr.mxu0 0.0
  %3683 = vmatpush2.msra.mxu0 0.0
  %3684 = vmatprep.subr.mxu0 0.0
  %3685 = vmatpush2.msra.mxu0 0.0
  %3686 = vmatprep.subr.mxu0 0.0
  %3687 = vmatpush2.msra.mxu0 0.0
  %3688 = vmatprep.subr.mxu0 0.0
  %3689 = vmatpush2.msra.mxu0 0.0
  %3690 = vmatprep.subr.mxu0 0.0
  %3691 = vmatpush2.msra.mxu0 0.0
  %3692 = vmatprep.subr.mxu0 0.0
  %3693 = vmatpush2.msra.mxu0 0.0
  %3694 = vmatprep.subr.mxu0 0.0
  %3695 = vmatpush2.msra.mxu0 0.0
  %3696 = vmatprep.mubr.f32.mxu0 0.0
  %3697 = vmatmul.mubr.f32.gmra.mxu0 %v3600
  %v3698 = vpop.f32.mrf.mxu0
  %v3699 = vadd.f32 %v3630, %v3698
  %v3700 = vpop.f32.mrf.mxu0
  %3701 = vmatprep.mubr.f32.mxu0 0.0
  %3702 = vmatmul.mubr.f32.gmra.mxu0 %v3601
  %v3703 = vpop.f32.mrf.mxu0
  %v3704 = vadd.f32 %v3630, %v3703
  %v3705 = vpop.f32.mrf.mxu0
  %3706 = vmatprep.mubr.f32.mxu0 0.0
  %3707 = vmatmul.mubr.f32.gmra.mxu0 %v3602
  %v3708 = vpop.f32.mrf.mxu0
  %v3709 = vadd.f32 %v3630, %v3708
  %v3710 = vpop.f32.mrf.mxu0
  %3711 = vmatprep.mubr.f32.mxu0 0.0
  %3712 = vmatmul.mubr.f32.gmra.mxu0 %v3603
  %v3713 = vpop.f32.mrf.mxu0
  %v3714 = vadd.f32 %v3630, %v3713
  %v3715 = vpop.f32.mrf.mxu0
  %3716 = vmatprep.mubr.f32.mxu0 0.0
  %3717 = vmatmul.mubr.f32.gmra.mxu0 %v3604
  %v3718 = vpop.f32.mrf.mxu0
  %v3719 = vadd.f32 %v3630, %v3718
  %v3720 = vpop.f32.mrf.mxu0
  %3721 = vmatprep.mubr.f32.mxu0 0.0
  %3722 = vmatmul.mubr.f32.gmra.mxu0 %v3605
  %v3723 = vpop.f32.mrf.mxu0
  %v3724 = vadd.f32 %v3630, %v3723
  %v3725 = vpop.f32.mrf.mxu0
  %3726 = vmatprep.mubr.f32.mxu0 0.0
  %3727 = vmatmul.mubr.f32.gmra.mxu0 %v3606
  %v3728 = vpop.f32.mrf.mxu0
  %v3729 = vadd.f32 %v3630, %v3728
  %v3730 = vpop.f32.mrf.mxu0
  %3731 = vdwg.mxu0
  %s3732 = scalar_lea.vmem %s16, 1
  %v3733 = vld [vmem:[%s3732] sm:$0x1]
  %v3735 = vlaneseq
  %v3736 = vshrl.u32 %v3735, 7
  %v3737 = vsub.s32 0, %v3736
  %v3738 = vrot.slane %v3733, %v3737
  %v3740 = vmul.f32 %v3738, %v3699
  %v3741 = vmul.f32 %v3738, %v3704
  %v3742 = vmul.f32 %v3738, %v3709
  %v3743 = vmul.f32 %v3738, %v3714
  %v3744 = vmul.f32 %v3738, %v3719
  %v3745 = vmul.f32 %v3738, %v3724
  %v3746 = vmul.f32 %v3738, %v3729
  %v3747 = vadd.f32 %v3282, %v3740
  %v3748 = vadd.f32 %v3283, %v3741
  %v3749 = vadd.f32 %v3284, %v3742
  %v3750 = vadd.f32 %v3285, %v3743
  %v3751 = vadd.f32 %v3286, %v3744
  %v3752 = vadd.f32 %v3287, %v3745
  %v3753 = vadd.f32 %v3288, %v3746
  %v3754 = vld [vmem:[%s17] sm:$0x1]
  %v3755 = vld [vmem:[%s18] sm:$0x1]
  %v3756 = vsel %vm216, %v3747, 0.0
  %3757 = vadd.xlane.f32.xlu0 %v3756
  %v3758 = vpop.xlane.xlu0 %3757
  %v3759 = vsel %vm216, %v3748, 0.0
  %3760 = vadd.xlane.f32.xlu0 %v3759
  %v3761 = vpop.xlane.xlu0 %3760
  %v3762 = vsel %vm216, %v3749, 0.0
  %3763 = vadd.xlane.f32.xlu0 %v3762
  %v3764 = vpop.xlane.xlu0 %3763
  %v3765 = vsel %vm216, %v3750, 0.0
  %3766 = vadd.xlane.f32.xlu0 %v3765
  %v3767 = vpop.xlane.xlu0 %3766
  %v3768 = vsel %vm216, %v3751, 0.0
  %3769 = vadd.xlane.f32.xlu0 %v3768
  %v3770 = vpop.xlane.xlu0 %3769
  %v3771 = vsel %vm216, %v3752, 0.0
  %3772 = vadd.xlane.f32.xlu0 %v3771
  %v3773 = vpop.xlane.xlu0 %3772
  %v3774 = vsel %vm216, %v3753, 0.0
  %3775 = vadd.xlane.f32.xlu0 %v3774
  %v3776 = vpop.xlane.xlu0 %3775
  %v3777 = vmul.f32 %v3758, %v238
  %v3778 = vmul.f32 %v3761, %v238
  %v3779 = vmul.f32 %v3764, %v238
  %v3780 = vmul.f32 %v3767, %v238
  %v3781 = vmul.f32 %v3770, %v238
  %v3782 = vmul.f32 %v3773, %v238
  %v3783 = vmul.f32 %v3776, %v238
  %v3784 = vsub.f32 %v3747, %v3777
  %v3785 = vsub.f32 %v3748, %v3778
  %v3786 = vsub.f32 %v3749, %v3779
  %v3787 = vsub.f32 %v3750, %v3780
  %v3788 = vsub.f32 %v3751, %v3781
  %v3789 = vsub.f32 %v3752, %v3782
  %v3790 = vsub.f32 %v3753, %v3783
  %v3791 = vmul.f32 %v3784, %v3784
  %v3792 = vmul.f32 %v3785, %v3785
  %v3793 = vmul.f32 %v3786, %v3786
  %v3794 = vmul.f32 %v3787, %v3787
  %v3795 = vmul.f32 %v3788, %v3788
  %v3796 = vmul.f32 %v3789, %v3789
  %v3797 = vmul.f32 %v3790, %v3790
  %v3798 = vsel %vm216, %v3791, 0.0
  %3799 = vadd.xlane.f32.xlu0 %v3798
  %v3800 = vpop.xlane.xlu0 %3799
  %v3801 = vsel %vm216, %v3792, 0.0
  %3802 = vadd.xlane.f32.xlu0 %v3801
  %v3803 = vpop.xlane.xlu0 %3802
  %v3804 = vsel %vm216, %v3793, 0.0
  %3805 = vadd.xlane.f32.xlu0 %v3804
  %v3806 = vpop.xlane.xlu0 %3805
  %v3807 = vsel %vm216, %v3794, 0.0
  %3808 = vadd.xlane.f32.xlu0 %v3807
  %v3809 = vpop.xlane.xlu0 %3808
  %v3810 = vsel %vm216, %v3795, 0.0
  %3811 = vadd.xlane.f32.xlu0 %v3810
  %v3812 = vpop.xlane.xlu0 %3811
  %v3813 = vsel %vm216, %v3796, 0.0
  %3814 = vadd.xlane.f32.xlu0 %v3813
  %v3815 = vpop.xlane.xlu0 %3814
  %v3816 = vsel %vm216, %v3797, 0.0
  %3817 = vadd.xlane.f32.xlu0 %v3816
  %v3818 = vpop.xlane.xlu0 %3817
  %v3819 = vmul.f32 %v3800, %v238
  %v3820 = vmul.f32 %v3803, %v238
  %v3821 = vmul.f32 %v3806, %v238
  %v3822 = vmul.f32 %v3809, %v238
  %v3823 = vmul.f32 %v3812, %v238
  %v3824 = vmul.f32 %v3815, %v238
  %v3825 = vmul.f32 %v3818, %v238
  %v3826 = vadd.f32 %v3819, 1e-06
  %v3827 = vadd.f32 %v3820, 1e-06
  %v3828 = vadd.f32 %v3821, 1e-06
  %v3829 = vadd.f32 %v3822, 1e-06
  %v3830 = vadd.f32 %v3823, 1e-06
  %v3831 = vadd.f32 %v3824, 1e-06
  %v3832 = vadd.f32 %v3825, 1e-06
  %v3833 = vrsqrt.pop %v3826
  %v3834 = vrsqrt.pop %v3827
  %v3835 = vrsqrt.pop %v3828
  %v3836 = vrsqrt.pop %v3829
  %v3837 = vrsqrt.pop %v3830
  %v3838 = vrsqrt.pop %v3831
  %v3839 = vrsqrt.pop %v3832
  %v3840 = vmul.f32 %v3784, %v3833
  %v3841 = vmul.f32 %v3785, %v3834
  %v3842 = vmul.f32 %v3786, %v3835
  %v3843 = vmul.f32 %v3787, %v3836
  %v3844 = vmul.f32 %v3788, %v3837
  %v3845 = vmul.f32 %v3789, %v3838
  %v3846 = vmul.f32 %v3790, %v3839
  %v3848 = vlaneseq
  %v3849 = vshrl.u32 %v3848, 7
  %v3850 = vsub.s32 0, %v3849
  %v3851 = vrot.slane %v3754, %v3850
  %v3853 = vmul.f32 %v3840, %v3851
  %v3854 = vmul.f32 %v3841, %v3851
  %v3855 = vmul.f32 %v3842, %v3851
  %v3856 = vmul.f32 %v3843, %v3851
  %v3857 = vmul.f32 %v3844, %v3851
  %v3858 = vmul.f32 %v3845, %v3851
  %v3859 = vmul.f32 %v3846, %v3851
  %v3861 = vlaneseq
  %v3862 = vshrl.u32 %v3861, 7
  %v3863 = vsub.s32 0, %v3862
  %v3864 = vrot.slane %v3755, %v3863
  %v3866 = vadd.f32 %v3853, %v3864
  %v3867 = vadd.f32 %v3854, %v3864
  %v3868 = vadd.f32 %v3855, %v3864
  %v3869 = vadd.f32 %v3856, %v3864
  %v3870 = vadd.f32 %v3857, %v3864
  %v3871 = vadd.f32 %v3858, %v3864
  %v3872 = vadd.f32 %v3859, %v3864
  %3873 = vst.msk [vmem:[%s19] sm:$0xff] %vm216, %v3866
  %3874 = vst.msk [vmem:[%s19 + $0x8] sm:$0xff] %vm216, %v3867
  %3875 = vst.msk [vmem:[%s19 + $0x10] sm:$0xff] %vm216, %v3868
  %3876 = vst.msk [vmem:[%s19 + $0x18] sm:$0xff] %vm216, %v3869
  %3877 = vst.msk [vmem:[%s19 + $0x20] sm:$0xff] %vm216, %v3870
  %3878 = vst.msk [vmem:[%s19 + $0x28] sm:$0xff] %vm216, %v3871
  %3879 = vst.msk [vmem:[%s19 + $0x30] sm:$0xff] %vm216, %v3872
  // Predicated region
  $region78: #{_forward_impl.1} parent=0 // pred_check
    _
  $region79: #{_forward_impl.1} parent=0 // pred_check_branch
    %3881 = sbr.rel (0) target = $region81
  $region80: #{_forward_impl.1} parent=0 // pred_region
    _
  $region81: #{_forward_impl.1} parent=0 // pred_fallthru
    _
  // Predicated region
  $region82: #{_forward_impl.1} parent=0 // pred_check
    _
  $region83: #{_forward_impl.1} parent=0 // pred_check_branch
    %3883 = sbr.rel (0) target = $region85
  $region84: #{_forward_impl.1} parent=0 // pred_region
    _
  $region85: #{_forward_impl.1} parent=0 // pred_fallthru
    _

</llo_original>
